<compile_context>
chip_gen: v6e
topology: v6e:2x2x1
jax: 0.10.0
libtpu: 0.0.40
codegen_flags: <defaults>
</compile_context>

<pallas_src>
import functools
import math

import jax
import jax.numpy as jnp
from jax import lax
from jax.experimental import pallas as pl
from jax.experimental.pallas import tpu as pltpu


CFG = dict(
    vocab_size=64,
    max_position=16,
    type_vocab_size=2,
    hidden=32,
    heads=4,
    intermediate=64,
    layers=2,
)

LANE = 128  # pad hidden / intermediate to the 128-lane vreg width


def _round_up(x, m):
    return (x + m - 1) // m * m


# ------------------------------ fused kernel ------------------------------- #

def _encoder_kernel(ids_ref, mask_ref,
                    word_ref, pos_ref, type_ref,
                    emb_ln_g_ref, emb_ln_b_ref,
                    wqkv_ref, bqkv_ref, wo_ref, bo_ref,
                    ln1_g_ref, ln1_b_ref,
                    w1_ref, b1_ref, w2_ref, b2_ref,
                    ln2_g_ref, ln2_b_ref,
                    pool_w_ref, pool_b_ref,
                    out_ref,
                    *, S, H, nh, hd, n_layers, b_tile, eps):
    HP = word_ref.shape[-1]
    V = word_ref.shape[0]
    R = b_tile * S                                   # rows (tokens) per grid step

    # Lane masks (computed once, reused across the unrolled layer loop).
    lane = lax.broadcasted_iota(jnp.int32, (1, HP), 1)
    valid = (lane < H).astype(jnp.float32)                       # real hidden cols
    head_masks = [((lane >= h * hd) & (lane < (h + 1) * hd)).astype(jnp.float32)
                  for h in range(nh)]

    def layernorm(x, g, b):
        # x: (R, HP) f32 with padded cols == 0; stats over the H real columns.
        mean = jnp.sum(x * valid, axis=-1, keepdims=True) * (1.0 / H)
        xc = (x - mean) * valid
        var = jnp.sum(xc * xc, axis=-1, keepdims=True) * (1.0 / H)
        y = xc * lax.rsqrt(var + eps)
        return y * g + b             # g/b are zero-padded -> padded cols stay 0

    def matmul(x, w_bf16):
        # bf16 operands, f32 accumulation (MXU-native path).
        return jnp.dot(x.astype(jnp.bfloat16), w_bf16,
                       preferred_element_type=jnp.float32)

    # ---- in-kernel embedding lookup (one-hot gather, stays in f32) ----
    ids_col = ids_ref[0]                                          # (R, 1) int32
    vocab_iota = lax.broadcasted_iota(jnp.int32, (R, V), 1)
    onehot = (vocab_iota == ids_col).astype(jnp.float32)          # (R, V)
    emb = jnp.dot(onehot, word_ref[...], preferred_element_type=jnp.float32)
    pos_block = pos_ref[0:S, :]                                   # (S, HP)
    if b_tile > 1:
        pos_block = jnp.concatenate([pos_block] * b_tile, axis=0)
    # TODO(synk): token_type_ids hardcoded to segment 0 (matches all-zero ids).
    emb = emb + pos_block + type_ref[0:1, :]
    h = layernorm(emb, emb_ln_g_ref[...], emb_ln_b_ref[...])

    # Head-stacked additive mask (key padding + block-diagonal per-sample),
    # built once in the wrapper; same for every layer.
    mask_stk = mask_ref[0]                                        # (nh*R, R) f32

    for l in range(n_layers):                                     # static unroll (L=2)
        # ---- fused Q/K/V projection (scale already folded into q weights) ----
        qkv = matmul(h, wqkv_ref[l]) + bqkv_ref[l]                # (R, 3*HP) f32
        q = qkv[:, 0 * HP:1 * HP]
        k = qkv[:, 1 * HP:2 * HP]
        v = qkv[:, 2 * HP:3 * HP]

        # ---- head-stacked attention: 2 matmuls + 1 softmax per layer ----
        q_stk = jnp.concatenate([q * head_masks[hh] for hh in range(nh)],
                                axis=0)                           # (nh*R, HP)
        s = lax.dot_general(q_stk.astype(jnp.bfloat16), k.astype(jnp.bfloat16),
                            dimension_numbers=(((1,), (1,)), ((), ())),
                            preferred_element_type=jnp.float32)   # (nh*R, R)
        s = s + mask_stk
        s = s - jnp.max(s, axis=-1, keepdims=True)
        p = jnp.exp(s)
        p = p * pl.reciprocal(jnp.sum(p, axis=-1, keepdims=True), approx=True)

        ctx_stk = jnp.dot(p.astype(jnp.bfloat16), v.astype(jnp.bfloat16),
                          preferred_element_type=jnp.float32)     # (nh*R, HP)
        ctx = ctx_stk[0:R, :] * head_masks[0]
        for hh in range(1, nh):
            ctx = ctx + ctx_stk[hh * R:(hh + 1) * R, :] * head_masks[hh]

        attn_out = matmul(ctx, wo_ref[l]) + bo_ref[l]
        h = layernorm(h + attn_out, ln1_g_ref[l], ln1_b_ref[l])

        # ---- feed-forward ----
        f = matmul(h, w1_ref[l]) + b1_ref[l]
        # TODO(synk): BERT uses exact (erf) GELU; tanh approximation used here.
        f = jax.nn.gelu(f, approximate=True)
        ffn_out = matmul(f, w2_ref[l]) + b2_ref[l]
        h = layernorm(h + ffn_out, ln2_g_ref[l], ln2_b_ref[l])

    # ---- pooler epilogue: tanh(dense(h[CLS])) over ALL CLS rows of the tile ----
    if b_tile == 1:
        cls = h[0:1, :]
    else:
        cls = jnp.concatenate([h[bb * S:bb * S + 1, :] for bb in range(b_tile)],
                              axis=0)                             # (b_tile, HP)
    pooled = jnp.tanh(matmul(cls, pool_w_ref[...]) + pool_b_ref[...])
    out_ref[0] = pooled.astype(out_ref.dtype)


# --------------------------- params & packing ------------------------------ #

def init_params(key, cfg):
    H, I = cfg["hidden"], cfg["intermediate"]
    keys = iter(jax.random.split(key, 64))
    std = 0.02

    def w(shape):
        return jax.random.normal(next(keys), shape, jnp.float32) * std

    params = {
        "word_emb": w((cfg["vocab_size"], H)),
        "pos_emb": w((cfg["max_position"], H)),
        "type_emb": w((cfg["type_vocab_size"], H)),
        "emb_ln_g": jnp.ones((H,), jnp.float32),
        "emb_ln_b": jnp.zeros((H,), jnp.float32),
        "layers": [],
        "pool_w": w((H, H)),
        "pool_b": jnp.zeros((H,), jnp.float32),
    }
    for _ in range(cfg["layers"]):
        params["layers"].append({
            "q_w": w((H, H)), "q_b": jnp.zeros((H,), jnp.float32),
            "k_w": w((H, H)), "k_b": jnp.zeros((H,), jnp.float32),
            "v_w": w((H, H)), "v_b": jnp.zeros((H,), jnp.float32),
            "o_w": w((H, H)), "o_b": jnp.zeros((H,), jnp.float32),
            "attn_ln_g": jnp.ones((H,), jnp.float32),
            "attn_ln_b": jnp.zeros((H,), jnp.float32),
            "ffn1_w": w((H, I)), "ffn1_b": jnp.zeros((I,), jnp.float32),
            "ffn2_w": w((I, H)), "ffn2_b": jnp.zeros((H,), jnp.float32),
            "ffn_ln_g": jnp.ones((H,), jnp.float32),
            "ffn_ln_b": jnp.zeros((H,), jnp.float32),
        })
    return params


def _pack_params(params, cfg, HP, IP):
    """Zero-pad to lane width, fuse QKV (with the attention scale folded into
    the Q weights), stack per-layer, cast matmul weights to bf16."""
    H = cfg["hidden"]
    hd = H // cfg["heads"]
    scale = 1.0 / math.sqrt(hd)

    def pad_w(w, r, c):
        return jnp.pad(w, ((0, r - w.shape[0]), (0, c - w.shape[1])))

    def pad_b(b, c):
        return jnp.pad(b, (0, c - b.shape[0])).reshape(1, c)

    wqkv, bqkv, wo, bo = [], [], [], []
    ln1g, ln1b, w1, b1, w2, b2, ln2g, ln2b = [], [], [], [], [], [], [], []
    for lyr in params["layers"]:
        wqkv.append(jnp.concatenate(
            [pad_w(lyr["q_w"] * scale, HP, HP), pad_w(lyr["k_w"], HP, HP),
             pad_w(lyr["v_w"], HP, HP)], axis=1))
        bqkv.append(jnp.concatenate(
            [pad_b(lyr["q_b"] * scale, HP), pad_b(lyr["k_b"], HP),
             pad_b(lyr["v_b"], HP)], axis=1))
        wo.append(pad_w(lyr["o_w"], HP, HP))
        bo.append(pad_b(lyr["o_b"], HP))
        ln1g.append(pad_b(lyr["attn_ln_g"], HP))
        ln1b.append(pad_b(lyr["attn_ln_b"], HP))
        w1.append(pad_w(lyr["ffn1_w"], HP, IP))
        b1.append(pad_b(lyr["ffn1_b"], IP))
        w2.append(pad_w(lyr["ffn2_w"], IP, HP))
        b2.append(pad_b(lyr["ffn2_b"], HP))
        ln2g.append(pad_b(lyr["ffn_ln_g"], HP))
        ln2b.append(pad_b(lyr["ffn_ln_b"], HP))

    st = lambda xs: jnp.stack(xs, axis=0)
    bf = lambda x: x.astype(jnp.bfloat16)

    return (
        pad_w(params["word_emb"], cfg["vocab_size"], HP),     # kept in f32
        pad_w(params["pos_emb"], cfg["max_position"], HP),
        pad_w(params["type_emb"], cfg["type_vocab_size"], HP),
        pad_b(params["emb_ln_g"], HP), pad_b(params["emb_ln_b"], HP),
        bf(st(wqkv)), st(bqkv),
        bf(st(wo)), st(bo),
        st(ln1g), st(ln1b),
        bf(st(w1)), st(b1),
        bf(st(w2)), st(b2),
        st(ln2g), st(ln2b),
        bf(pad_w(params["pool_w"], HP, HP)), pad_b(params["pool_b"], HP),
    )


# ------------------------------ forward glue -------------------------------- #

def text_encoder_forward(params, input_ids, attention_mask, cfg, b_tile=None):
    """Equivalent of TextEncoder.forward -> BERT pooler_output, shape (B, H)."""
    B, S = input_ids.shape
    H, nh, L = cfg["hidden"], cfg["heads"], cfg["layers"]
    hd = H // nh
    HP = _round_up(H, LANE)
    IP = _round_up(cfg["intermediate"], LANE)

    # Fold samples per grid step to fatten the MXU M dimension, but keep at
    # least 2 grid steps so both v7x TensorCores get work.
    if b_tile is None:
        b_tile = max(1, B // 2)
        while B % b_tile:
            b_tile -= 1
    G = B // b_tile
    R = b_tile * S

    # Token ids as a tiny per-block VMEM input (gather happens in-kernel).
    ids = input_ids.astype(jnp.int32).reshape(G, R, 1)

    # Additive attention mask in f32: key-padding + block-diagonal (per-sample)
    # mask, pre-tiled over heads along the sublane axis -> (G, nh*R, R).
    sample_of = jnp.repeat(jnp.arange(b_tile, dtype=jnp.int32), S)
    same = sample_of[:, None] == sample_of[None, :]               # (R, R)
    key_ok = attention_mask.astype(jnp.bool_).reshape(G, 1, R)
    add_mask = jnp.where(jnp.logical_and(same[None], key_ok),
                         0.0, -10000.0).astype(jnp.float32)       # (G, R, R)
    add_mask = jnp.tile(add_mask, (1, nh, 1))                     # (G, nh*R, R)

    packed = _pack_params(params, cfg, HP, IP)

    kernel = functools.partial(
        _encoder_kernel, S=S, H=H, nh=nh, hd=hd, n_layers=L,
        b_tile=b_tile, eps=1e-12)

    # NOTE: at real BERT dims these constant weight blocks should also be
    # single-buffered / streamed per layer to respect v7x's 64 MiB VMEM.
    const3 = lambda shape: pl.BlockSpec(shape, lambda g: (0, 0, 0))
    const2 = lambda shape: pl.BlockSpec(shape, lambda g: (0, 0))

    out = pl.pallas_call(
        kernel,
        out_shape=jax.ShapeDtypeStruct((G, b_tile, HP), jnp.float32),
        grid=(G,),
        in_specs=[
            pl.BlockSpec((1, R, 1), lambda g: (g, 0, 0)),         # token ids
            pl.BlockSpec((1, nh * R, R), lambda g: (g, 0, 0)),    # additive mask
            const2((cfg["vocab_size"], HP)),                      # word emb table
            const2((cfg["max_position"], HP)),                    # pos emb table
            const2((cfg["type_vocab_size"], HP)),                 # type emb table
            const2((1, HP)), const2((1, HP)),                     # embedding LN
            const3((L, HP, 3 * HP)), const3((L, 1, 3 * HP)),      # fused QKV
            const3((L, HP, HP)), const3((L, 1, HP)),              # attn out proj
            const3((L, 1, HP)), const3((L, 1, HP)),               # LN1
            const3((L, HP, IP)), const3((L, 1, IP)),              # FFN1
            const3((L, IP, HP)), const3((L, 1, HP)),              # FFN2
            const3((L, 1, HP)), const3((L, 1, HP)),               # LN2
            const2((HP, HP)), const2((1, HP)),                    # pooler
        ],
        out_specs=pl.BlockSpec((1, b_tile, HP), lambda g: (g, 0, 0)),
        compiler_params=pltpu.CompilerParams(
            dimension_semantics=("parallel",)),
    )(ids, add_mask, *packed)

    return out.reshape(B, HP)[:, :H]


# --------------------------------- main ------------------------------------ #

if __name__ == "__main__":
    cfg = CFG
    B, S = 2, 8

    key = jax.random.PRNGKey(0)
    k_param, k_ids = jax.random.split(key)
    params = init_params(k_param, cfg)

    input_ids = jax.random.randint(k_ids, (B, S), 0, cfg["vocab_size"],
                                   dtype=jnp.int32)
    attention_mask = jnp.ones((B, S), dtype=jnp.int32)
    # make the last two tokens of sample 1 padding, to exercise the mask path
    attention_mask = attention_mask.at[1, -2:].set(0)

    fwd = jax.jit(functools.partial(text_encoder_forward, cfg=cfg))
    out = fwd(params, input_ids, attention_mask)
    out = jax.block_until_ready(out)

    assert out.shape == (B, cfg["hidden"])
    assert out.dtype == jnp.float32
    assert bool(jnp.all(jnp.isfinite(out)))
    print("KERNEL_OK")
</pallas_src>

<mosaic_0001>
module attributes {stable_mosaic.version = 11 : i64} {
  func.func @_encoder_kernel(%arg0: i32, %arg1: memref<1x8x1xi32, #tpu.memory_space<vmem>>, %arg2: memref<1x32x8xf32, #tpu.memory_space<vmem>>, %arg3: memref<64x128xf32, #tpu.memory_space<vmem>>, %arg4: memref<16x128xf32, #tpu.memory_space<vmem>>, %arg5: memref<2x128xf32, #tpu.memory_space<vmem>>, %arg6: memref<1x128xf32, #tpu.memory_space<vmem>>, %arg7: memref<1x128xf32, #tpu.memory_space<vmem>>, %arg8: memref<2x128x384xbf16, #tpu.memory_space<vmem>>, %arg9: memref<2x1x384xf32, #tpu.memory_space<vmem>>, %arg10: memref<2x128x128xbf16, #tpu.memory_space<vmem>>, %arg11: memref<2x1x128xf32, #tpu.memory_space<vmem>>, %arg12: memref<2x1x128xf32, #tpu.memory_space<vmem>>, %arg13: memref<2x1x128xf32, #tpu.memory_space<vmem>>, %arg14: memref<2x128x128xbf16, #tpu.memory_space<vmem>>, %arg15: memref<2x1x128xf32, #tpu.memory_space<vmem>>, %arg16: memref<2x128x128xbf16, #tpu.memory_space<vmem>>, %arg17: memref<2x1x128xf32, #tpu.memory_space<vmem>>, %arg18: memref<2x1x128xf32, #tpu.memory_space<vmem>>, %arg19: memref<2x1x128xf32, #tpu.memory_space<vmem>>, %arg20: memref<128x128xbf16, #tpu.memory_space<vmem>>, %arg21: memref<1x128xf32, #tpu.memory_space<vmem>>, %arg22: memref<1x1x128xf32, #tpu.memory_space<vmem>>) attributes {dimension_semantics = [#tpu.dimension_semantics<parallel>], iteration_bounds = array<i64: 2>, scalar_prefetch = 0 : i64, scratch_operands = 0 : i64, tpu.core_type = #tpu.core_type<tc>, window_params = [{transform_indices = @transform_0, window_bounds = array<i64: 1, 8, 1>}, {transform_indices = @transform_1, window_bounds = array<i64: 1, 32, 8>}, {pipeline_mode = #tpu.pipeline_mode<synchronous>, transform_indices = @transform_2, window_bounds = array<i64: 64, 128>}, {pipeline_mode = #tpu.pipeline_mode<synchronous>, transform_indices = @transform_3, window_bounds = array<i64: 16, 128>}, {pipeline_mode = #tpu.pipeline_mode<synchronous>, transform_indices = @transform_4, window_bounds = array<i64: 2, 128>}, {pipeline_mode = #tpu.pipeline_mode<synchronous>, transform_indices = @transform_5, window_bounds = array<i64: 1, 128>}, {pipeline_mode = #tpu.pipeline_mode<synchronous>, transform_indices = @transform_6, window_bounds = array<i64: 1, 128>}, {pipeline_mode = #tpu.pipeline_mode<synchronous>, transform_indices = @transform_7, window_bounds = array<i64: 2, 128, 384>}, {pipeline_mode = #tpu.pipeline_mode<synchronous>, transform_indices = @transform_8, window_bounds = array<i64: 2, 1, 384>}, {pipeline_mode = #tpu.pipeline_mode<synchronous>, transform_indices = @transform_9, window_bounds = array<i64: 2, 128, 128>}, {pipeline_mode = #tpu.pipeline_mode<synchronous>, transform_indices = @transform_10, window_bounds = array<i64: 2, 1, 128>}, {pipeline_mode = #tpu.pipeline_mode<synchronous>, transform_indices = @transform_11, window_bounds = array<i64: 2, 1, 128>}, {pipeline_mode = #tpu.pipeline_mode<synchronous>, transform_indices = @transform_12, window_bounds = array<i64: 2, 1, 128>}, {pipeline_mode = #tpu.pipeline_mode<synchronous>, transform_indices = @transform_13, window_bounds = array<i64: 2, 128, 128>}, {pipeline_mode = #tpu.pipeline_mode<synchronous>, transform_indices = @transform_14, window_bounds = array<i64: 2, 1, 128>}, {pipeline_mode = #tpu.pipeline_mode<synchronous>, transform_indices = @transform_15, window_bounds = array<i64: 2, 128, 128>}, {pipeline_mode = #tpu.pipeline_mode<synchronous>, transform_indices = @transform_16, window_bounds = array<i64: 2, 1, 128>}, {pipeline_mode = #tpu.pipeline_mode<synchronous>, transform_indices = @transform_17, window_bounds = array<i64: 2, 1, 128>}, {pipeline_mode = #tpu.pipeline_mode<synchronous>, transform_indices = @transform_18, window_bounds = array<i64: 2, 1, 128>}, {pipeline_mode = #tpu.pipeline_mode<synchronous>, transform_indices = @transform_19, window_bounds = array<i64: 128, 128>}, {pipeline_mode = #tpu.pipeline_mode<synchronous>, transform_indices = @transform_20, window_bounds = array<i64: 1, 128>}, {transform_indices = @transform_21, window_bounds = array<i64: 1, 1, 128>}]} {
    %0 = tpu.iota {dimensions = array<i32: 1>} : vector<1x128xi32>
    %c32_i32 = arith.constant 32 : i32
    %1 = vector.broadcast %c32_i32 : i32 to vector<1x128xi32>
    %2 = arith.cmpi slt, %0, %1 : vector<1x128xi32>
    %3 = arith.extui %2 : vector<1x128xi1> to vector<1x128xi32>
    %4 = arith.sitofp %3 : vector<1x128xi32> to vector<1x128xf32>
    %c0_i32 = arith.constant 0 : i32
    %5 = vector.broadcast %c0_i32 : i32 to vector<1x128xi32>
    %6 = arith.cmpi sge, %0, %5 : vector<1x128xi32>
    %c8_i32 = arith.constant 8 : i32
    %7 = vector.broadcast %c8_i32 : i32 to vector<1x128xi32>
    %8 = arith.cmpi slt, %0, %7 : vector<1x128xi32>
    %9 = arith.andi %6, %8 : vector<1x128xi1>
    %10 = arith.extui %9 : vector<1x128xi1> to vector<1x128xi32>
    %11 = arith.sitofp %10 : vector<1x128xi32> to vector<1x128xf32>
    %c8_i32_0 = arith.constant 8 : i32
    %12 = vector.broadcast %c8_i32_0 : i32 to vector<1x128xi32>
    %13 = arith.cmpi sge, %0, %12 : vector<1x128xi32>
    %c16_i32 = arith.constant 16 : i32
    %14 = vector.broadcast %c16_i32 : i32 to vector<1x128xi32>
    %15 = arith.cmpi slt, %0, %14 : vector<1x128xi32>
    %16 = arith.andi %13, %15 : vector<1x128xi1>
    %17 = arith.extui %16 : vector<1x128xi1> to vector<1x128xi32>
    %18 = arith.sitofp %17 : vector<1x128xi32> to vector<1x128xf32>
    %c16_i32_1 = arith.constant 16 : i32
    %19 = vector.broadcast %c16_i32_1 : i32 to vector<1x128xi32>
    %20 = arith.cmpi sge, %0, %19 : vector<1x128xi32>
    %c24_i32 = arith.constant 24 : i32
    %21 = vector.broadcast %c24_i32 : i32 to vector<1x128xi32>
    %22 = arith.cmpi slt, %0, %21 : vector<1x128xi32>
    %23 = arith.andi %20, %22 : vector<1x128xi1>
    %24 = arith.extui %23 : vector<1x128xi1> to vector<1x128xi32>
    %25 = arith.sitofp %24 : vector<1x128xi32> to vector<1x128xf32>
    %c24_i32_2 = arith.constant 24 : i32
    %26 = vector.broadcast %c24_i32_2 : i32 to vector<1x128xi32>
    %27 = arith.cmpi sge, %0, %26 : vector<1x128xi32>
    %c32_i32_3 = arith.constant 32 : i32
    %28 = vector.broadcast %c32_i32_3 : i32 to vector<1x128xi32>
    %29 = arith.cmpi slt, %0, %28 : vector<1x128xi32>
    %30 = arith.andi %27, %29 : vector<1x128xi1>
    %31 = arith.extui %30 : vector<1x128xi1> to vector<1x128xi32>
    %32 = arith.sitofp %31 : vector<1x128xi32> to vector<1x128xf32>
    %c0 = arith.constant 0 : index
    %c0_4 = arith.constant 0 : index
    %c0_5 = arith.constant 0 : index
    %33 = vector.load %arg1[%c0, %c0_4, %c0_5] : memref<1x8x1xi32, #tpu.memory_space<vmem>>, vector<1x8x1xi32>
    %34 = vector.shape_cast %33 : vector<1x8x1xi32> to vector<8x1xi32>
    %35 = tpu.iota {dimensions = array<i32: 1>} : vector<8x64xi32>
    %36 = vector.broadcast %34 : vector<8x1xi32> to vector<8x64xi32>
    %37 = arith.cmpi eq, %35, %36 : vector<8x64xi32>
    %38 = arith.extui %37 : vector<8x64xi1> to vector<8x64xi32>
    %39 = arith.sitofp %38 : vector<8x64xi32> to vector<8x64xf32>
    %c0_6 = arith.constant 0 : index
    %c0_7 = arith.constant 0 : index
    %40 = vector.load %arg3[%c0_6, %c0_7] : memref<64x128xf32, #tpu.memory_space<vmem>>, vector<64x128xf32>
    %cst = arith.constant dense<0.000000e+00> : vector<8x128xf32>
    %41 = tpu.matmul %39, %40, %cst {dimension_numbers = #tpu.dot_dimension_numbers<[1], [0], [0], [1], [0, 0, 1, 1], [], []>} : vector<8x64xf32>, vector<64x128xf32>, vector<8x128xf32> -> vector<8x128xf32>
    %c0_8 = arith.constant 0 : index
    %c0_9 = arith.constant 0 : index
    %42 = vector.load %arg4[%c0_8, %c0_9] : memref<16x128xf32, #tpu.memory_space<vmem>>, vector<8x128xf32>
    %43 = arith.addf %41, %42 : vector<8x128xf32>
    %c0_10 = arith.constant 0 : index
    %c0_11 = arith.constant 0 : index
    %44 = vector.load %arg5[%c0_10, %c0_11] : memref<2x128xf32, #tpu.memory_space<vmem>>, vector<1x128xf32>
    %45 = vector.broadcast %44 : vector<1x128xf32> to vector<8x128xf32>
    %46 = arith.addf %43, %45 : vector<8x128xf32>
    %c0_12 = arith.constant 0 : index
    %c0_13 = arith.constant 0 : index
    %47 = vector.load %arg6[%c0_12, %c0_13] : memref<1x128xf32, #tpu.memory_space<vmem>>, vector<1x128xf32>
    %c0_14 = arith.constant 0 : index
    %c0_15 = arith.constant 0 : index
    %48 = vector.load %arg7[%c0_14, %c0_15] : memref<1x128xf32, #tpu.memory_space<vmem>>, vector<1x128xf32>
    %49 = vector.broadcast %4 : vector<1x128xf32> to vector<8x128xf32>
    %50 = arith.mulf %46, %49 : vector<8x128xf32>
    %cst_16 = arith.constant dense<0.000000e+00> : vector<8xf32>
    %51 = vector.multi_reduction <add>, %50, %cst_16 [1] : vector<8x128xf32> to vector<8xf32>
    %52 = vector.shape_cast %51 : vector<8xf32> to vector<8x1xf32>
    %cst_17 = arith.constant 3.125000e-02 : f32
    %53 = vector.broadcast %cst_17 : f32 to vector<8x1xf32>
    %54 = arith.mulf %52, %53 : vector<8x1xf32>
    %55 = vector.broadcast %54 : vector<8x1xf32> to vector<8x128xf32>
    %56 = arith.subf %46, %55 : vector<8x128xf32>
    %57 = vector.broadcast %4 : vector<1x128xf32> to vector<8x128xf32>
    %58 = arith.mulf %56, %57 : vector<8x128xf32>
    %59 = arith.mulf %58, %58 : vector<8x128xf32>
    %cst_18 = arith.constant dense<0.000000e+00> : vector<8xf32>
    %60 = vector.multi_reduction <add>, %59, %cst_18 [1] : vector<8x128xf32> to vector<8xf32>
    %61 = vector.shape_cast %60 : vector<8xf32> to vector<8x1xf32>
    %cst_19 = arith.constant 3.125000e-02 : f32
    %62 = vector.broadcast %cst_19 : f32 to vector<8x1xf32>
    %63 = arith.mulf %61, %62 : vector<8x1xf32>
    %cst_20 = arith.constant 9.99999996E-13 : f32
    %64 = vector.broadcast %cst_20 : f32 to vector<8x1xf32>
    %65 = arith.addf %63, %64 : vector<8x1xf32>
    %66 = math.rsqrt %65 : vector<8x1xf32>
    %67 = vector.broadcast %66 : vector<8x1xf32> to vector<8x128xf32>
    %68 = arith.mulf %58, %67 : vector<8x128xf32>
    %69 = vector.broadcast %47 : vector<1x128xf32> to vector<8x128xf32>
    %70 = arith.mulf %68, %69 : vector<8x128xf32>
    %71 = vector.broadcast %48 : vector<1x128xf32> to vector<8x128xf32>
    %72 = arith.addf %70, %71 : vector<8x128xf32>
    %c0_21 = arith.constant 0 : index
    %c0_22 = arith.constant 0 : index
    %c0_23 = arith.constant 0 : index
    %73 = vector.load %arg2[%c0_21, %c0_22, %c0_23] : memref<1x32x8xf32, #tpu.memory_space<vmem>>, vector<1x32x8xf32>
    %74 = vector.shape_cast %73 : vector<1x32x8xf32> to vector<32x8xf32>
    %c0_24 = arith.constant 0 : index
    %c0_25 = arith.constant 0 : index
    %c0_26 = arith.constant 0 : index
    %75 = vector.load %arg8[%c0_24, %c0_25, %c0_26] : memref<2x128x384xbf16, #tpu.memory_space<vmem>>, vector<1x128x384xbf16>
    %76 = vector.shape_cast %75 : vector<1x128x384xbf16> to vector<128x384xbf16>
    %77 = arith.truncf %72 : vector<8x128xf32> to vector<8x128xbf16>
    %cst_27 = arith.constant dense<0.000000e+00> : vector<8x384xf32>
    %78 = tpu.matmul %77, %76, %cst_27 {dimension_numbers = #tpu.dot_dimension_numbers<[1], [0], [0], [1], [0, 0, 1, 1], [], []>} : vector<8x128xbf16>, vector<128x384xbf16>, vector<8x384xf32> -> vector<8x384xf32>
    %c0_28 = arith.constant 0 : index
    %c0_29 = arith.constant 0 : index
    %c0_30 = arith.constant 0 : index
    %79 = vector.load %arg9[%c0_28, %c0_29, %c0_30] : memref<2x1x384xf32, #tpu.memory_space<vmem>>, vector<1x1x384xf32>
    %80 = vector.shape_cast %79 : vector<1x1x384xf32> to vector<1x384xf32>
    %81 = vector.broadcast %80 : vector<1x384xf32> to vector<8x384xf32>
    %82 = arith.addf %78, %81 : vector<8x384xf32>
    %83 = vector.extract_strided_slice %82 {offsets = [0, 0], sizes = [8, 128], strides = [1, 1]} : vector<8x384xf32> to vector<8x128xf32>
    %84 = vector.extract_strided_slice %82 {offsets = [0, 128], sizes = [8, 128], strides = [1, 1]} : vector<8x384xf32> to vector<8x128xf32>
    %85 = vector.extract_strided_slice %82 {offsets = [0, 256], sizes = [8, 128], strides = [1, 1]} : vector<8x384xf32> to vector<8x128xf32>
    %86 = vector.broadcast %11 : vector<1x128xf32> to vector<8x128xf32>
    %87 = arith.mulf %83, %86 : vector<8x128xf32>
    %88 = vector.broadcast %18 : vector<1x128xf32> to vector<8x128xf32>
    %89 = arith.mulf %83, %88 : vector<8x128xf32>
    %90 = vector.broadcast %25 : vector<1x128xf32> to vector<8x128xf32>
    %91 = arith.mulf %83, %90 : vector<8x128xf32>
    %92 = vector.broadcast %32 : vector<1x128xf32> to vector<8x128xf32>
    %93 = arith.mulf %83, %92 : vector<8x128xf32>
    %94 = tpu.concatenate %87, %89, %91, %93 in 0 : vector<8x128xf32>, vector<8x128xf32>, vector<8x128xf32>, vector<8x128xf32> -> vector<32x128xf32>
    %95 = arith.truncf %94 : vector<32x128xf32> to vector<32x128xbf16>
    %96 = arith.truncf %84 : vector<8x128xf32> to vector<8x128xbf16>
    %cst_31 = arith.constant dense<0.000000e+00> : vector<32x8xf32>
    %97 = tpu.matmul %95, %96, %cst_31 {dimension_numbers = #tpu.dot_dimension_numbers<[1], [1], [0], [0], [0, 0, 1, 0], [], []>} : vector<32x128xbf16>, vector<8x128xbf16>, vector<32x8xf32> -> vector<32x8xf32>
    %98 = arith.addf %97, %74 : vector<32x8xf32>
    %cst_32 = arith.constant dense<0xFF800000> : vector<32xf32>
    %99 = vector.multi_reduction <maximumf>, %98, %cst_32 [1] : vector<32x8xf32> to vector<32xf32>
    %100 = vector.shape_cast %99 : vector<32xf32> to vector<32x1xf32>
    %101 = vector.broadcast %100 : vector<32x1xf32> to vector<32x8xf32>
    %102 = arith.subf %98, %101 : vector<32x8xf32>
    %103 = math.exp %102 : vector<32x8xf32>
    %cst_33 = arith.constant dense<0.000000e+00> : vector<32xf32>
    %104 = vector.multi_reduction <add>, %103, %cst_33 [1] : vector<32x8xf32> to vector<32xf32>
    %105 = vector.shape_cast %104 : vector<32xf32> to vector<32x1xf32>
    %106 = tpu.reciprocal %105 {approx = true} : vector<32x1xf32> -> vector<32x1xf32>
    %107 = vector.broadcast %106 : vector<32x1xf32> to vector<32x8xf32>
    %108 = arith.mulf %103, %107 : vector<32x8xf32>
    %109 = arith.truncf %108 : vector<32x8xf32> to vector<32x8xbf16>
    %110 = arith.truncf %85 : vector<8x128xf32> to vector<8x128xbf16>
    %cst_34 = arith.constant dense<0.000000e+00> : vector<32x128xf32>
    %111 = tpu.matmul %109, %110, %cst_34 {dimension_numbers = #tpu.dot_dimension_numbers<[1], [0], [0], [1], [0, 0, 1, 1], [], []>} : vector<32x8xbf16>, vector<8x128xbf16>, vector<32x128xf32> -> vector<32x128xf32>
    %112 = vector.extract_strided_slice %111 {offsets = [0, 0], sizes = [8, 128], strides = [1, 1]} : vector<32x128xf32> to vector<8x128xf32>
    %113 = vector.broadcast %11 : vector<1x128xf32> to vector<8x128xf32>
    %114 = arith.mulf %112, %113 : vector<8x128xf32>
    %115 = vector.extract_strided_slice %111 {offsets = [8, 0], sizes = [8, 128], strides = [1, 1]} : vector<32x128xf32> to vector<8x128xf32>
    %116 = vector.broadcast %18 : vector<1x128xf32> to vector<8x128xf32>
    %117 = arith.mulf %115, %116 : vector<8x128xf32>
    %118 = arith.addf %114, %117 : vector<8x128xf32>
    %119 = vector.extract_strided_slice %111 {offsets = [16, 0], sizes = [8, 128], strides = [1, 1]} : vector<32x128xf32> to vector<8x128xf32>
    %120 = vector.broadcast %25 : vector<1x128xf32> to vector<8x128xf32>
    %121 = arith.mulf %119, %120 : vector<8x128xf32>
    %122 = arith.addf %118, %121 : vector<8x128xf32>
    %123 = vector.extract_strided_slice %111 {offsets = [24, 0], sizes = [8, 128], strides = [1, 1]} : vector<32x128xf32> to vector<8x128xf32>
    %124 = vector.broadcast %32 : vector<1x128xf32> to vector<8x128xf32>
    %125 = arith.mulf %123, %124 : vector<8x128xf32>
    %126 = arith.addf %122, %125 : vector<8x128xf32>
    %c0_35 = arith.constant 0 : index
    %c0_36 = arith.constant 0 : index
    %c0_37 = arith.constant 0 : index
    %127 = vector.load %arg10[%c0_35, %c0_36, %c0_37] : memref<2x128x128xbf16, #tpu.memory_space<vmem>>, vector<1x128x128xbf16>
    %128 = vector.shape_cast %127 : vector<1x128x128xbf16> to vector<128x128xbf16>
    %129 = arith.truncf %126 : vector<8x128xf32> to vector<8x128xbf16>
    %cst_38 = arith.constant dense<0.000000e+00> : vector<8x128xf32>
    %130 = tpu.matmul %129, %128, %cst_38 {dimension_numbers = #tpu.dot_dimension_numbers<[1], [0], [0], [1], [0, 0, 1, 1], [], []>} : vector<8x128xbf16>, vector<128x128xbf16>, vector<8x128xf32> -> vector<8x128xf32>
    %c0_39 = arith.constant 0 : index
    %c0_40 = arith.constant 0 : index
    %c0_41 = arith.constant 0 : index
    %131 = vector.load %arg11[%c0_39, %c0_40, %c0_41] : memref<2x1x128xf32, #tpu.memory_space<vmem>>, vector<1x1x128xf32>
    %132 = vector.shape_cast %131 : vector<1x1x128xf32> to vector<1x128xf32>
    %133 = vector.broadcast %132 : vector<1x128xf32> to vector<8x128xf32>
    %134 = arith.addf %130, %133 : vector<8x128xf32>
    %135 = arith.addf %72, %134 : vector<8x128xf32>
    %c0_42 = arith.constant 0 : index
    %c0_43 = arith.constant 0 : index
    %c0_44 = arith.constant 0 : index
    %136 = vector.load %arg12[%c0_42, %c0_43, %c0_44] : memref<2x1x128xf32, #tpu.memory_space<vmem>>, vector<1x1x128xf32>
    %137 = vector.shape_cast %136 : vector<1x1x128xf32> to vector<1x128xf32>
    %c0_45 = arith.constant 0 : index
    %c0_46 = arith.constant 0 : index
    %c0_47 = arith.constant 0 : index
    %138 = vector.load %arg13[%c0_45, %c0_46, %c0_47] : memref<2x1x128xf32, #tpu.memory_space<vmem>>, vector<1x1x128xf32>
    %139 = vector.shape_cast %138 : vector<1x1x128xf32> to vector<1x128xf32>
    %140 = vector.broadcast %4 : vector<1x128xf32> to vector<8x128xf32>
    %141 = arith.mulf %135, %140 : vector<8x128xf32>
    %cst_48 = arith.constant dense<0.000000e+00> : vector<8xf32>
    %142 = vector.multi_reduction <add>, %141, %cst_48 [1] : vector<8x128xf32> to vector<8xf32>
    %143 = vector.shape_cast %142 : vector<8xf32> to vector<8x1xf32>
    %cst_49 = arith.constant 3.125000e-02 : f32
    %144 = vector.broadcast %cst_49 : f32 to vector<8x1xf32>
    %145 = arith.mulf %143, %144 : vector<8x1xf32>
    %146 = vector.broadcast %145 : vector<8x1xf32> to vector<8x128xf32>
    %147 = arith.subf %135, %146 : vector<8x128xf32>
    %148 = vector.broadcast %4 : vector<1x128xf32> to vector<8x128xf32>
    %149 = arith.mulf %147, %148 : vector<8x128xf32>
    %150 = arith.mulf %149, %149 : vector<8x128xf32>
    %cst_50 = arith.constant dense<0.000000e+00> : vector<8xf32>
    %151 = vector.multi_reduction <add>, %150, %cst_50 [1] : vector<8x128xf32> to vector<8xf32>
    %152 = vector.shape_cast %151 : vector<8xf32> to vector<8x1xf32>
    %cst_51 = arith.constant 3.125000e-02 : f32
    %153 = vector.broadcast %cst_51 : f32 to vector<8x1xf32>
    %154 = arith.mulf %152, %153 : vector<8x1xf32>
    %cst_52 = arith.constant 9.99999996E-13 : f32
    %155 = vector.broadcast %cst_52 : f32 to vector<8x1xf32>
    %156 = arith.addf %154, %155 : vector<8x1xf32>
    %157 = math.rsqrt %156 : vector<8x1xf32>
    %158 = vector.broadcast %157 : vector<8x1xf32> to vector<8x128xf32>
    %159 = arith.mulf %149, %158 : vector<8x128xf32>
    %160 = vector.broadcast %137 : vector<1x128xf32> to vector<8x128xf32>
    %161 = arith.mulf %159, %160 : vector<8x128xf32>
    %162 = vector.broadcast %139 : vector<1x128xf32> to vector<8x128xf32>
    %163 = arith.addf %161, %162 : vector<8x128xf32>
    %c0_53 = arith.constant 0 : index
    %c0_54 = arith.constant 0 : index
    %c0_55 = arith.constant 0 : index
    %164 = vector.load %arg14[%c0_53, %c0_54, %c0_55] : memref<2x128x128xbf16, #tpu.memory_space<vmem>>, vector<1x128x128xbf16>
    %165 = vector.shape_cast %164 : vector<1x128x128xbf16> to vector<128x128xbf16>
    %166 = arith.truncf %163 : vector<8x128xf32> to vector<8x128xbf16>
    %cst_56 = arith.constant dense<0.000000e+00> : vector<8x128xf32>
    %167 = tpu.matmul %166, %165, %cst_56 {dimension_numbers = #tpu.dot_dimension_numbers<[1], [0], [0], [1], [0, 0, 1, 1], [], []>} : vector<8x128xbf16>, vector<128x128xbf16>, vector<8x128xf32> -> vector<8x128xf32>
    %c0_57 = arith.constant 0 : index
    %c0_58 = arith.constant 0 : index
    %c0_59 = arith.constant 0 : index
    %168 = vector.load %arg15[%c0_57, %c0_58, %c0_59] : memref<2x1x128xf32, #tpu.memory_space<vmem>>, vector<1x1x128xf32>
    %169 = vector.shape_cast %168 : vector<1x1x128xf32> to vector<1x128xf32>
    %170 = vector.broadcast %169 : vector<1x128xf32> to vector<8x128xf32>
    %171 = arith.addf %167, %170 : vector<8x128xf32>
    %172 = arith.mulf %171, %171 : vector<8x128xf32>
    %173 = arith.mulf %171, %172 : vector<8x128xf32>
    %cst_60 = arith.constant 4.471500e-02 : f32
    %174 = vector.broadcast %cst_60 : f32 to vector<8x128xf32>
    %175 = arith.mulf %174, %173 : vector<8x128xf32>
    %176 = arith.addf %171, %175 : vector<8x128xf32>
    %cst_61 = arith.constant 0.797884583 : f32
    %177 = vector.broadcast %cst_61 : f32 to vector<8x128xf32>
    %178 = arith.mulf %177, %176 : vector<8x128xf32>
    %179 = math.tanh %178 : vector<8x128xf32>
    %cst_62 = arith.constant 1.000000e+00 : f32
    %180 = vector.broadcast %cst_62 : f32 to vector<8x128xf32>
    %181 = arith.addf %180, %179 : vector<8x128xf32>
    %cst_63 = arith.constant 5.000000e-01 : f32
    %182 = vector.broadcast %cst_63 : f32 to vector<8x128xf32>
    %183 = arith.mulf %182, %181 : vector<8x128xf32>
    %184 = arith.mulf %171, %183 : vector<8x128xf32>
    %c0_64 = arith.constant 0 : index
    %c0_65 = arith.constant 0 : index
    %c0_66 = arith.constant 0 : index
    %185 = vector.load %arg16[%c0_64, %c0_65, %c0_66] : memref<2x128x128xbf16, #tpu.memory_space<vmem>>, vector<1x128x128xbf16>
    %186 = vector.shape_cast %185 : vector<1x128x128xbf16> to vector<128x128xbf16>
    %187 = arith.truncf %184 : vector<8x128xf32> to vector<8x128xbf16>
    %cst_67 = arith.constant dense<0.000000e+00> : vector<8x128xf32>
    %188 = tpu.matmul %187, %186, %cst_67 {dimension_numbers = #tpu.dot_dimension_numbers<[1], [0], [0], [1], [0, 0, 1, 1], [], []>} : vector<8x128xbf16>, vector<128x128xbf16>, vector<8x128xf32> -> vector<8x128xf32>
    %c0_68 = arith.constant 0 : index
    %c0_69 = arith.constant 0 : index
    %c0_70 = arith.constant 0 : index
    %189 = vector.load %arg17[%c0_68, %c0_69, %c0_70] : memref<2x1x128xf32, #tpu.memory_space<vmem>>, vector<1x1x128xf32>
    %190 = vector.shape_cast %189 : vector<1x1x128xf32> to vector<1x128xf32>
    %191 = vector.broadcast %190 : vector<1x128xf32> to vector<8x128xf32>
    %192 = arith.addf %188, %191 : vector<8x128xf32>
    %193 = arith.addf %163, %192 : vector<8x128xf32>
    %c0_71 = arith.constant 0 : index
    %c0_72 = arith.constant 0 : index
    %c0_73 = arith.constant 0 : index
    %194 = vector.load %arg18[%c0_71, %c0_72, %c0_73] : memref<2x1x128xf32, #tpu.memory_space<vmem>>, vector<1x1x128xf32>
    %195 = vector.shape_cast %194 : vector<1x1x128xf32> to vector<1x128xf32>
    %c0_74 = arith.constant 0 : index
    %c0_75 = arith.constant 0 : index
    %c0_76 = arith.constant 0 : index
    %196 = vector.load %arg19[%c0_74, %c0_75, %c0_76] : memref<2x1x128xf32, #tpu.memory_space<vmem>>, vector<1x1x128xf32>
    %197 = vector.shape_cast %196 : vector<1x1x128xf32> to vector<1x128xf32>
    %198 = vector.broadcast %4 : vector<1x128xf32> to vector<8x128xf32>
    %199 = arith.mulf %193, %198 : vector<8x128xf32>
    %cst_77 = arith.constant dense<0.000000e+00> : vector<8xf32>
    %200 = vector.multi_reduction <add>, %199, %cst_77 [1] : vector<8x128xf32> to vector<8xf32>
    %201 = vector.shape_cast %200 : vector<8xf32> to vector<8x1xf32>
    %cst_78 = arith.constant 3.125000e-02 : f32
    %202 = vector.broadcast %cst_78 : f32 to vector<8x1xf32>
    %203 = arith.mulf %201, %202 : vector<8x1xf32>
    %204 = vector.broadcast %203 : vector<8x1xf32> to vector<8x128xf32>
    %205 = arith.subf %193, %204 : vector<8x128xf32>
    %206 = vector.broadcast %4 : vector<1x128xf32> to vector<8x128xf32>
    %207 = arith.mulf %205, %206 : vector<8x128xf32>
    %208 = arith.mulf %207, %207 : vector<8x128xf32>
    %cst_79 = arith.constant dense<0.000000e+00> : vector<8xf32>
    %209 = vector.multi_reduction <add>, %208, %cst_79 [1] : vector<8x128xf32> to vector<8xf32>
    %210 = vector.shape_cast %209 : vector<8xf32> to vector<8x1xf32>
    %cst_80 = arith.constant 3.125000e-02 : f32
    %211 = vector.broadcast %cst_80 : f32 to vector<8x1xf32>
    %212 = arith.mulf %210, %211 : vector<8x1xf32>
    %cst_81 = arith.constant 9.99999996E-13 : f32
    %213 = vector.broadcast %cst_81 : f32 to vector<8x1xf32>
    %214 = arith.addf %212, %213 : vector<8x1xf32>
    %215 = math.rsqrt %214 : vector<8x1xf32>
    %216 = vector.broadcast %215 : vector<8x1xf32> to vector<8x128xf32>
    %217 = arith.mulf %207, %216 : vector<8x128xf32>
    %218 = vector.broadcast %195 : vector<1x128xf32> to vector<8x128xf32>
    %219 = arith.mulf %217, %218 : vector<8x128xf32>
    %220 = vector.broadcast %197 : vector<1x128xf32> to vector<8x128xf32>
    %221 = arith.addf %219, %220 : vector<8x128xf32>
    %c1 = arith.constant 1 : index
    %c0_82 = arith.constant 0 : index
    %c0_83 = arith.constant 0 : index
    %222 = vector.load %arg8[%c1, %c0_82, %c0_83] : memref<2x128x384xbf16, #tpu.memory_space<vmem>>, vector<1x128x384xbf16>
    %223 = vector.shape_cast %222 : vector<1x128x384xbf16> to vector<128x384xbf16>
    %224 = arith.truncf %221 : vector<8x128xf32> to vector<8x128xbf16>
    %cst_84 = arith.constant dense<0.000000e+00> : vector<8x384xf32>
    %225 = tpu.matmul %224, %223, %cst_84 {dimension_numbers = #tpu.dot_dimension_numbers<[1], [0], [0], [1], [0, 0, 1, 1], [], []>} : vector<8x128xbf16>, vector<128x384xbf16>, vector<8x384xf32> -> vector<8x384xf32>
    %c1_85 = arith.constant 1 : index
    %c0_86 = arith.constant 0 : index
    %c0_87 = arith.constant 0 : index
    %226 = vector.load %arg9[%c1_85, %c0_86, %c0_87] : memref<2x1x384xf32, #tpu.memory_space<vmem>>, vector<1x1x384xf32>
    %227 = vector.shape_cast %226 : vector<1x1x384xf32> to vector<1x384xf32>
    %228 = vector.broadcast %227 : vector<1x384xf32> to vector<8x384xf32>
    %229 = arith.addf %225, %228 : vector<8x384xf32>
    %230 = vector.extract_strided_slice %229 {offsets = [0, 0], sizes = [8, 128], strides = [1, 1]} : vector<8x384xf32> to vector<8x128xf32>
    %231 = vector.extract_strided_slice %229 {offsets = [0, 128], sizes = [8, 128], strides = [1, 1]} : vector<8x384xf32> to vector<8x128xf32>
    %232 = vector.extract_strided_slice %229 {offsets = [0, 256], sizes = [8, 128], strides = [1, 1]} : vector<8x384xf32> to vector<8x128xf32>
    %233 = vector.broadcast %11 : vector<1x128xf32> to vector<8x128xf32>
    %234 = arith.mulf %230, %233 : vector<8x128xf32>
    %235 = vector.broadcast %18 : vector<1x128xf32> to vector<8x128xf32>
    %236 = arith.mulf %230, %235 : vector<8x128xf32>
    %237 = vector.broadcast %25 : vector<1x128xf32> to vector<8x128xf32>
    %238 = arith.mulf %230, %237 : vector<8x128xf32>
    %239 = vector.broadcast %32 : vector<1x128xf32> to vector<8x128xf32>
    %240 = arith.mulf %230, %239 : vector<8x128xf32>
    %241 = tpu.concatenate %234, %236, %238, %240 in 0 : vector<8x128xf32>, vector<8x128xf32>, vector<8x128xf32>, vector<8x128xf32> -> vector<32x128xf32>
    %242 = arith.truncf %241 : vector<32x128xf32> to vector<32x128xbf16>
    %243 = arith.truncf %231 : vector<8x128xf32> to vector<8x128xbf16>
    %cst_88 = arith.constant dense<0.000000e+00> : vector<32x8xf32>
    %244 = tpu.matmul %242, %243, %cst_88 {dimension_numbers = #tpu.dot_dimension_numbers<[1], [1], [0], [0], [0, 0, 1, 0], [], []>} : vector<32x128xbf16>, vector<8x128xbf16>, vector<32x8xf32> -> vector<32x8xf32>
    %245 = arith.addf %244, %74 : vector<32x8xf32>
    %cst_89 = arith.constant dense<0xFF800000> : vector<32xf32>
    %246 = vector.multi_reduction <maximumf>, %245, %cst_89 [1] : vector<32x8xf32> to vector<32xf32>
    %247 = vector.shape_cast %246 : vector<32xf32> to vector<32x1xf32>
    %248 = vector.broadcast %247 : vector<32x1xf32> to vector<32x8xf32>
    %249 = arith.subf %245, %248 : vector<32x8xf32>
    %250 = math.exp %249 : vector<32x8xf32>
    %cst_90 = arith.constant dense<0.000000e+00> : vector<32xf32>
    %251 = vector.multi_reduction <add>, %250, %cst_90 [1] : vector<32x8xf32> to vector<32xf32>
    %252 = vector.shape_cast %251 : vector<32xf32> to vector<32x1xf32>
    %253 = tpu.reciprocal %252 {approx = true} : vector<32x1xf32> -> vector<32x1xf32>
    %254 = vector.broadcast %253 : vector<32x1xf32> to vector<32x8xf32>
    %255 = arith.mulf %250, %254 : vector<32x8xf32>
    %256 = arith.truncf %255 : vector<32x8xf32> to vector<32x8xbf16>
    %257 = arith.truncf %232 : vector<8x128xf32> to vector<8x128xbf16>
    %cst_91 = arith.constant dense<0.000000e+00> : vector<32x128xf32>
    %258 = tpu.matmul %256, %257, %cst_91 {dimension_numbers = #tpu.dot_dimension_numbers<[1], [0], [0], [1], [0, 0, 1, 1], [], []>} : vector<32x8xbf16>, vector<8x128xbf16>, vector<32x128xf32> -> vector<32x128xf32>
    %259 = vector.extract_strided_slice %258 {offsets = [0, 0], sizes = [8, 128], strides = [1, 1]} : vector<32x128xf32> to vector<8x128xf32>
    %260 = vector.broadcast %11 : vector<1x128xf32> to vector<8x128xf32>
    %261 = arith.mulf %259, %260 : vector<8x128xf32>
    %262 = vector.extract_strided_slice %258 {offsets = [8, 0], sizes = [8, 128], strides = [1, 1]} : vector<32x128xf32> to vector<8x128xf32>
    %263 = vector.broadcast %18 : vector<1x128xf32> to vector<8x128xf32>
    %264 = arith.mulf %262, %263 : vector<8x128xf32>
    %265 = arith.addf %261, %264 : vector<8x128xf32>
    %266 = vector.extract_strided_slice %258 {offsets = [16, 0], sizes = [8, 128], strides = [1, 1]} : vector<32x128xf32> to vector<8x128xf32>
    %267 = vector.broadcast %25 : vector<1x128xf32> to vector<8x128xf32>
    %268 = arith.mulf %266, %267 : vector<8x128xf32>
    %269 = arith.addf %265, %268 : vector<8x128xf32>
    %270 = vector.extract_strided_slice %258 {offsets = [24, 0], sizes = [8, 128], strides = [1, 1]} : vector<32x128xf32> to vector<8x128xf32>
    %271 = vector.broadcast %32 : vector<1x128xf32> to vector<8x128xf32>
    %272 = arith.mulf %270, %271 : vector<8x128xf32>
    %273 = arith.addf %269, %272 : vector<8x128xf32>
    %c1_92 = arith.constant 1 : index
    %c0_93 = arith.constant 0 : index
    %c0_94 = arith.constant 0 : index
    %274 = vector.load %arg10[%c1_92, %c0_93, %c0_94] : memref<2x128x128xbf16, #tpu.memory_space<vmem>>, vector<1x128x128xbf16>
    %275 = vector.shape_cast %274 : vector<1x128x128xbf16> to vector<128x128xbf16>
    %276 = arith.truncf %273 : vector<8x128xf32> to vector<8x128xbf16>
    %cst_95 = arith.constant dense<0.000000e+00> : vector<8x128xf32>
    %277 = tpu.matmul %276, %275, %cst_95 {dimension_numbers = #tpu.dot_dimension_numbers<[1], [0], [0], [1], [0, 0, 1, 1], [], []>} : vector<8x128xbf16>, vector<128x128xbf16>, vector<8x128xf32> -> vector<8x128xf32>
    %c1_96 = arith.constant 1 : index
    %c0_97 = arith.constant 0 : index
    %c0_98 = arith.constant 0 : index
    %278 = vector.load %arg11[%c1_96, %c0_97, %c0_98] : memref<2x1x128xf32, #tpu.memory_space<vmem>>, vector<1x1x128xf32>
    %279 = vector.shape_cast %278 : vector<1x1x128xf32> to vector<1x128xf32>
    %280 = vector.broadcast %279 : vector<1x128xf32> to vector<8x128xf32>
    %281 = arith.addf %277, %280 : vector<8x128xf32>
    %282 = arith.addf %221, %281 : vector<8x128xf32>
    %c1_99 = arith.constant 1 : index
    %c0_100 = arith.constant 0 : index
    %c0_101 = arith.constant 0 : index
    %283 = vector.load %arg12[%c1_99, %c0_100, %c0_101] : memref<2x1x128xf32, #tpu.memory_space<vmem>>, vector<1x1x128xf32>
    %284 = vector.shape_cast %283 : vector<1x1x128xf32> to vector<1x128xf32>
    %c1_102 = arith.constant 1 : index
    %c0_103 = arith.constant 0 : index
    %c0_104 = arith.constant 0 : index
    %285 = vector.load %arg13[%c1_102, %c0_103, %c0_104] : memref<2x1x128xf32, #tpu.memory_space<vmem>>, vector<1x1x128xf32>
    %286 = vector.shape_cast %285 : vector<1x1x128xf32> to vector<1x128xf32>
    %287 = vector.broadcast %4 : vector<1x128xf32> to vector<8x128xf32>
    %288 = arith.mulf %282, %287 : vector<8x128xf32>
    %cst_105 = arith.constant dense<0.000000e+00> : vector<8xf32>
    %289 = vector.multi_reduction <add>, %288, %cst_105 [1] : vector<8x128xf32> to vector<8xf32>
    %290 = vector.shape_cast %289 : vector<8xf32> to vector<8x1xf32>
    %cst_106 = arith.constant 3.125000e-02 : f32
    %291 = vector.broadcast %cst_106 : f32 to vector<8x1xf32>
    %292 = arith.mulf %290, %291 : vector<8x1xf32>
    %293 = vector.broadcast %292 : vector<8x1xf32> to vector<8x128xf32>
    %294 = arith.subf %282, %293 : vector<8x128xf32>
    %295 = vector.broadcast %4 : vector<1x128xf32> to vector<8x128xf32>
    %296 = arith.mulf %294, %295 : vector<8x128xf32>
    %297 = arith.mulf %296, %296 : vector<8x128xf32>
    %cst_107 = arith.constant dense<0.000000e+00> : vector<8xf32>
    %298 = vector.multi_reduction <add>, %297, %cst_107 [1] : vector<8x128xf32> to vector<8xf32>
    %299 = vector.shape_cast %298 : vector<8xf32> to vector<8x1xf32>
    %cst_108 = arith.constant 3.125000e-02 : f32
    %300 = vector.broadcast %cst_108 : f32 to vector<8x1xf32>
    %301 = arith.mulf %299, %300 : vector<8x1xf32>
    %cst_109 = arith.constant 9.99999996E-13 : f32
    %302 = vector.broadcast %cst_109 : f32 to vector<8x1xf32>
    %303 = arith.addf %301, %302 : vector<8x1xf32>
    %304 = math.rsqrt %303 : vector<8x1xf32>
    %305 = vector.broadcast %304 : vector<8x1xf32> to vector<8x128xf32>
    %306 = arith.mulf %296, %305 : vector<8x128xf32>
    %307 = vector.broadcast %284 : vector<1x128xf32> to vector<8x128xf32>
    %308 = arith.mulf %306, %307 : vector<8x128xf32>
    %309 = vector.broadcast %286 : vector<1x128xf32> to vector<8x128xf32>
    %310 = arith.addf %308, %309 : vector<8x128xf32>
    %c1_110 = arith.constant 1 : index
    %c0_111 = arith.constant 0 : index
    %c0_112 = arith.constant 0 : index
    %311 = vector.load %arg14[%c1_110, %c0_111, %c0_112] : memref<2x128x128xbf16, #tpu.memory_space<vmem>>, vector<1x128x128xbf16>
    %312 = vector.shape_cast %311 : vector<1x128x128xbf16> to vector<128x128xbf16>
    %313 = arith.truncf %310 : vector<8x128xf32> to vector<8x128xbf16>
    %cst_113 = arith.constant dense<0.000000e+00> : vector<8x128xf32>
    %314 = tpu.matmul %313, %312, %cst_113 {dimension_numbers = #tpu.dot_dimension_numbers<[1], [0], [0], [1], [0, 0, 1, 1], [], []>} : vector<8x128xbf16>, vector<128x128xbf16>, vector<8x128xf32> -> vector<8x128xf32>
    %c1_114 = arith.constant 1 : index
    %c0_115 = arith.constant 0 : index
    %c0_116 = arith.constant 0 : index
    %315 = vector.load %arg15[%c1_114, %c0_115, %c0_116] : memref<2x1x128xf32, #tpu.memory_space<vmem>>, vector<1x1x128xf32>
    %316 = vector.shape_cast %315 : vector<1x1x128xf32> to vector<1x128xf32>
    %317 = vector.broadcast %316 : vector<1x128xf32> to vector<8x128xf32>
    %318 = arith.addf %314, %317 : vector<8x128xf32>
    %319 = arith.mulf %318, %318 : vector<8x128xf32>
    %320 = arith.mulf %318, %319 : vector<8x128xf32>
    %cst_117 = arith.constant 4.471500e-02 : f32
    %321 = vector.broadcast %cst_117 : f32 to vector<8x128xf32>
    %322 = arith.mulf %321, %320 : vector<8x128xf32>
    %323 = arith.addf %318, %322 : vector<8x128xf32>
    %cst_118 = arith.constant 0.797884583 : f32
    %324 = vector.broadcast %cst_118 : f32 to vector<8x128xf32>
    %325 = arith.mulf %324, %323 : vector<8x128xf32>
    %326 = math.tanh %325 : vector<8x128xf32>
    %cst_119 = arith.constant 1.000000e+00 : f32
    %327 = vector.broadcast %cst_119 : f32 to vector<8x128xf32>
    %328 = arith.addf %327, %326 : vector<8x128xf32>
    %cst_120 = arith.constant 5.000000e-01 : f32
    %329 = vector.broadcast %cst_120 : f32 to vector<8x128xf32>
    %330 = arith.mulf %329, %328 : vector<8x128xf32>
    %331 = arith.mulf %318, %330 : vector<8x128xf32>
    %c1_121 = arith.constant 1 : index
    %c0_122 = arith.constant 0 : index
    %c0_123 = arith.constant 0 : index
    %332 = vector.load %arg16[%c1_121, %c0_122, %c0_123] : memref<2x128x128xbf16, #tpu.memory_space<vmem>>, vector<1x128x128xbf16>
    %333 = vector.shape_cast %332 : vector<1x128x128xbf16> to vector<128x128xbf16>
    %334 = arith.truncf %331 : vector<8x128xf32> to vector<8x128xbf16>
    %cst_124 = arith.constant dense<0.000000e+00> : vector<8x128xf32>
    %335 = tpu.matmul %334, %333, %cst_124 {dimension_numbers = #tpu.dot_dimension_numbers<[1], [0], [0], [1], [0, 0, 1, 1], [], []>} : vector<8x128xbf16>, vector<128x128xbf16>, vector<8x128xf32> -> vector<8x128xf32>
    %c1_125 = arith.constant 1 : index
    %c0_126 = arith.constant 0 : index
    %c0_127 = arith.constant 0 : index
    %336 = vector.load %arg17[%c1_125, %c0_126, %c0_127] : memref<2x1x128xf32, #tpu.memory_space<vmem>>, vector<1x1x128xf32>
    %337 = vector.shape_cast %336 : vector<1x1x128xf32> to vector<1x128xf32>
    %338 = vector.broadcast %337 : vector<1x128xf32> to vector<8x128xf32>
    %339 = arith.addf %335, %338 : vector<8x128xf32>
    %340 = arith.addf %310, %339 : vector<8x128xf32>
    %c1_128 = arith.constant 1 : index
    %c0_129 = arith.constant 0 : index
    %c0_130 = arith.constant 0 : index
    %341 = vector.load %arg18[%c1_128, %c0_129, %c0_130] : memref<2x1x128xf32, #tpu.memory_space<vmem>>, vector<1x1x128xf32>
    %342 = vector.shape_cast %341 : vector<1x1x128xf32> to vector<1x128xf32>
    %c1_131 = arith.constant 1 : index
    %c0_132 = arith.constant 0 : index
    %c0_133 = arith.constant 0 : index
    %343 = vector.load %arg19[%c1_131, %c0_132, %c0_133] : memref<2x1x128xf32, #tpu.memory_space<vmem>>, vector<1x1x128xf32>
    %344 = vector.shape_cast %343 : vector<1x1x128xf32> to vector<1x128xf32>
    %345 = vector.broadcast %4 : vector<1x128xf32> to vector<8x128xf32>
    %346 = arith.mulf %340, %345 : vector<8x128xf32>
    %cst_134 = arith.constant dense<0.000000e+00> : vector<8xf32>
    %347 = vector.multi_reduction <add>, %346, %cst_134 [1] : vector<8x128xf32> to vector<8xf32>
    %348 = vector.shape_cast %347 : vector<8xf32> to vector<8x1xf32>
    %cst_135 = arith.constant 3.125000e-02 : f32
    %349 = vector.broadcast %cst_135 : f32 to vector<8x1xf32>
    %350 = arith.mulf %348, %349 : vector<8x1xf32>
    %351 = vector.broadcast %350 : vector<8x1xf32> to vector<8x128xf32>
    %352 = arith.subf %340, %351 : vector<8x128xf32>
    %353 = vector.broadcast %4 : vector<1x128xf32> to vector<8x128xf32>
    %354 = arith.mulf %352, %353 : vector<8x128xf32>
    %355 = arith.mulf %354, %354 : vector<8x128xf32>
    %cst_136 = arith.constant dense<0.000000e+00> : vector<8xf32>
    %356 = vector.multi_reduction <add>, %355, %cst_136 [1] : vector<8x128xf32> to vector<8xf32>
    %357 = vector.shape_cast %356 : vector<8xf32> to vector<8x1xf32>
    %cst_137 = arith.constant 3.125000e-02 : f32
    %358 = vector.broadcast %cst_137 : f32 to vector<8x1xf32>
    %359 = arith.mulf %357, %358 : vector<8x1xf32>
    %cst_138 = arith.constant 9.99999996E-13 : f32
    %360 = vector.broadcast %cst_138 : f32 to vector<8x1xf32>
    %361 = arith.addf %359, %360 : vector<8x1xf32>
    %362 = math.rsqrt %361 : vector<8x1xf32>
    %363 = vector.broadcast %362 : vector<8x1xf32> to vector<8x128xf32>
    %364 = arith.mulf %354, %363 : vector<8x128xf32>
    %365 = vector.broadcast %342 : vector<1x128xf32> to vector<8x128xf32>
    %366 = arith.mulf %364, %365 : vector<8x128xf32>
    %367 = vector.broadcast %344 : vector<1x128xf32> to vector<8x128xf32>
    %368 = arith.addf %366, %367 : vector<8x128xf32>
    %369 = vector.extract_strided_slice %368 {offsets = [0, 0], sizes = [1, 128], strides = [1, 1]} : vector<8x128xf32> to vector<1x128xf32>
    %c0_139 = arith.constant 0 : index
    %c0_140 = arith.constant 0 : index
    %370 = vector.load %arg20[%c0_139, %c0_140] : memref<128x128xbf16, #tpu.memory_space<vmem>>, vector<128x128xbf16>
    %371 = arith.truncf %369 : vector<1x128xf32> to vector<1x128xbf16>
    %cst_141 = arith.constant dense<0.000000e+00> : vector<1x128xf32>
    %372 = tpu.matmul %371, %370, %cst_141 {dimension_numbers = #tpu.dot_dimension_numbers<[1], [0], [0], [1], [0, 0, 1, 1], [], []>} : vector<1x128xbf16>, vector<128x128xbf16>, vector<1x128xf32> -> vector<1x128xf32>
    %c0_142 = arith.constant 0 : index
    %c0_143 = arith.constant 0 : index
    %373 = vector.load %arg21[%c0_142, %c0_143] : memref<1x128xf32, #tpu.memory_space<vmem>>, vector<1x128xf32>
    %374 = arith.addf %372, %373 : vector<1x128xf32>
    %375 = math.tanh %374 : vector<1x128xf32>
    %c0_144 = arith.constant 0 : index
    %c0_145 = arith.constant 0 : index
    %c0_146 = arith.constant 0 : index
    %376 = vector.load %arg22[%c0_144, %c0_145, %c0_146] : memref<1x1x128xf32, #tpu.memory_space<vmem>>, vector<1x1x128xf32>
    %377 = vector.shape_cast %376 : vector<1x1x128xf32> to vector<1x128xf32>
    %378 = vector.shape_cast %375 : vector<1x128xf32> to vector<1x1x128xf32>
    tpu.vector_store %arg22[%c0_144, %c0_145, %c0_146], %378 {strides = array<i32>} : memref<1x1x128xf32, #tpu.memory_space<vmem>>, vector<1x1x128xf32>,
    return
  }
  func.func @transform_0(%arg0: i32) -> (i32, i32, i32) {
    %c0_i32 = arith.constant 0 : i32
    %c0_i32_0 = arith.constant 0 : i32
    %c0_i32_1 = arith.constant 0 : i32
    return %arg0, %c0_i32, %c0_i32_0 : i32, i32, i32
  }
  func.func @transform_1(%arg0: i32) -> (i32, i32, i32) {
    %c0_i32 = arith.constant 0 : i32
    %c0_i32_0 = arith.constant 0 : i32
    %c0_i32_1 = arith.constant 0 : i32
    return %arg0, %c0_i32, %c0_i32_0 : i32, i32, i32
  }
  func.func @transform_2(%arg0: i32) -> (i32, i32) {
    %c0_i32 = arith.constant 0 : i32
    %c0_i32_0 = arith.constant 0 : i32
    %c0_i32_1 = arith.constant 0 : i32
    return %c0_i32, %c0_i32_0 : i32, i32
  }
  func.func @transform_3(%arg0: i32) -> (i32, i32) {
    %c0_i32 = arith.constant 0 : i32
    %c0_i32_0 = arith.constant 0 : i32
    %c0_i32_1 = arith.constant 0 : i32
    return %c0_i32, %c0_i32_0 : i32, i32
  }
  func.func @transform_4(%arg0: i32) -> (i32, i32) {
    %c0_i32 = arith.constant 0 : i32
    %c0_i32_0 = arith.constant 0 : i32
    %c0_i32_1 = arith.constant 0 : i32
    return %c0_i32, %c0_i32_0 : i32, i32
  }
  func.func @transform_5(%arg0: i32) -> (i32, i32) {
    %c0_i32 = arith.constant 0 : i32
    %c0_i32_0 = arith.constant 0 : i32
    %c0_i32_1 = arith.constant 0 : i32
    return %c0_i32, %c0_i32_0 : i32, i32
  }
  func.func @transform_6(%arg0: i32) -> (i32, i32) {
    %c0_i32 = arith.constant 0 : i32
    %c0_i32_0 = arith.constant 0 : i32
    %c0_i32_1 = arith.constant 0 : i32
    return %c0_i32, %c0_i32_0 : i32, i32
  }
  func.func @transform_7(%arg0: i32) -> (i32, i32, i32) {
    %c0_i32 = arith.constant 0 : i32
    %c0_i32_0 = arith.constant 0 : i32
    %c0_i32_1 = arith.constant 0 : i32
    %c0_i32_2 = arith.constant 0 : i32
    return %c0_i32, %c0_i32_0, %c0_i32_1 : i32, i32, i32
  }
  func.func @transform_8(%arg0: i32) -> (i32, i32, i32) {
    %c0_i32 = arith.constant 0 : i32
    %c0_i32_0 = arith.constant 0 : i32
    %c0_i32_1 = arith.constant 0 : i32
    %c0_i32_2 = arith.constant 0 : i32
    return %c0_i32, %c0_i32_0, %c0_i32_1 : i32, i32, i32
  }
  func.func @transform_9(%arg0: i32) -> (i32, i32, i32) {
    %c0_i32 = arith.constant 0 : i32
    %c0_i32_0 = arith.constant 0 : i32
    %c0_i32_1 = arith.constant 0 : i32
    %c0_i32_2 = arith.constant 0 : i32
    return %c0_i32, %c0_i32_0, %c0_i32_1 : i32, i32, i32
  }
  func.func @transform_10(%arg0: i32) -> (i32, i32, i32) {
    %c0_i32 = arith.constant 0 : i32
    %c0_i32_0 = arith.constant 0 : i32
    %c0_i32_1 = arith.constant 0 : i32
    %c0_i32_2 = arith.constant 0 : i32
    return %c0_i32, %c0_i32_0, %c0_i32_1 : i32, i32, i32
  }
  func.func @transform_11(%arg0: i32) -> (i32, i32, i32) {
    %c0_i32 = arith.constant 0 : i32
    %c0_i32_0 = arith.constant 0 : i32
    %c0_i32_1 = arith.constant 0 : i32
    %c0_i32_2 = arith.constant 0 : i32
    return %c0_i32, %c0_i32_0, %c0_i32_1 : i32, i32, i32
  }
  func.func @transform_12(%arg0: i32) -> (i32, i32, i32) {
    %c0_i32 = arith.constant 0 : i32
    %c0_i32_0 = arith.constant 0 : i32
    %c0_i32_1 = arith.constant 0 : i32
    %c0_i32_2 = arith.constant 0 : i32
    return %c0_i32, %c0_i32_0, %c0_i32_1 : i32, i32, i32
  }
  func.func @transform_13(%arg0: i32) -> (i32, i32, i32) {
    %c0_i32 = arith.constant 0 : i32
    %c0_i32_0 = arith.constant 0 : i32
    %c0_i32_1 = arith.constant 0 : i32
    %c0_i32_2 = arith.constant 0 : i32
    return %c0_i32, %c0_i32_0, %c0_i32_1 : i32, i32, i32
  }
  func.func @transform_14(%arg0: i32) -> (i32, i32, i32) {
    %c0_i32 = arith.constant 0 : i32
    %c0_i32_0 = arith.constant 0 : i32
    %c0_i32_1 = arith.constant 0 : i32
    %c0_i32_2 = arith.constant 0 : i32
    return %c0_i32, %c0_i32_0, %c0_i32_1 : i32, i32, i32
  }
  func.func @transform_15(%arg0: i32) -> (i32, i32, i32) {
    %c0_i32 = arith.constant 0 : i32
    %c0_i32_0 = arith.constant 0 : i32
    %c0_i32_1 = arith.constant 0 : i32
    %c0_i32_2 = arith.constant 0 : i32
    return %c0_i32, %c0_i32_0, %c0_i32_1 : i32, i32, i32
  }
  func.func @transform_16(%arg0: i32) -> (i32, i32, i32) {
    %c0_i32 = arith.constant 0 : i32
    %c0_i32_0 = arith.constant 0 : i32
    %c0_i32_1 = arith.constant 0 : i32
    %c0_i32_2 = arith.constant 0 : i32
    return %c0_i32, %c0_i32_0, %c0_i32_1 : i32, i32, i32
  }
  func.func @transform_17(%arg0: i32) -> (i32, i32, i32) {
    %c0_i32 = arith.constant 0 : i32
    %c0_i32_0 = arith.constant 0 : i32
    %c0_i32_1 = arith.constant 0 : i32
    %c0_i32_2 = arith.constant 0 : i32
    return %c0_i32, %c0_i32_0, %c0_i32_1 : i32, i32, i32
  }
  func.func @transform_18(%arg0: i32) -> (i32, i32, i32) {
    %c0_i32 = arith.constant 0 : i32
    %c0_i32_0 = arith.constant 0 : i32
    %c0_i32_1 = arith.constant 0 : i32
    %c0_i32_2 = arith.constant 0 : i32
    return %c0_i32, %c0_i32_0, %c0_i32_1 : i32, i32, i32
  }
  func.func @transform_19(%arg0: i32) -> (i32, i32) {
    %c0_i32 = arith.constant 0 : i32
    %c0_i32_0 = arith.constant 0 : i32
    %c0_i32_1 = arith.constant 0 : i32
    return %c0_i32, %c0_i32_0 : i32, i32
  }
  func.func @transform_20(%arg0: i32) -> (i32, i32) {
    %c0_i32 = arith.constant 0 : i32
    %c0_i32_0 = arith.constant 0 : i32
    %c0_i32_1 = arith.constant 0 : i32
    return %c0_i32, %c0_i32_0 : i32, i32
  }
  func.func @transform_21(%arg0: i32) -> (i32, i32, i32) {
    %c0_i32 = arith.constant 0 : i32
    %c0_i32_0 = arith.constant 0 : i32
    %c0_i32_1 = arith.constant 0 : i32
    return %arg0, %c0_i32, %c0_i32_0 : i32, i32, i32
  }
}

</mosaic_0001>

<llo_original>
// kernel: text_encoder_forward.1
$region0: #{text_encoder_forward.1}
  #allocation0 [shape = 'u32[]', space=smem, size = 0x4, offset = 0x4, fixed_abs, tag = 'smem constant byte address 0x4 - core index']
  #allocation1 [shape = 'u32[144,128]{1,0:T(1,128)}', space=vmem, size = 0x12000, scoped, tag = 'internal scratch']
  %s0 = inlined_call_operand.vmem [shape: s32[2,8,1], index: 0, kind: input, shape index: {}]
  %s1 = inlined_call_operand.vmem [shape: f32[2,32,8], index: 1, kind: input, shape index: {}]
  %s2 = inlined_call_operand.vmem [shape: f32[64,128], index: 2, kind: input, shape index: {}]
  %s3 = inlined_call_operand.vmem [shape: f32[16,128], index: 3, kind: input, shape index: {}]
  %s4 = inlined_call_operand.vmem [shape: f32[2,128], index: 4, kind: input, shape index: {}]
  %s5 = inlined_call_operand.vmem [shape: f32[1,128], index: 5, kind: input, shape index: {}]
  %s6 = inlined_call_operand.vmem [shape: f32[1,128], index: 6, kind: input, shape index: {}]
  %s7 = inlined_call_operand.vmem [shape: bf16[2,128,384], index: 7, kind: input, shape index: {}]
  %s8 = inlined_call_operand.vmem [shape: f32[2,1,384], index: 8, kind: input, shape index: {}]
  %s9 = inlined_call_operand.vmem [shape: bf16[2,128,128], index: 9, kind: input, shape index: {}]
  %s10 = inlined_call_operand.vmem [shape: f32[2,1,128], index: 10, kind: input, shape index: {}]
  %s11 = inlined_call_operand.vmem [shape: f32[2,1,128], index: 11, kind: input, shape index: {}]
  %s12 = inlined_call_operand.vmem [shape: f32[2,1,128], index: 12, kind: input, shape index: {}]
  %s13 = inlined_call_operand.vmem [shape: bf16[2,128,128], index: 13, kind: input, shape index: {}]
  %s14 = inlined_call_operand.vmem [shape: f32[2,1,128], index: 14, kind: input, shape index: {}]
  %s15 = inlined_call_operand.vmem [shape: bf16[2,128,128], index: 15, kind: input, shape index: {}]
  %s16 = inlined_call_operand.vmem [shape: f32[2,1,128], index: 16, kind: input, shape index: {}]
  %s17 = inlined_call_operand.vmem [shape: f32[2,1,128], index: 17, kind: input, shape index: {}]
  %s18 = inlined_call_operand.vmem [shape: f32[2,1,128], index: 18, kind: input, shape index: {}]
  %s19 = inlined_call_operand.vmem [shape: bf16[128,128], index: 19, kind: input, shape index: {}]
  %s20 = inlined_call_operand.vmem [shape: f32[1,128], index: 20, kind: input, shape index: {}]
  %s21 = inlined_call_operand.hbm [shape: f32[2,1,128], index: 21, kind: output, shape index: {}]
  %s22 = sld [smem:[#allocation0]]
  $region117: #{text_encoder_forward.1} parent=0
    _
  %s24 = ssub.s32 1, %s22
  %s25 = scalar_select 0, %s24, %s22
  $region1: #{text_encoder_forward.1} parent=0
    #allocation2 [shape = 'u8[1024]{0}', space=vmem, size = 0x400, scoped, tag = 'output window, operand 0']
    #allocation3 [shape = 's32[2]{0}', space=sflag, size = 0x8, scoped, tag = 'scoped memory for text_encoder_forward.1']
    %26 = vsyncpa [#allocation3], 0
    %s27 = scalar_lea.sflag [#allocation3], 1
    %28 = vsyncpa %s27, 0
    loop: start=0, step=1, limit=4
    $region2: #{text_encoder_forward.1} parent=1 // loop_pre_header
      _
    $region3: #{text_encoder_forward.1} parent=1 // loop_header
      %s30 = sphi 0, %s34
      %p31 = scmp.ge.s32.totalorder %s30, 4
      %s40 = sphi 0, %s42
      %s43 = sphi 0, %s40
      %s44 = sphi 0, %s43
      %s60 = sphi 0, %s44
      %s66 = sphi 0, %s68
      %s69 = sphi 0, %s66
      %s70 = sphi 0, %s69
      %s86 = sphi 0, %s70
      %s90 = sphi 0, %s90
      %s92 = sphi 0, %s90
      %s93 = sphi 0, %s92
      %s107 = sphi 0, %s93
      %s111 = sphi 0, %s111
      %s113 = sphi 0, %s111
      %s114 = sphi 0, %s113
      %s128 = sphi 0, %s114
      %s132 = sphi 0, %s132
      %s134 = sphi 0, %s132
      %s135 = sphi 0, %s134
      %s149 = sphi 0, %s135
      %s153 = sphi 0, %s153
      %s155 = sphi 0, %s153
      %s156 = sphi 0, %s155
      %s170 = sphi 0, %s156
      %s174 = sphi 0, %s174
      %s176 = sphi 0, %s174
      %s177 = sphi 0, %s176
      %s191 = sphi 0, %s177
      %s195 = sphi 0, %s195
      %s197 = sphi 0, %s195
      %s198 = sphi 0, %s197
      %s212 = sphi 0, %s198
      %s216 = sphi 0, %s216
      %s218 = sphi 0, %s216
      %s219 = sphi 0, %s218
      %s233 = sphi 0, %s219
      %s237 = sphi 0, %s237
      %s239 = sphi 0, %s237
      %s240 = sphi 0, %s239
      %s254 = sphi 0, %s240
      %s258 = sphi 0, %s258
      %s260 = sphi 0, %s258
      %s261 = sphi 0, %s260
      %s275 = sphi 0, %s261
      %s279 = sphi 0, %s279
      %s281 = sphi 0, %s279
      %s282 = sphi 0, %s281
      %s296 = sphi 0, %s282
      %s300 = sphi 0, %s300
      %s302 = sphi 0, %s300
      %s303 = sphi 0, %s302
      %s317 = sphi 0, %s303
      %s321 = sphi 0, %s321
      %s323 = sphi 0, %s321
      %s324 = sphi 0, %s323
      %s338 = sphi 0, %s324
      %s342 = sphi 0, %s342
      %s344 = sphi 0, %s342
      %s345 = sphi 0, %s344
      %s359 = sphi 0, %s345
      %s363 = sphi 0, %s363
      %s365 = sphi 0, %s363
      %s366 = sphi 0, %s365
      %s380 = sphi 0, %s366
      %s384 = sphi 0, %s384
      %s386 = sphi 0, %s384
      %s387 = sphi 0, %s386
      %s401 = sphi 0, %s387
      %s405 = sphi 0, %s405
      %s407 = sphi 0, %s405
      %s408 = sphi 0, %s407
      %s422 = sphi 0, %s408
      %s426 = sphi 0, %s426
      %s428 = sphi 0, %s426
      %s429 = sphi 0, %s428
      %s443 = sphi 0, %s429
      %s447 = sphi 0, %s447
      %s449 = sphi 0, %s447
      %s450 = sphi 0, %s449
      %s464 = sphi 0, %s450
      %s468 = sphi 0, %s468
      %s470 = sphi 0, %s468
      %s471 = sphi 0, %s470
      %s485 = sphi 0, %s471
      %s491 = sphi 0, %s493
      %s494 = sphi 0, %s491
      %s495 = sphi 0, %s494
      %s511 = sphi 0, %s495
    $region4: #{text_encoder_forward.1} parent=1 // loop_header_branch
      %33 = sbr.rel (%p31) target = $region8
    $region5: #{text_encoder_forward.1} parent=1 // loop_body
      %s35 = ssub.s32 %s30, 1
      %s36 = ssub.s32 %s30, 2
      %s37 = sadd.s32 %s30, 1
      %s38 = ssub.s32 %s30, %s37
      %p39 = scmp.eq.s32.totalorder %s38, 0
      %s41 = sadd.s32 %s40, 1
      %s42 = scalar_select %p39, %s40, %s41
      %p45 = pneg %p39
      %p46 = scmp.eq.s32.totalorder %s30, 1
      %p47 = por %p45, %p46
      %p48 = scmp.ne.s32.totalorder %s40, %s43
      %p49 = scmp.eq.s32.totalorder %s30, 0
      %p50 = por %p48, %p49
      %p51 = scmp.ne.s32.totalorder %s40, %s43
      %p52 = scmp.eq.s32.totalorder %s35, 1
      %p53 = por %p51, %p52
      %p54 = scmp.ne.s32.totalorder %s43, %s44
      %p55 = scmp.eq.s32.totalorder %s35, 0
      %p56 = por %p54, %p55
      %p57 = scmp.ne.s32.totalorder %s43, %s44
      %p58 = scmp.eq.s32.totalorder %s36, 1
      %p59 = por %p57, %p58
      %p61 = scmp.ne.s32.totalorder %s44, %s60
      %p62 = scmp.eq.s32.totalorder %s36, 0
      %p63 = por %p61, %p62
      %s64 = ssub.s32 %s30, %s37
      %p65 = scmp.eq.s32.totalorder %s64, 0
      %s67 = sadd.s32 %s66, 1
      %s68 = scalar_select %p65, %s66, %s67
      %p71 = pneg %p65
      %p72 = scmp.eq.s32.totalorder %s30, 1
      %p73 = por %p71, %p72
      %p74 = scmp.ne.s32.totalorder %s66, %s69
      %p75 = scmp.eq.s32.totalorder %s30, 0
      %p76 = por %p74, %p75
      %p77 = scmp.ne.s32.totalorder %s66, %s69
      %p78 = scmp.eq.s32.totalorder %s35, 1
      %p79 = por %p77, %p78
      %p80 = scmp.ne.s32.totalorder %s69, %s70
      %p81 = scmp.eq.s32.totalorder %s35, 0
      %p82 = por %p80, %p81
      %p83 = scmp.ne.s32.totalorder %s69, %s70
      %p84 = scmp.eq.s32.totalorder %s36, 1
      %p85 = por %p83, %p84
      %p87 = scmp.ne.s32.totalorder %s70, %s86
      %p88 = scmp.eq.s32.totalorder %s36, 0
      %p89 = por %p87, %p88
      %s91 = sadd.s32 %s90, 1
      %p94 = scmp.eq.s32.totalorder %s30, 1
      %p95 = scmp.ne.s32.totalorder %s90, %s92
      %p96 = scmp.eq.s32.totalorder %s30, 0
      %p97 = por %p95, %p96
      %p98 = scmp.ne.s32.totalorder %s90, %s92
      %p99 = scmp.eq.s32.totalorder %s35, 1
      %p100 = por %p98, %p99
      %p101 = scmp.ne.s32.totalorder %s92, %s93
      %p102 = scmp.eq.s32.totalorder %s35, 0
      %p103 = por %p101, %p102
      %p104 = scmp.ne.s32.totalorder %s92, %s93
      %p105 = scmp.eq.s32.totalorder %s36, 1
      %p106 = por %p104, %p105
      %p108 = scmp.ne.s32.totalorder %s93, %s107
      %p109 = scmp.eq.s32.totalorder %s36, 0
      %p110 = por %p108, %p109
      %s112 = sadd.s32 %s111, 1
      %p115 = scmp.eq.s32.totalorder %s30, 1
      %p116 = scmp.ne.s32.totalorder %s111, %s113
      %p117 = scmp.eq.s32.totalorder %s30, 0
      %p118 = por %p116, %p117
      %p119 = scmp.ne.s32.totalorder %s111, %s113
      %p120 = scmp.eq.s32.totalorder %s35, 1
      %p121 = por %p119, %p120
      %p122 = scmp.ne.s32.totalorder %s113, %s114
      %p123 = scmp.eq.s32.totalorder %s35, 0
      %p124 = por %p122, %p123
      %p125 = scmp.ne.s32.totalorder %s113, %s114
      %p126 = scmp.eq.s32.totalorder %s36, 1
      %p127 = por %p125, %p126
      %p129 = scmp.ne.s32.totalorder %s114, %s128
      %p130 = scmp.eq.s32.totalorder %s36, 0
      %p131 = por %p129, %p130
      %s133 = sadd.s32 %s132, 1
      %p136 = scmp.eq.s32.totalorder %s30, 1
      %p137 = scmp.ne.s32.totalorder %s132, %s134
      %p138 = scmp.eq.s32.totalorder %s30, 0
      %p139 = por %p137, %p138
      %p140 = scmp.ne.s32.totalorder %s132, %s134
      %p141 = scmp.eq.s32.totalorder %s35, 1
      %p142 = por %p140, %p141
      %p143 = scmp.ne.s32.totalorder %s134, %s135
      %p144 = scmp.eq.s32.totalorder %s35, 0
      %p145 = por %p143, %p144
      %p146 = scmp.ne.s32.totalorder %s134, %s135
      %p147 = scmp.eq.s32.totalorder %s36, 1
      %p148 = por %p146, %p147
      %p150 = scmp.ne.s32.totalorder %s135, %s149
      %p151 = scmp.eq.s32.totalorder %s36, 0
      %p152 = por %p150, %p151
      %s154 = sadd.s32 %s153, 1
      %p157 = scmp.eq.s32.totalorder %s30, 1
      %p158 = scmp.ne.s32.totalorder %s153, %s155
      %p159 = scmp.eq.s32.totalorder %s30, 0
      %p160 = por %p158, %p159
      %p161 = scmp.ne.s32.totalorder %s153, %s155
      %p162 = scmp.eq.s32.totalorder %s35, 1
      %p163 = por %p161, %p162
      %p164 = scmp.ne.s32.totalorder %s155, %s156
      %p165 = scmp.eq.s32.totalorder %s35, 0
      %p166 = por %p164, %p165
      %p167 = scmp.ne.s32.totalorder %s155, %s156
      %p168 = scmp.eq.s32.totalorder %s36, 1
      %p169 = por %p167, %p168
      %p171 = scmp.ne.s32.totalorder %s156, %s170
      %p172 = scmp.eq.s32.totalorder %s36, 0
      %p173 = por %p171, %p172
      %s175 = sadd.s32 %s174, 1
      %p178 = scmp.eq.s32.totalorder %s30, 1
      %p179 = scmp.ne.s32.totalorder %s174, %s176
      %p180 = scmp.eq.s32.totalorder %s30, 0
      %p181 = por %p179, %p180
      %p182 = scmp.ne.s32.totalorder %s174, %s176
      %p183 = scmp.eq.s32.totalorder %s35, 1
      %p184 = por %p182, %p183
      %p185 = scmp.ne.s32.totalorder %s176, %s177
      %p186 = scmp.eq.s32.totalorder %s35, 0
      %p187 = por %p185, %p186
      %p188 = scmp.ne.s32.totalorder %s176, %s177
      %p189 = scmp.eq.s32.totalorder %s36, 1
      %p190 = por %p188, %p189
      %p192 = scmp.ne.s32.totalorder %s177, %s191
      %p193 = scmp.eq.s32.totalorder %s36, 0
      %p194 = por %p192, %p193
      %s196 = sadd.s32 %s195, 1
      %p199 = scmp.eq.s32.totalorder %s30, 1
      %p200 = scmp.ne.s32.totalorder %s195, %s197
      %p201 = scmp.eq.s32.totalorder %s30, 0
      %p202 = por %p200, %p201
      %p203 = scmp.ne.s32.totalorder %s195, %s197
      %p204 = scmp.eq.s32.totalorder %s35, 1
      %p205 = por %p203, %p204
      %p206 = scmp.ne.s32.totalorder %s197, %s198
      %p207 = scmp.eq.s32.totalorder %s35, 0
      %p208 = por %p206, %p207
      %p209 = scmp.ne.s32.totalorder %s197, %s198
      %p210 = scmp.eq.s32.totalorder %s36, 1
      %p211 = por %p209, %p210
      %p213 = scmp.ne.s32.totalorder %s198, %s212
      %p214 = scmp.eq.s32.totalorder %s36, 0
      %p215 = por %p213, %p214
      %s217 = sadd.s32 %s216, 1
      %p220 = scmp.eq.s32.totalorder %s30, 1
      %p221 = scmp.ne.s32.totalorder %s216, %s218
      %p222 = scmp.eq.s32.totalorder %s30, 0
      %p223 = por %p221, %p222
      %p224 = scmp.ne.s32.totalorder %s216, %s218
      %p225 = scmp.eq.s32.totalorder %s35, 1
      %p226 = por %p224, %p225
      %p227 = scmp.ne.s32.totalorder %s218, %s219
      %p228 = scmp.eq.s32.totalorder %s35, 0
      %p229 = por %p227, %p228
      %p230 = scmp.ne.s32.totalorder %s218, %s219
      %p231 = scmp.eq.s32.totalorder %s36, 1
      %p232 = por %p230, %p231
      %p234 = scmp.ne.s32.totalorder %s219, %s233
      %p235 = scmp.eq.s32.totalorder %s36, 0
      %p236 = por %p234, %p235
      %s238 = sadd.s32 %s237, 1
      %p241 = scmp.eq.s32.totalorder %s30, 1
      %p242 = scmp.ne.s32.totalorder %s237, %s239
      %p243 = scmp.eq.s32.totalorder %s30, 0
      %p244 = por %p242, %p243
      %p245 = scmp.ne.s32.totalorder %s237, %s239
      %p246 = scmp.eq.s32.totalorder %s35, 1
      %p247 = por %p245, %p246
      %p248 = scmp.ne.s32.totalorder %s239, %s240
      %p249 = scmp.eq.s32.totalorder %s35, 0
      %p250 = por %p248, %p249
      %p251 = scmp.ne.s32.totalorder %s239, %s240
      %p252 = scmp.eq.s32.totalorder %s36, 1
      %p253 = por %p251, %p252
      %p255 = scmp.ne.s32.totalorder %s240, %s254
      %p256 = scmp.eq.s32.totalorder %s36, 0
      %p257 = por %p255, %p256
      %s259 = sadd.s32 %s258, 1
      %p262 = scmp.eq.s32.totalorder %s30, 1
      %p263 = scmp.ne.s32.totalorder %s258, %s260
      %p264 = scmp.eq.s32.totalorder %s30, 0
      %p265 = por %p263, %p264
      %p266 = scmp.ne.s32.totalorder %s258, %s260
      %p267 = scmp.eq.s32.totalorder %s35, 1
      %p268 = por %p266, %p267
      %p269 = scmp.ne.s32.totalorder %s260, %s261
      %p270 = scmp.eq.s32.totalorder %s35, 0
      %p271 = por %p269, %p270
      %p272 = scmp.ne.s32.totalorder %s260, %s261
      %p273 = scmp.eq.s32.totalorder %s36, 1
      %p274 = por %p272, %p273
      %p276 = scmp.ne.s32.totalorder %s261, %s275
      %p277 = scmp.eq.s32.totalorder %s36, 0
      %p278 = por %p276, %p277
      %s280 = sadd.s32 %s279, 1
      %p283 = scmp.eq.s32.totalorder %s30, 1
      %p284 = scmp.ne.s32.totalorder %s279, %s281
      %p285 = scmp.eq.s32.totalorder %s30, 0
      %p286 = por %p284, %p285
      %p287 = scmp.ne.s32.totalorder %s279, %s281
      %p288 = scmp.eq.s32.totalorder %s35, 1
      %p289 = por %p287, %p288
      %p290 = scmp.ne.s32.totalorder %s281, %s282
      %p291 = scmp.eq.s32.totalorder %s35, 0
      %p292 = por %p290, %p291
      %p293 = scmp.ne.s32.totalorder %s281, %s282
      %p294 = scmp.eq.s32.totalorder %s36, 1
      %p295 = por %p293, %p294
      %p297 = scmp.ne.s32.totalorder %s282, %s296
      %p298 = scmp.eq.s32.totalorder %s36, 0
      %p299 = por %p297, %p298
      %s301 = sadd.s32 %s300, 1
      %p304 = scmp.eq.s32.totalorder %s30, 1
      %p305 = scmp.ne.s32.totalorder %s300, %s302
      %p306 = scmp.eq.s32.totalorder %s30, 0
      %p307 = por %p305, %p306
      %p308 = scmp.ne.s32.totalorder %s300, %s302
      %p309 = scmp.eq.s32.totalorder %s35, 1
      %p310 = por %p308, %p309
      %p311 = scmp.ne.s32.totalorder %s302, %s303
      %p312 = scmp.eq.s32.totalorder %s35, 0
      %p313 = por %p311, %p312
      %p314 = scmp.ne.s32.totalorder %s302, %s303
      %p315 = scmp.eq.s32.totalorder %s36, 1
      %p316 = por %p314, %p315
      %p318 = scmp.ne.s32.totalorder %s303, %s317
      %p319 = scmp.eq.s32.totalorder %s36, 0
      %p320 = por %p318, %p319
      %s322 = sadd.s32 %s321, 1
      %p325 = scmp.eq.s32.totalorder %s30, 1
      %p326 = scmp.ne.s32.totalorder %s321, %s323
      %p327 = scmp.eq.s32.totalorder %s30, 0
      %p328 = por %p326, %p327
      %p329 = scmp.ne.s32.totalorder %s321, %s323
      %p330 = scmp.eq.s32.totalorder %s35, 1
      %p331 = por %p329, %p330
      %p332 = scmp.ne.s32.totalorder %s323, %s324
      %p333 = scmp.eq.s32.totalorder %s35, 0
      %p334 = por %p332, %p333
      %p335 = scmp.ne.s32.totalorder %s323, %s324
      %p336 = scmp.eq.s32.totalorder %s36, 1
      %p337 = por %p335, %p336
      %p339 = scmp.ne.s32.totalorder %s324, %s338
      %p340 = scmp.eq.s32.totalorder %s36, 0
      %p341 = por %p339, %p340
      %s343 = sadd.s32 %s342, 1
      %p346 = scmp.eq.s32.totalorder %s30, 1
      %p347 = scmp.ne.s32.totalorder %s342, %s344
      %p348 = scmp.eq.s32.totalorder %s30, 0
      %p349 = por %p347, %p348
      %p350 = scmp.ne.s32.totalorder %s342, %s344
      %p351 = scmp.eq.s32.totalorder %s35, 1
      %p352 = por %p350, %p351
      %p353 = scmp.ne.s32.totalorder %s344, %s345
      %p354 = scmp.eq.s32.totalorder %s35, 0
      %p355 = por %p353, %p354
      %p356 = scmp.ne.s32.totalorder %s344, %s345
      %p357 = scmp.eq.s32.totalorder %s36, 1
      %p358 = por %p356, %p357
      %p360 = scmp.ne.s32.totalorder %s345, %s359
      %p361 = scmp.eq.s32.totalorder %s36, 0
      %p362 = por %p360, %p361
      %s364 = sadd.s32 %s363, 1
      %p367 = scmp.eq.s32.totalorder %s30, 1
      %p368 = scmp.ne.s32.totalorder %s363, %s365
      %p369 = scmp.eq.s32.totalorder %s30, 0
      %p370 = por %p368, %p369
      %p371 = scmp.ne.s32.totalorder %s363, %s365
      %p372 = scmp.eq.s32.totalorder %s35, 1
      %p373 = por %p371, %p372
      %p374 = scmp.ne.s32.totalorder %s365, %s366
      %p375 = scmp.eq.s32.totalorder %s35, 0
      %p376 = por %p374, %p375
      %p377 = scmp.ne.s32.totalorder %s365, %s366
      %p378 = scmp.eq.s32.totalorder %s36, 1
      %p379 = por %p377, %p378
      %p381 = scmp.ne.s32.totalorder %s366, %s380
      %p382 = scmp.eq.s32.totalorder %s36, 0
      %p383 = por %p381, %p382
      %s385 = sadd.s32 %s384, 1
      %p388 = scmp.eq.s32.totalorder %s30, 1
      %p389 = scmp.ne.s32.totalorder %s384, %s386
      %p390 = scmp.eq.s32.totalorder %s30, 0
      %p391 = por %p389, %p390
      %p392 = scmp.ne.s32.totalorder %s384, %s386
      %p393 = scmp.eq.s32.totalorder %s35, 1
      %p394 = por %p392, %p393
      %p395 = scmp.ne.s32.totalorder %s386, %s387
      %p396 = scmp.eq.s32.totalorder %s35, 0
      %p397 = por %p395, %p396
      %p398 = scmp.ne.s32.totalorder %s386, %s387
      %p399 = scmp.eq.s32.totalorder %s36, 1
      %p400 = por %p398, %p399
      %p402 = scmp.ne.s32.totalorder %s387, %s401
      %p403 = scmp.eq.s32.totalorder %s36, 0
      %p404 = por %p402, %p403
      %s406 = sadd.s32 %s405, 1
      %p409 = scmp.eq.s32.totalorder %s30, 1
      %p410 = scmp.ne.s32.totalorder %s405, %s407
      %p411 = scmp.eq.s32.totalorder %s30, 0
      %p412 = por %p410, %p411
      %p413 = scmp.ne.s32.totalorder %s405, %s407
      %p414 = scmp.eq.s32.totalorder %s35, 1
      %p415 = por %p413, %p414
      %p416 = scmp.ne.s32.totalorder %s407, %s408
      %p417 = scmp.eq.s32.totalorder %s35, 0
      %p418 = por %p416, %p417
      %p419 = scmp.ne.s32.totalorder %s407, %s408
      %p420 = scmp.eq.s32.totalorder %s36, 1
      %p421 = por %p419, %p420
      %p423 = scmp.ne.s32.totalorder %s408, %s422
      %p424 = scmp.eq.s32.totalorder %s36, 0
      %p425 = por %p423, %p424
      %s427 = sadd.s32 %s426, 1
      %p430 = scmp.eq.s32.totalorder %s30, 1
      %p431 = scmp.ne.s32.totalorder %s426, %s428
      %p432 = scmp.eq.s32.totalorder %s30, 0
      %p433 = por %p431, %p432
      %p434 = scmp.ne.s32.totalorder %s426, %s428
      %p435 = scmp.eq.s32.totalorder %s35, 1
      %p436 = por %p434, %p435
      %p437 = scmp.ne.s32.totalorder %s428, %s429
      %p438 = scmp.eq.s32.totalorder %s35, 0
      %p439 = por %p437, %p438
      %p440 = scmp.ne.s32.totalorder %s428, %s429
      %p441 = scmp.eq.s32.totalorder %s36, 1
      %p442 = por %p440, %p441
      %p444 = scmp.ne.s32.totalorder %s429, %s443
      %p445 = scmp.eq.s32.totalorder %s36, 0
      %p446 = por %p444, %p445
      %s448 = sadd.s32 %s447, 1
      %p451 = scmp.eq.s32.totalorder %s30, 1
      %p452 = scmp.ne.s32.totalorder %s447, %s449
      %p453 = scmp.eq.s32.totalorder %s30, 0
      %p454 = por %p452, %p453
      %p455 = scmp.ne.s32.totalorder %s447, %s449
      %p456 = scmp.eq.s32.totalorder %s35, 1
      %p457 = por %p455, %p456
      %p458 = scmp.ne.s32.totalorder %s449, %s450
      %p459 = scmp.eq.s32.totalorder %s35, 0
      %p460 = por %p458, %p459
      %p461 = scmp.ne.s32.totalorder %s449, %s450
      %p462 = scmp.eq.s32.totalorder %s36, 1
      %p463 = por %p461, %p462
      %p465 = scmp.ne.s32.totalorder %s450, %s464
      %p466 = scmp.eq.s32.totalorder %s36, 0
      %p467 = por %p465, %p466
      %s469 = sadd.s32 %s468, 1
      %p472 = scmp.eq.s32.totalorder %s30, 1
      %p473 = scmp.ne.s32.totalorder %s468, %s470
      %p474 = scmp.eq.s32.totalorder %s30, 0
      %p475 = por %p473, %p474
      %p476 = scmp.ne.s32.totalorder %s468, %s470
      %p477 = scmp.eq.s32.totalorder %s35, 1
      %p478 = por %p476, %p477
      %p479 = scmp.ne.s32.totalorder %s470, %s471
      %p480 = scmp.eq.s32.totalorder %s35, 0
      %p481 = por %p479, %p480
      %p482 = scmp.ne.s32.totalorder %s470, %s471
      %p483 = scmp.eq.s32.totalorder %s36, 1
      %p484 = por %p482, %p483
      %p486 = scmp.ne.s32.totalorder %s471, %s485
      %p487 = scmp.eq.s32.totalorder %s36, 0
      %p488 = por %p486, %p487
      %s489 = ssub.s32 %s30, %s37
      %p490 = scmp.eq.s32.totalorder %s489, 0
      %s492 = sadd.s32 %s491, 1
      %s493 = scalar_select %p490, %s491, %s492
      %p496 = pneg %p490
      %p497 = scmp.eq.s32.totalorder %s30, 1
      %p498 = por %p496, %p497
      %p499 = scmp.ne.s32.totalorder %s491, %s494
      %p500 = scmp.eq.s32.totalorder %s30, 0
      %p501 = por %p499, %p500
      %p502 = scmp.ne.s32.totalorder %s491, %s494
      %p503 = scmp.eq.s32.totalorder %s35, 1
      %p504 = por %p502, %p503
      %p505 = scmp.ne.s32.totalorder %s494, %s495
      %p506 = scmp.eq.s32.totalorder %s35, 0
      %p507 = por %p505, %p506
      %p508 = scmp.ne.s32.totalorder %s494, %s495
      %p509 = scmp.eq.s32.totalorder %s36, 1
      %p510 = por %p508, %p509
      %p512 = scmp.ne.s32.totalorder %s495, %s511
      %p513 = scmp.eq.s32.totalorder %s36, 0
      %p514 = por %p512, %p513
      %p515 = scmp.le.s32.totalorder 1, %s30
      %p516 = scmp.lt.s32.totalorder %s30, 3
      %p517 = pnand %p515, %p516
      %p518 = pneg %p517
      // Predicated region
      $region9: #{text_encoder_forward.1} parent=5 // pred_check
        _
      $region10: #{text_encoder_forward.1} parent=5 // pred_check_branch
        %520 = sbr.rel (%p517) target = $region12
      $region11: #{text_encoder_forward.1} parent=5 // pred_region
        %s521 = ssub.s32 %s30, 1
        // Predicated region
        $region13: #{text_encoder_forward.1} parent=11 // pred_check
          %p522 = pneg %p103
        $region14: #{text_encoder_forward.1} parent=11 // pred_check_branch
          %524 = sbr.rel (%p522) target = $region16
        $region15: #{text_encoder_forward.1} parent=11 // pred_region
          _
        $region16: #{text_encoder_forward.1} parent=11 // pred_fallthru
          _
        // Predicated region
        $region17: #{text_encoder_forward.1} parent=11 // pred_check
          %p525 = pneg %p124
        $region18: #{text_encoder_forward.1} parent=11 // pred_check_branch
          %527 = sbr.rel (%p525) target = $region20
        $region19: #{text_encoder_forward.1} parent=11 // pred_region
          _
        $region20: #{text_encoder_forward.1} parent=11 // pred_fallthru
          _
        // Predicated region
        $region21: #{text_encoder_forward.1} parent=11 // pred_check
          %p528 = pneg %p145
        $region22: #{text_encoder_forward.1} parent=11 // pred_check_branch
          %530 = sbr.rel (%p528) target = $region24
        $region23: #{text_encoder_forward.1} parent=11 // pred_region
          _
        $region24: #{text_encoder_forward.1} parent=11 // pred_fallthru
          _
        // Predicated region
        $region25: #{text_encoder_forward.1} parent=11 // pred_check
          %p531 = pneg %p166
        $region26: #{text_encoder_forward.1} parent=11 // pred_check_branch
          %533 = sbr.rel (%p531) target = $region28
        $region27: #{text_encoder_forward.1} parent=11 // pred_region
          _
        $region28: #{text_encoder_forward.1} parent=11 // pred_fallthru
          _
        // Predicated region
        $region29: #{text_encoder_forward.1} parent=11 // pred_check
          %p534 = pneg %p187
        $region30: #{text_encoder_forward.1} parent=11 // pred_check_branch
          %536 = sbr.rel (%p534) target = $region32
        $region31: #{text_encoder_forward.1} parent=11 // pred_region
          _
        $region32: #{text_encoder_forward.1} parent=11 // pred_fallthru
          _
        // Predicated region
        $region33: #{text_encoder_forward.1} parent=11 // pred_check
          %p537 = pneg %p208
        $region34: #{text_encoder_forward.1} parent=11 // pred_check_branch
          %539 = sbr.rel (%p537) target = $region36
        $region35: #{text_encoder_forward.1} parent=11 // pred_region
          _
        $region36: #{text_encoder_forward.1} parent=11 // pred_fallthru
          _
        // Predicated region
        $region37: #{text_encoder_forward.1} parent=11 // pred_check
          %p540 = pneg %p229
        $region38: #{text_encoder_forward.1} parent=11 // pred_check_branch
          %542 = sbr.rel (%p540) target = $region40
        $region39: #{text_encoder_forward.1} parent=11 // pred_region
          _
        $region40: #{text_encoder_forward.1} parent=11 // pred_fallthru
          _
        // Predicated region
        $region41: #{text_encoder_forward.1} parent=11 // pred_check
          %p543 = pneg %p250
        $region42: #{text_encoder_forward.1} parent=11 // pred_check_branch
          %545 = sbr.rel (%p543) target = $region44
        $region43: #{text_encoder_forward.1} parent=11 // pred_region
          _
        $region44: #{text_encoder_forward.1} parent=11 // pred_fallthru
          _
        // Predicated region
        $region45: #{text_encoder_forward.1} parent=11 // pred_check
          %p546 = pneg %p271
        $region46: #{text_encoder_forward.1} parent=11 // pred_check_branch
          %548 = sbr.rel (%p546) target = $region48
        $region47: #{text_encoder_forward.1} parent=11 // pred_region
          _
        $region48: #{text_encoder_forward.1} parent=11 // pred_fallthru
          _
        // Predicated region
        $region49: #{text_encoder_forward.1} parent=11 // pred_check
          %p549 = pneg %p292
        $region50: #{text_encoder_forward.1} parent=11 // pred_check_branch
          %551 = sbr.rel (%p549) target = $region52
        $region51: #{text_encoder_forward.1} parent=11 // pred_region
          _
        $region52: #{text_encoder_forward.1} parent=11 // pred_fallthru
          _
        // Predicated region
        $region53: #{text_encoder_forward.1} parent=11 // pred_check
          %p552 = pneg %p313
        $region54: #{text_encoder_forward.1} parent=11 // pred_check_branch
          %554 = sbr.rel (%p552) target = $region56
        $region55: #{text_encoder_forward.1} parent=11 // pred_region
          _
        $region56: #{text_encoder_forward.1} parent=11 // pred_fallthru
          _
        // Predicated region
        $region57: #{text_encoder_forward.1} parent=11 // pred_check
          %p555 = pneg %p334
        $region58: #{text_encoder_forward.1} parent=11 // pred_check_branch
          %557 = sbr.rel (%p555) target = $region60
        $region59: #{text_encoder_forward.1} parent=11 // pred_region
          _
        $region60: #{text_encoder_forward.1} parent=11 // pred_fallthru
          _
        // Predicated region
        $region61: #{text_encoder_forward.1} parent=11 // pred_check
          %p558 = pneg %p355
        $region62: #{text_encoder_forward.1} parent=11 // pred_check_branch
          %560 = sbr.rel (%p558) target = $region64
        $region63: #{text_encoder_forward.1} parent=11 // pred_region
          _
        $region64: #{text_encoder_forward.1} parent=11 // pred_fallthru
          _
        // Predicated region
        $region65: #{text_encoder_forward.1} parent=11 // pred_check
          %p561 = pneg %p376
        $region66: #{text_encoder_forward.1} parent=11 // pred_check_branch
          %563 = sbr.rel (%p561) target = $region68
        $region67: #{text_encoder_forward.1} parent=11 // pred_region
          _
        $region68: #{text_encoder_forward.1} parent=11 // pred_fallthru
          _
        // Predicated region
        $region69: #{text_encoder_forward.1} parent=11 // pred_check
          %p564 = pneg %p397
        $region70: #{text_encoder_forward.1} parent=11 // pred_check_branch
          %566 = sbr.rel (%p564) target = $region72
        $region71: #{text_encoder_forward.1} parent=11 // pred_region
          _
        $region72: #{text_encoder_forward.1} parent=11 // pred_fallthru
          _
        // Predicated region
        $region73: #{text_encoder_forward.1} parent=11 // pred_check
          %p567 = pneg %p418
        $region74: #{text_encoder_forward.1} parent=11 // pred_check_branch
          %569 = sbr.rel (%p567) target = $region76
        $region75: #{text_encoder_forward.1} parent=11 // pred_region
          _
        $region76: #{text_encoder_forward.1} parent=11 // pred_fallthru
          _
        // Predicated region
        $region77: #{text_encoder_forward.1} parent=11 // pred_check
          %p570 = pneg %p439
        $region78: #{text_encoder_forward.1} parent=11 // pred_check_branch
          %572 = sbr.rel (%p570) target = $region80
        $region79: #{text_encoder_forward.1} parent=11 // pred_region
          _
        $region80: #{text_encoder_forward.1} parent=11 // pred_fallthru
          _
        // Predicated region
        $region81: #{text_encoder_forward.1} parent=11 // pred_check
          %p573 = pneg %p460
        $region82: #{text_encoder_forward.1} parent=11 // pred_check_branch
          %575 = sbr.rel (%p573) target = $region84
        $region83: #{text_encoder_forward.1} parent=11 // pred_region
          _
        $region84: #{text_encoder_forward.1} parent=11 // pred_fallthru
          _
        // Predicated region
        $region85: #{text_encoder_forward.1} parent=11 // pred_check
          %p576 = pneg %p481
        $region86: #{text_encoder_forward.1} parent=11 // pred_check_branch
          %578 = sbr.rel (%p576) target = $region88
        $region87: #{text_encoder_forward.1} parent=11 // pred_region
          _
        $region88: #{text_encoder_forward.1} parent=11 // pred_fallthru
          _
      $region12: #{text_encoder_forward.1} parent=5 // pred_fallthru
        _
      %p579 = scmp.lt.s32.totalorder %s30, 2
      // Predicated region
      $region89: #{text_encoder_forward.1} parent=5 // pred_check
        %p580 = pneg %p579
      $region90: #{text_encoder_forward.1} parent=5 // pred_check_branch
        %582 = sbr.rel (%p580) target = $region92
      $region91: #{text_encoder_forward.1} parent=5 // pred_region
        // Predicated region
        $region93: #{text_encoder_forward.1} parent=91 // pred_check
          %p583 = pneg %p50
        $region94: #{text_encoder_forward.1} parent=91 // pred_check_branch
          %585 = sbr.rel (%p583) target = $region96
        $region95: #{text_encoder_forward.1} parent=91 // pred_region
          %p586 = scmp.lt.s32.totalorder %s30, 1
          %s587 = scalar_select %p586, %s30, 1
          %s588 = smul.addr %s587, 8
          %s589 = scalar_lea.vmem %s0, %s588
        $region96: #{text_encoder_forward.1} parent=91 // pred_fallthru
          _
        // Predicated region
        $region97: #{text_encoder_forward.1} parent=91 // pred_check
          %p590 = pneg %p76
        $region98: #{text_encoder_forward.1} parent=91 // pred_check_branch
          %592 = sbr.rel (%p590) target = $region100
        $region99: #{text_encoder_forward.1} parent=91 // pred_region
          %p593 = scmp.lt.s32.totalorder %s30, 1
          %s594 = scalar_select %p593, %s30, 1
          %s595 = smul.addr %s594, 4
          %s596 = smul.addr %s595, 8
          %s597 = scalar_lea.vmem %s1, %s596
        $region100: #{text_encoder_forward.1} parent=91 // pred_fallthru
          _
      $region92: #{text_encoder_forward.1} parent=5 // pred_fallthru
        _
      %p598 = scmp.le.s32.totalorder 1, %s30
      %p599 = scmp.lt.s32.totalorder %s30, 3
      %p600 = pnand %p598, %p599
      %p601 = pneg %p600
      // Predicated region
      $region101: #{text_encoder_forward.1} parent=5 // pred_check
        _
      $region102: #{text_encoder_forward.1} parent=5 // pred_check_branch
        %603 = sbr.rel (%p600) target = $region104
      $region103: #{text_encoder_forward.1} parent=5 // pred_region
        %s604 = ssub.s32 %s30, 1
        %p605 = scmp.lt.s32.totalorder %s35, 1
        %s606 = scalar_select %p605, %s35, 1
        %s607 = smul.addr %s606, 8
        %s608 = scalar_lea.vmem %s0, %s607
        %p609 = pneg %p56
        %p610 = pneg %p53
        %p611 = scmp.lt.s32.totalorder %s35, 1
        %s612 = scalar_select %p611, %s35, 1
        %s613 = smul.addr %s612, 4
        %s614 = smul.addr %s613, 8
        %s615 = scalar_lea.vmem %s1, %s614
        %p616 = pneg %p82
        %p617 = pneg %p79
        %p618 = pneg %p103
        %p619 = pneg %p100
        %p620 = pneg %p124
        %p621 = pneg %p121
        %p622 = pneg %p145
        %p623 = pneg %p142
        %p624 = pneg %p166
        %p625 = pneg %p163
        %p626 = pneg %p187
        %p627 = pneg %p184
        %p628 = pneg %p208
        %p629 = pneg %p205
        %p630 = pneg %p229
        %p631 = pneg %p226
        %p632 = pneg %p250
        %p633 = pneg %p247
        %p634 = pneg %p271
        %p635 = pneg %p268
        %p636 = pneg %p292
        %p637 = pneg %p289
        %p638 = pneg %p313
        %p639 = pneg %p310
        %p640 = pneg %p334
        %p641 = pneg %p331
        %p642 = pneg %p355
        %p643 = pneg %p352
        %p644 = pneg %p376
        %p645 = pneg %p373
        %p646 = pneg %p397
        %p647 = pneg %p394
        %p648 = pneg %p418
        %p649 = pneg %p415
        %p650 = pneg %p439
        %p651 = pneg %p436
        %p652 = pneg %p460
        %p653 = pneg %p457
        %p654 = pneg %p481
        %p655 = pneg %p478
        %p656 = pneg %p507
        %p657 = pneg %p504
        %s658 = sand.u32 %s494, 1
        %s659 = scalar_lea.sflag [#allocation3], %s658
        %s660 = sand.u32 %s494, 1
        %s661 = scalar_lea.vmem [#allocation2], %s660
        %p662 = scmp.lt.s32.totalorder %s35, 1
        %s663 = scalar_select %p662, %s35, 1
        %s664 = smul.addr %s663, 8
        %s665 = scalar_lea.vmem %s0, %s664
        %p666 = scmp.lt.s32.totalorder %s35, 1
        %s667 = scalar_select %p666, %s35, 1
        %s668 = smul.addr %s667, 4
        %s669 = smul.addr %s668, 8
        %s670 = scalar_lea.vmem %s1, %s669
        %v672 = vlaneseq
        %v673 = vand.u32 %v672, 127
        %vm674 = vcmp.lt.s32.totalorder %v673, 32
        %v675 = vsel %vm674, 1, 0
        %v676 = vcvt.s32.f32 %v675
        %vm677 = vcmp.ge.s32.totalorder %v673, 0
        %vm678 = vcmp.lt.s32.totalorder %v673, 8
        %vm679 = vmand %vm677, %vm678
        %v680 = vsel %vm679, 1, 0
        %v681 = vcvt.s32.f32 %v680
        %vm682 = vcmp.ge.s32.totalorder %v673, 8
        %vm683 = vcmp.lt.s32.totalorder %v673, 16
        %vm684 = vmand %vm682, %vm683
        %v685 = vsel %vm684, 1, 0
        %v686 = vcvt.s32.f32 %v685
        %vm687 = vcmp.ge.s32.totalorder %v673, 16
        %vm688 = vcmp.lt.s32.totalorder %v673, 24
        %vm689 = vmand %vm687, %vm688
        %v690 = vsel %vm689, 1, 0
        %v691 = vcvt.s32.f32 %v690
        %vm692 = vcmp.ge.s32.totalorder %v673, 24
        %vm693 = vmand %vm692, %vm674
        %v694 = vsel %vm693, 1, 0
        %v695 = vcvt.s32.f32 %v694
        %v696 = vld [vmem:[%s665] sm:$0xff]
        %697 = vset.pattern.permute.xlu0 0
        %698 = vperm.xlu0 %697, %v696
        %v699 = vpop.permute.xlu0 %698
        %vm700 = vcmp.eq.s32.totalorder %v673, %v699
        %v701 = vsel %vm700, 1, 0
        %v702 = vcvt.s32.f32 %v701
        %v703 = vld [vmem:[%s2] sm:$0xff]
        %v704 = vld [vmem:[%s2 + $0x8] sm:$0xff]
        %v705 = vld [vmem:[%s2 + $0x10] sm:$0xff]
        %v706 = vld [vmem:[%s2 + $0x18] sm:$0xff]
        %v707 = vld [vmem:[%s2 + $0x20] sm:$0xff]
        %v708 = vld [vmem:[%s2 + $0x28] sm:$0xff]
        %v709 = vld [vmem:[%s2 + $0x30] sm:$0xff]
        %v710 = vld [vmem:[%s2 + $0x38] sm:$0xff]
        %v711 = vld [vmem:[%s3] sm:$0xff]
        %vm712 = vcmask 523264
        %v714 = vsel %vm712, %v702, 0
        %716 = vmatprep.subr.mxu0 0.0
        %717 = vmatpush1.msra.mxu0 0.0
        %718 = vmatprep.subr.mxu0 0.0
        %719 = vmatpush1.msra.mxu0 0.0
        %720 = vmatprep.subr.mxu0 0.0
        %721 = vmatpush1.msra.mxu0 0.0
        %722 = vmatprep.subr.mxu0 0.0
        %723 = vmatpush1.msra.mxu0 0.0
        %724 = vmatprep.subr.mxu0 0.0
        %725 = vmatpush1.msra.mxu0 0.0
        %726 = vmatprep.subr.mxu0 0.0
        %727 = vmatpush1.msra.mxu0 0.0
        %728 = vmatprep.subr.mxu0 0.0
        %729 = vmatpush1.msra.mxu0 0.0
        %730 = vmatprep.subr.mxu0 0.0
        %731 = vmatpush1.msra.mxu0 0.0
        %732 = vmatprep.subr.mxu0 0.0
        %733 = vmatpush1.msra.mxu0 %v710
        %734 = vmatprep.subr.mxu0 0.0
        %735 = vmatpush1.msra.mxu0 %v709
        %736 = vmatprep.subr.mxu0 0.0
        %737 = vmatpush1.msra.mxu0 %v708
        %738 = vmatprep.subr.mxu0 0.0
        %739 = vmatpush1.msra.mxu0 %v707
        %740 = vmatprep.subr.mxu0 0.0
        %741 = vmatpush1.msra.mxu0 %v706
        %742 = vmatprep.subr.mxu0 0.0
        %743 = vmatpush1.msra.mxu0 %v705
        %744 = vmatprep.subr.mxu0 0.0
        %745 = vmatpush1.msra.mxu0 %v704
        %746 = vmatprep.subr.mxu0 0.0
        %747 = vmatpush1.msra.mxu0 %v703
        %748 = vmatprep.subr.mxu0 0.0
        %749 = vmatpush2.msra.mxu0 0.0
        %750 = vmatprep.subr.mxu0 0.0
        %751 = vmatpush2.msra.mxu0 0.0
        %752 = vmatprep.subr.mxu0 0.0
        %753 = vmatpush2.msra.mxu0 0.0
        %754 = vmatprep.subr.mxu0 0.0
        %755 = vmatpush2.msra.mxu0 0.0
        %756 = vmatprep.subr.mxu0 0.0
        %757 = vmatpush2.msra.mxu0 0.0
        %758 = vmatprep.subr.mxu0 0.0
        %759 = vmatpush2.msra.mxu0 0.0
        %760 = vmatprep.subr.mxu0 0.0
        %761 = vmatpush2.msra.mxu0 0.0
        %762 = vmatprep.subr.mxu0 0.0
        %763 = vmatpush2.msra.mxu0 0.0
        %764 = vmatprep.subr.mxu0 0.0
        %765 = vmatpush2.msra.mxu0 0.0
        %766 = vmatprep.subr.mxu0 0.0
        %767 = vmatpush2.msra.mxu0 0.0
        %768 = vmatprep.subr.mxu0 0.0
        %769 = vmatpush2.msra.mxu0 0.0
        %770 = vmatprep.subr.mxu0 0.0
        %771 = vmatpush2.msra.mxu0 0.0
        %772 = vmatprep.subr.mxu0 0.0
        %773 = vmatpush2.msra.mxu0 0.0
        %774 = vmatprep.subr.mxu0 0.0
        %775 = vmatpush2.msra.mxu0 0.0
        %776 = vmatprep.subr.mxu0 0.0
        %777 = vmatpush2.msra.mxu0 0.0
        %778 = vmatprep.subr.mxu0 0.0
        %779 = vmatpush2.msra.mxu0 0.0
        %780 = vmatprep.mubr.f32.mxu0 0.0
        %781 = vmatmul.mubr.f32.gmra.mxu0 %v714
        %v782 = vpop.f32.mrf.mxu0
        %v783 = vadd.f32 %v711, %v782
        %v784 = vpop.f32.mrf.mxu0
        %785 = vdwg.mxu0
        %v786 = vld [vmem:[%s4] sm:$0x1]
        %v787 = vlaneseq
        %v788 = vshrl.u32 %v787, 7
        %v789 = vsub.s32 0, %v788
        %v790 = vrot.slane %v786, %v789
        %v791 = vadd.f32 %v783, %v790
        %v792 = vld [vmem:[%s5] sm:$0x1]
        %v793 = vld [vmem:[%s6] sm:$0x1]
        %v794 = vmul.f32 %v791, %v676
        %795 = vadd.xlane.f32.xlu0 %v794
        %v796 = vpop.xlane.xlu0 %795
        %v797 = vmul.f32 %v796, 0.03125
        %v798 = vsub.f32 %v791, %v797
        %v799 = vmul.f32 %v798, %v676
        %v800 = vmul.f32 %v799, %v799
        %801 = vadd.xlane.f32.xlu0 %v800
        %v802 = vpop.xlane.xlu0 %801
        %v803 = vmul.f32 %v802, 0.03125
        %v804 = vadd.f32 %v803, 1e-12
        %v805 = vrsqrt.pop %v804
        %v806 = vmul.f32 %v799, %v805
        %v808 = vlaneseq
        %v809 = vshrl.u32 %v808, 7
        %v810 = vsub.s32 0, %v809
        %v811 = vrot.slane %v792, %v810
        %v813 = vmul.f32 %v806, %v811
        %v815 = vlaneseq
        %v816 = vshrl.u32 %v815, 7
        %v817 = vsub.s32 0, %v816
        %v818 = vrot.slane %v793, %v817
        %v820 = vadd.f32 %v813, %v818
        %v821 = vld [vmem:[%s670] sm:$0xff]
        %v822 = vld [vmem:[%s670 + $0x8] sm:$0xff]
        %v823 = vld [vmem:[%s670 + $0x10] sm:$0xff]
        %v824 = vld [vmem:[%s670 + $0x18] sm:$0xff]
        %v825 = vld [vmem:[%s7] sm:$0xff]
        %v826 = vld [vmem:[%s7 + $0x8] sm:$0xf]
        %v827 = vld [vmem:[%s7 + $0xc] sm:$0xff]
        %v828 = vld [vmem:[%s7 + $0x14] sm:$0xf]
        %v829 = vld [vmem:[%s7 + $0x18] sm:$0xff]
        %v830 = vld [vmem:[%s7 + $0x20] sm:$0xf]
        %v831 = vld [vmem:[%s7 + $0x24] sm:$0xff]
        %v832 = vld [vmem:[%s7 + $0x2c] sm:$0xf]
        %v833 = vld [vmem:[%s7 + $0x30] sm:$0xff]
        %v834 = vld [vmem:[%s7 + $0x38] sm:$0xf]
        %v835 = vld [vmem:[%s7 + $0x3c] sm:$0xff]
        %v836 = vld [vmem:[%s7 + $0x44] sm:$0xf]
        %v837 = vld [vmem:[%s7 + $0x48] sm:$0xff]
        %v838 = vld [vmem:[%s7 + $0x50] sm:$0xf]
        %v839 = vld [vmem:[%s7 + $0x54] sm:$0xff]
        %v840 = vld [vmem:[%s7 + $0x5c] sm:$0xf]
        %v841 = vld [vmem:[%s7 + $0x60] sm:$0xff]
        %v842 = vld [vmem:[%s7 + $0x68] sm:$0xf]
        %v843 = vld [vmem:[%s7 + $0x6c] sm:$0xff]
        %v844 = vld [vmem:[%s7 + $0x74] sm:$0xf]
        %v845 = vld [vmem:[%s7 + $0x78] sm:$0xff]
        %v846 = vld [vmem:[%s7 + $0x80] sm:$0xf]
        %v847 = vld [vmem:[%s7 + $0x84] sm:$0xff]
        %v848 = vld [vmem:[%s7 + $0x8c] sm:$0xf]
        %v849 = vld [vmem:[%s7 + $0x90] sm:$0xff]
        %v850 = vld [vmem:[%s7 + $0x98] sm:$0xf]
        %v851 = vld [vmem:[%s7 + $0x9c] sm:$0xff]
        %v852 = vld [vmem:[%s7 + $0xa4] sm:$0xf]
        %v853 = vld [vmem:[%s7 + $0xa8] sm:$0xff]
        %v854 = vld [vmem:[%s7 + $0xb0] sm:$0xf]
        %v855 = vld [vmem:[%s7 + $0xb4] sm:$0xff]
        %v856 = vld [vmem:[%s7 + $0xbc] sm:$0xf]
        %v857 = vpack.c.bf16 %v820, %v820
        %v858 = vld [vmem:[%s8] sm:$0x7]
        %v860 = vlaneseq
        %v861 = vshrl.u32 %v860, 7
        %v862 = vsub.s32 0, %v861
        %v863 = vrot.slane %v858, %v862
        %v864 = vlaneseq
        %v865 = vshrl.u32 %v864, 7
        %v866 = vsub.s32 1, %v865
        %v867 = vrot.slane %v858, %v866
        %v868 = vlaneseq
        %v869 = vshrl.u32 %v868, 7
        %v870 = vsub.s32 2, %v869
        %v871 = vrot.slane %v858, %v870
        %v907 = vunpack.c.l.b16 %v825
        %v908 = vunpack.c.h.b16 %v825
        %v909 = vunpack.c.l.b16 %v826
        %v910 = vunpack.c.l.b16 %v827
        %v911 = vunpack.c.h.b16 %v827
        %v912 = vunpack.c.l.b16 %v828
        %v913 = vunpack.c.l.b16 %v829
        %v914 = vunpack.c.h.b16 %v829
        %v915 = vunpack.c.l.b16 %v830
        %v916 = vunpack.c.l.b16 %v831
        %v917 = vunpack.c.h.b16 %v831
        %v918 = vunpack.c.l.b16 %v832
        %v919 = vunpack.c.l.b16 %v833
        %v920 = vunpack.c.h.b16 %v833
        %v921 = vunpack.c.l.b16 %v834
        %v922 = vunpack.c.l.b16 %v835
        %v923 = vunpack.c.h.b16 %v835
        %v924 = vunpack.c.l.b16 %v836
        %v925 = vunpack.c.l.b16 %v837
        %v926 = vunpack.c.h.b16 %v837
        %v927 = vunpack.c.l.b16 %v838
        %v928 = vunpack.c.l.b16 %v839
        %v929 = vunpack.c.h.b16 %v839
        %v930 = vunpack.c.l.b16 %v840
        %v931 = vunpack.c.l.b16 %v841
        %v932 = vunpack.c.h.b16 %v841
        %v933 = vunpack.c.l.b16 %v842
        %v934 = vunpack.c.l.b16 %v843
        %v935 = vunpack.c.h.b16 %v843
        %v936 = vunpack.c.l.b16 %v844
        %v937 = vunpack.c.l.b16 %v845
        %v938 = vunpack.c.h.b16 %v845
        %v939 = vunpack.c.l.b16 %v846
        %v940 = vunpack.c.l.b16 %v847
        %v941 = vunpack.c.h.b16 %v847
        %v942 = vunpack.c.l.b16 %v848
        %v943 = vunpack.c.l.b16 %v849
        %v944 = vunpack.c.h.b16 %v849
        %v945 = vunpack.c.l.b16 %v850
        %v946 = vunpack.c.l.b16 %v851
        %v947 = vunpack.c.h.b16 %v851
        %v948 = vunpack.c.l.b16 %v852
        %v949 = vunpack.c.l.b16 %v853
        %v950 = vunpack.c.h.b16 %v853
        %v951 = vunpack.c.l.b16 %v854
        %v952 = vunpack.c.l.b16 %v855
        %v953 = vunpack.c.h.b16 %v855
        %v954 = vunpack.c.l.b16 %v856
        %v955 = vpack.c.b16 %v910, %v907
        %v956 = vpack.c.b16 %v911, %v908
        %v957 = vpack.c.b16 %v912, %v909
        %v958 = vpack.c.b16 %v916, %v913
        %v959 = vpack.c.b16 %v917, %v914
        %v960 = vpack.c.b16 %v918, %v915
        %v961 = vpack.c.b16 %v922, %v919
        %v962 = vpack.c.b16 %v923, %v920
        %v963 = vpack.c.b16 %v924, %v921
        %v964 = vpack.c.b16 %v928, %v925
        %v965 = vpack.c.b16 %v929, %v926
        %v966 = vpack.c.b16 %v930, %v927
        %v967 = vpack.c.b16 %v934, %v931
        %v968 = vpack.c.b16 %v935, %v932
        %v969 = vpack.c.b16 %v936, %v933
        %v970 = vpack.c.b16 %v940, %v937
        %v971 = vpack.c.b16 %v941, %v938
        %v972 = vpack.c.b16 %v942, %v939
        %v973 = vpack.c.b16 %v946, %v943
        %v974 = vpack.c.b16 %v947, %v944
        %v975 = vpack.c.b16 %v948, %v945
        %v976 = vpack.c.b16 %v952, %v949
        %v977 = vpack.c.b16 %v953, %v950
        %v978 = vpack.c.b16 %v954, %v951
        %1003 = vmatprep.subr.bf16.mxu0 %v977
        %1004 = vmatpush1.bf16.msra.mxu0 %v976
        %1005 = vmatprep.subr.bf16.mxu0 %v974
        %1006 = vmatpush1.bf16.msra.mxu0 %v973
        %1007 = vmatprep.subr.bf16.mxu0 %v971
        %1008 = vmatpush1.bf16.msra.mxu0 %v970
        %1009 = vmatprep.subr.bf16.mxu0 %v968
        %1010 = vmatpush1.bf16.msra.mxu0 %v967
        %1011 = vmatprep.subr.bf16.mxu0 %v965
        %1012 = vmatpush1.bf16.msra.mxu0 %v964
        %1013 = vmatprep.subr.bf16.mxu0 %v962
        %1014 = vmatpush1.bf16.msra.mxu0 %v961
        %1015 = vmatprep.subr.bf16.mxu0 %v959
        %1016 = vmatpush1.bf16.msra.mxu0 %v958
        %1017 = vmatprep.subr.bf16.mxu0 %v956
        %1018 = vmatpush1.bf16.msra.mxu0 %v955
        %1019 = vmatprep.subr.bf16.mxu0 0
        %1020 = vmatpush2.bf16.msra.mxu0 0
        %1021 = vmatprep.subr.bf16.mxu0 0
        %1022 = vmatpush2.bf16.msra.mxu0 0
        %1023 = vmatprep.subr.bf16.mxu0 0
        %1024 = vmatpush2.bf16.msra.mxu0 0
        %1025 = vmatprep.subr.bf16.mxu0 0
        %1026 = vmatpush2.bf16.msra.mxu0 0
        %1027 = vmatprep.subr.bf16.mxu0 0
        %1028 = vmatpush2.bf16.msra.mxu0 0
        %1029 = vmatprep.subr.bf16.mxu0 0
        %1030 = vmatpush2.bf16.msra.mxu0 0
        %1031 = vmatprep.subr.bf16.mxu0 0
        %1032 = vmatpush2.bf16.msra.mxu0 0
        %1033 = vmatprep.subr.bf16.mxu0 0
        %1034 = vmatpush2.bf16.msra.mxu0 0
        %1035 = vmatprep.mubr.bf16.mxu0 0
        %1036 = vmatmul.mubr.bf16.gmra.mxu0 %v857
        %v1037 = vpop.f32.mrf.mxu0
        %v1038 = vadd.f32 %v863, %v1037
        %v1039 = vpop.f32.mrf.mxu0
        %v1040 = vadd.f32 %v867, %v1039
        %v1041 = vpop.f32.mrf.mxu0
        %v1042 = vpop.f32.mrf.mxu0
        %1043 = vdwg.mxu0
        %1044 = vmatprep.subr.bf16.mxu0 0
        %1045 = vmatpush1.bf16.msra.mxu0 %v978
        %1046 = vmatprep.subr.bf16.mxu0 0
        %1047 = vmatpush1.bf16.msra.mxu0 %v975
        %1048 = vmatprep.subr.bf16.mxu0 0
        %1049 = vmatpush1.bf16.msra.mxu0 %v972
        %1050 = vmatprep.subr.bf16.mxu0 0
        %1051 = vmatpush1.bf16.msra.mxu0 %v969
        %1052 = vmatprep.subr.bf16.mxu0 0
        %1053 = vmatpush1.bf16.msra.mxu0 %v966
        %1054 = vmatprep.subr.bf16.mxu0 0
        %1055 = vmatpush1.bf16.msra.mxu0 %v963
        %1056 = vmatprep.subr.bf16.mxu0 0
        %1057 = vmatpush1.bf16.msra.mxu0 %v960
        %1058 = vmatprep.subr.bf16.mxu0 0
        %1059 = vmatpush1.bf16.msra.mxu0 %v957
        %1060 = vmatprep.subr.bf16.mxu0 0
        %1061 = vmatpush2.bf16.msra.mxu0 0
        %1062 = vmatprep.subr.bf16.mxu0 0
        %1063 = vmatpush2.bf16.msra.mxu0 0
        %1064 = vmatprep.subr.bf16.mxu0 0
        %1065 = vmatpush2.bf16.msra.mxu0 0
        %1066 = vmatprep.subr.bf16.mxu0 0
        %1067 = vmatpush2.bf16.msra.mxu0 0
        %1068 = vmatprep.subr.bf16.mxu0 0
        %1069 = vmatpush2.bf16.msra.mxu0 0
        %1070 = vmatprep.subr.bf16.mxu0 0
        %1071 = vmatpush2.bf16.msra.mxu0 0
        %1072 = vmatprep.subr.bf16.mxu0 0
        %1073 = vmatpush2.bf16.msra.mxu0 0
        %1074 = vmatprep.subr.bf16.mxu0 0
        %1075 = vmatpush2.bf16.msra.mxu0 0
        %1076 = vmatprep.mubr.bf16.mxu0 0
        %1077 = vmatmul.mubr.bf16.gmra.mxu0 %v857
        %v1078 = vpop.f32.mrf.mxu0
        %v1079 = vadd.f32 %v871, %v1078
        %v1080 = vpop.f32.mrf.mxu0
        %v1081 = vpop.f32.mrf.mxu0
        %v1082 = vpop.f32.mrf.mxu0
        %1083 = vdwg.mxu0
        %v1084 = vmul.f32 %v1038, %v681
        %v1085 = vmul.f32 %v1038, %v686
        %v1086 = vmul.f32 %v1038, %v691
        %v1087 = vmul.f32 %v1038, %v695
        %v1088 = vpack.c.bf16 %v1085, %v1084
        %v1089 = vpack.c.bf16 %v1087, %v1086
        %v1090 = vpack.c.bf16 %v1040, %v1040
        %1091 = vmatprep.subr.bf16.mxu0 0
        %1092 = vmatpush1.bf16.xpose.msra.mxu0 0
        %1093 = vmatprep.subr.bf16.mxu0 0
        %1094 = vmatpush1.bf16.xpose.msra.mxu0 0
        %1095 = vmatprep.subr.bf16.mxu0 0
        %1096 = vmatpush1.bf16.xpose.msra.mxu0 0
        %1097 = vmatprep.subr.bf16.mxu0 0
        %1098 = vmatpush1.bf16.xpose.msra.mxu0 0
        %1099 = vmatprep.subr.bf16.mxu0 0
        %1100 = vmatpush1.bf16.xpose.msra.mxu0 0
        %1101 = vmatprep.subr.bf16.mxu0 0
        %1102 = vmatpush1.bf16.xpose.msra.mxu0 0
        %1103 = vmatprep.subr.bf16.mxu0 0
        %1104 = vmatpush1.bf16.xpose.msra.mxu0 0
        %1105 = vmatprep.subr.bf16.mxu0 0
        %1106 = vmatpush1.bf16.xpose.msra.mxu0 %v1090
        %1107 = vmatprep.subr.bf16.mxu0 0
        %1108 = vmatpush2.bf16.xpose.msra.mxu0 0
        %1109 = vmatprep.subr.bf16.mxu0 0
        %1110 = vmatpush2.bf16.xpose.msra.mxu0 0
        %1111 = vmatprep.subr.bf16.mxu0 0
        %1112 = vmatpush2.bf16.xpose.msra.mxu0 0
        %1113 = vmatprep.subr.bf16.mxu0 0
        %1114 = vmatpush2.bf16.xpose.msra.mxu0 0
        %1115 = vmatprep.subr.bf16.mxu0 0
        %1116 = vmatpush2.bf16.xpose.msra.mxu0 0
        %1117 = vmatprep.subr.bf16.mxu0 0
        %1118 = vmatpush2.bf16.xpose.msra.mxu0 0
        %1119 = vmatprep.subr.bf16.mxu0 0
        %1120 = vmatpush2.bf16.xpose.msra.mxu0 0
        %1121 = vmatprep.subr.bf16.mxu0 0
        %1122 = vmatpush2.bf16.xpose.msra.mxu0 0
        %1123 = vmatprep.mubr.bf16.mxu0 0
        %1124 = vmatmul.mubr.bf16.gmra.mxu0 %v1088
        %v1125 = vpop.f32.mrf.mxu0
        %v1126 = vadd.f32 %v821, %v1125
        %v1127 = vpop.f32.mrf.mxu0
        %v1128 = vpop.f32.mrf.mxu0
        %v1129 = vadd.f32 %v822, %v1128
        %v1130 = vpop.f32.mrf.mxu0
        %1131 = vmatprep.mubr.bf16.mxu0 0
        %1132 = vmatmul.mubr.bf16.gmra.mxu0 %v1089
        %v1133 = vpop.f32.mrf.mxu0
        %v1134 = vadd.f32 %v823, %v1133
        %v1135 = vpop.f32.mrf.mxu0
        %v1136 = vpop.f32.mrf.mxu0
        %v1137 = vadd.f32 %v824, %v1136
        %v1138 = vpop.f32.mrf.mxu0
        %1139 = vdwg.mxu0
        %vm1140 = vcmask 64512
        %v1141 = vsel %vm1140, %v1126, -inf
        %1142 = vmax.xlane.f32.xlu0 %v1141
        %v1143 = vpop.xlane.xlu0 %1142
        %v1144 = vsel %vm1140, %v1129, -inf
        %1145 = vmax.xlane.f32.xlu0 %v1144
        %v1146 = vpop.xlane.xlu0 %1145
        %v1147 = vsel %vm1140, %v1134, -inf
        %1148 = vmax.xlane.f32.xlu0 %v1147
        %v1149 = vpop.xlane.xlu0 %1148
        %v1150 = vsel %vm1140, %v1137, -inf
        %1151 = vmax.xlane.f32.xlu0 %v1150
        %v1152 = vpop.xlane.xlu0 %1151
        %v1153 = vsub.f32 %v1126, %v1143
        %v1154 = vsub.f32 %v1129, %v1146
        %v1155 = vsub.f32 %v1134, %v1149
        %v1156 = vsub.f32 %v1137, %v1152
        %v1157 = vmul.f32 %v1153, 1.442695
        %v1158 = vpow.pop %v1157
        %v1159 = vmul.f32 %v1154, 1.442695
        %v1160 = vpow.pop %v1159
        %v1161 = vmul.f32 %v1155, 1.442695
        %v1162 = vpow.pop %v1161
        %v1163 = vmul.f32 %v1156, 1.442695
        %v1164 = vpow.pop %v1163
        %v1165 = vsel %vm1140, %v1158, 0.0
        %1166 = vadd.xlane.f32.xlu0 %v1165
        %v1167 = vpop.xlane.xlu0 %1166
        %v1168 = vsel %vm1140, %v1160, 0.0
        %1169 = vadd.xlane.f32.xlu0 %v1168
        %v1170 = vpop.xlane.xlu0 %1169
        %v1171 = vsel %vm1140, %v1162, 0.0
        %1172 = vadd.xlane.f32.xlu0 %v1171
        %v1173 = vpop.xlane.xlu0 %1172
        %v1174 = vsel %vm1140, %v1164, 0.0
        %1175 = vadd.xlane.f32.xlu0 %v1174
        %v1176 = vpop.xlane.xlu0 %1175
        %v1177 = vrcp.pop %v1167
        %v1178 = vrcp.pop %v1170
        %v1179 = vrcp.pop %v1173
        %v1180 = vrcp.pop %v1176
        %v1181 = vmul.f32 %v1158, %v1177
        %v1182 = vmul.f32 %v1160, %v1178
        %v1183 = vmul.f32 %v1162, %v1179
        %v1184 = vmul.f32 %v1164, %v1180
        %v1185 = vpack.c.bf16 %v1182, %v1181
        %v1186 = vpack.c.bf16 %v1184, %v1183
        %v1187 = vpack.c.bf16 %v1079, %v1079
        %v1189 = vsel %vm1140, %v1185, 0
        %v1192 = vsel %vm1140, %v1186, 0
        %vm1194 = vcmask 1043456
        %v1196 = vsel %vm1194, %v1187, 0
        %1198 = vmatprep.subr.bf16.mxu0 0
        %1199 = vmatpush1.bf16.msra.mxu0 0
        %1200 = vmatprep.subr.bf16.mxu0 0
        %1201 = vmatpush1.bf16.msra.mxu0 0
        %1202 = vmatprep.subr.bf16.mxu0 0
        %1203 = vmatpush1.bf16.msra.mxu0 0
        %1204 = vmatprep.subr.bf16.mxu0 0
        %1205 = vmatpush1.bf16.msra.mxu0 0
        %1206 = vmatprep.subr.bf16.mxu0 0
        %1207 = vmatpush1.bf16.msra.mxu0 0
        %1208 = vmatprep.subr.bf16.mxu0 0
        %1209 = vmatpush1.bf16.msra.mxu0 0
        %1210 = vmatprep.subr.bf16.mxu0 0
        %1211 = vmatpush1.bf16.msra.mxu0 0
        %1212 = vmatprep.subr.bf16.mxu0 0
        %1213 = vmatpush1.bf16.msra.mxu0 %v1196
        %1214 = vmatprep.subr.bf16.mxu0 0
        %1215 = vmatpush2.bf16.msra.mxu0 0
        %1216 = vmatprep.subr.bf16.mxu0 0
        %1217 = vmatpush2.bf16.msra.mxu0 0
        %1218 = vmatprep.subr.bf16.mxu0 0
        %1219 = vmatpush2.bf16.msra.mxu0 0
        %1220 = vmatprep.subr.bf16.mxu0 0
        %1221 = vmatpush2.bf16.msra.mxu0 0
        %1222 = vmatprep.subr.bf16.mxu0 0
        %1223 = vmatpush2.bf16.msra.mxu0 0
        %1224 = vmatprep.subr.bf16.mxu0 0
        %1225 = vmatpush2.bf16.msra.mxu0 0
        %1226 = vmatprep.subr.bf16.mxu0 0
        %1227 = vmatpush2.bf16.msra.mxu0 0
        %1228 = vmatprep.subr.bf16.mxu0 0
        %1229 = vmatpush2.bf16.msra.mxu0 0
        %1230 = vmatprep.mubr.bf16.mxu0 0
        %1231 = vmatmul.mubr.bf16.gmra.mxu0 %v1189
        %v1232 = vpop.f32.mrf.mxu0
        %v1233 = vadd.f32 0.0, %v1232
        %v1234 = vpop.f32.mrf.mxu0
        %v1235 = vpop.f32.mrf.mxu0
        %v1236 = vadd.f32 0.0, %v1235
        %v1237 = vpop.f32.mrf.mxu0
        %1238 = vmatprep.mubr.bf16.mxu0 0
        %1239 = vmatmul.mubr.bf16.gmra.mxu0 %v1192
        %v1240 = vpop.f32.mrf.mxu0
        %v1241 = vadd.f32 0.0, %v1240
        %v1242 = vpop.f32.mrf.mxu0
        %v1243 = vpop.f32.mrf.mxu0
        %v1244 = vadd.f32 0.0, %v1243
        %v1245 = vpop.f32.mrf.mxu0
        %1246 = vdwg.mxu0
        %v1247 = vmul.f32 %v1233, %v681
        %v1248 = vmul.f32 %v1236, %v686
        %v1249 = vadd.f32 %v1247, %v1248
        %v1250 = vmul.f32 %v1241, %v691
        %v1251 = vadd.f32 %v1249, %v1250
        %v1252 = vmul.f32 %v1244, %v695
        %v1253 = vadd.f32 %v1251, %v1252
        %v1254 = vld [vmem:[%s9] sm:$0xf]
        %v1255 = vld [vmem:[%s9 + $0x4] sm:$0xf]
        %v1256 = vld [vmem:[%s9 + $0x8] sm:$0xf]
        %v1257 = vld [vmem:[%s9 + $0xc] sm:$0xf]
        %v1258 = vld [vmem:[%s9 + $0x10] sm:$0xf]
        %v1259 = vld [vmem:[%s9 + $0x14] sm:$0xf]
        %v1260 = vld [vmem:[%s9 + $0x18] sm:$0xf]
        %v1261 = vld [vmem:[%s9 + $0x1c] sm:$0xf]
        %v1262 = vld [vmem:[%s9 + $0x20] sm:$0xf]
        %v1263 = vld [vmem:[%s9 + $0x24] sm:$0xf]
        %v1264 = vld [vmem:[%s9 + $0x28] sm:$0xf]
        %v1265 = vld [vmem:[%s9 + $0x2c] sm:$0xf]
        %v1266 = vld [vmem:[%s9 + $0x30] sm:$0xf]
        %v1267 = vld [vmem:[%s9 + $0x34] sm:$0xf]
        %v1268 = vld [vmem:[%s9 + $0x38] sm:$0xf]
        %v1269 = vld [vmem:[%s9 + $0x3c] sm:$0xf]
        %v1270 = vpack.c.bf16 %v1253, %v1253
        %v1271 = vld [vmem:[%s10] sm:$0x1]
        %v1273 = vlaneseq
        %v1274 = vshrl.u32 %v1273, 7
        %v1275 = vsub.s32 0, %v1274
        %v1276 = vrot.slane %v1271, %v1275
        %v1294 = vunpack.c.l.b16 %v1254
        %v1295 = vunpack.c.l.b16 %v1255
        %v1296 = vunpack.c.l.b16 %v1256
        %v1297 = vunpack.c.l.b16 %v1257
        %v1298 = vunpack.c.l.b16 %v1258
        %v1299 = vunpack.c.l.b16 %v1259
        %v1300 = vunpack.c.l.b16 %v1260
        %v1301 = vunpack.c.l.b16 %v1261
        %v1302 = vunpack.c.l.b16 %v1262
        %v1303 = vunpack.c.l.b16 %v1263
        %v1304 = vunpack.c.l.b16 %v1264
        %v1305 = vunpack.c.l.b16 %v1265
        %v1306 = vunpack.c.l.b16 %v1266
        %v1307 = vunpack.c.l.b16 %v1267
        %v1308 = vunpack.c.l.b16 %v1268
        %v1309 = vunpack.c.l.b16 %v1269
        %v1310 = vpack.c.b16 %v1295, %v1294
        %v1311 = vpack.c.b16 %v1297, %v1296
        %v1312 = vpack.c.b16 %v1299, %v1298
        %v1313 = vpack.c.b16 %v1301, %v1300
        %v1314 = vpack.c.b16 %v1303, %v1302
        %v1315 = vpack.c.b16 %v1305, %v1304
        %v1316 = vpack.c.b16 %v1307, %v1306
        %v1317 = vpack.c.b16 %v1309, %v1308
        %1326 = vmatprep.subr.bf16.mxu0 0
        %1327 = vmatpush1.bf16.msra.mxu0 %v1317
        %1328 = vmatprep.subr.bf16.mxu0 0
        %1329 = vmatpush1.bf16.msra.mxu0 %v1316
        %1330 = vmatprep.subr.bf16.mxu0 0
        %1331 = vmatpush1.bf16.msra.mxu0 %v1315
        %1332 = vmatprep.subr.bf16.mxu0 0
        %1333 = vmatpush1.bf16.msra.mxu0 %v1314
        %1334 = vmatprep.subr.bf16.mxu0 0
        %1335 = vmatpush1.bf16.msra.mxu0 %v1313
        %1336 = vmatprep.subr.bf16.mxu0 0
        %1337 = vmatpush1.bf16.msra.mxu0 %v1312
        %1338 = vmatprep.subr.bf16.mxu0 0
        %1339 = vmatpush1.bf16.msra.mxu0 %v1311
        %1340 = vmatprep.subr.bf16.mxu0 0
        %1341 = vmatpush1.bf16.msra.mxu0 %v1310
        %1342 = vmatprep.subr.bf16.mxu0 0
        %1343 = vmatpush2.bf16.msra.mxu0 0
        %1344 = vmatprep.subr.bf16.mxu0 0
        %1345 = vmatpush2.bf16.msra.mxu0 0
        %1346 = vmatprep.subr.bf16.mxu0 0
        %1347 = vmatpush2.bf16.msra.mxu0 0
        %1348 = vmatprep.subr.bf16.mxu0 0
        %1349 = vmatpush2.bf16.msra.mxu0 0
        %1350 = vmatprep.subr.bf16.mxu0 0
        %1351 = vmatpush2.bf16.msra.mxu0 0
        %1352 = vmatprep.subr.bf16.mxu0 0
        %1353 = vmatpush2.bf16.msra.mxu0 0
        %1354 = vmatprep.subr.bf16.mxu0 0
        %1355 = vmatpush2.bf16.msra.mxu0 0
        %1356 = vmatprep.subr.bf16.mxu0 0
        %1357 = vmatpush2.bf16.msra.mxu0 0
        %1358 = vmatprep.mubr.bf16.mxu0 0
        %1359 = vmatmul.mubr.bf16.gmra.mxu0 %v1270
        %v1360 = vpop.f32.mrf.mxu0
        %v1361 = vadd.f32 %v1276, %v1360
        %v1362 = vpop.f32.mrf.mxu0
        %v1363 = vpop.f32.mrf.mxu0
        %v1364 = vpop.f32.mrf.mxu0
        %1365 = vdwg.mxu0
        %v1366 = vadd.f32 %v820, %v1361
        %v1367 = vld [vmem:[%s11] sm:$0x1]
        %v1368 = vld [vmem:[%s12] sm:$0x1]
        %v1369 = vmul.f32 %v1366, %v676
        %1370 = vadd.xlane.f32.xlu0 %v1369
        %v1371 = vpop.xlane.xlu0 %1370
        %v1372 = vmul.f32 %v1371, 0.03125
        %v1373 = vsub.f32 %v1366, %v1372
        %v1374 = vmul.f32 %v1373, %v676
        %v1375 = vmul.f32 %v1374, %v1374
        %1376 = vadd.xlane.f32.xlu0 %v1375
        %v1377 = vpop.xlane.xlu0 %1376
        %v1378 = vmul.f32 %v1377, 0.03125
        %v1379 = vadd.f32 %v1378, 1e-12
        %v1380 = vrsqrt.pop %v1379
        %v1381 = vmul.f32 %v1374, %v1380
        %v1383 = vlaneseq
        %v1384 = vshrl.u32 %v1383, 7
        %v1385 = vsub.s32 0, %v1384
        %v1386 = vrot.slane %v1367, %v1385
        %v1388 = vmul.f32 %v1381, %v1386
        %v1390 = vlaneseq
        %v1391 = vshrl.u32 %v1390, 7
        %v1392 = vsub.s32 0, %v1391
        %v1393 = vrot.slane %v1368, %v1392
        %v1395 = vadd.f32 %v1388, %v1393
        %v1396 = vld [vmem:[%s13] sm:$0xf]
        %v1397 = vld [vmem:[%s13 + $0x4] sm:$0xf]
        %v1398 = vld [vmem:[%s13 + $0x8] sm:$0xf]
        %v1399 = vld [vmem:[%s13 + $0xc] sm:$0xf]
        %v1400 = vld [vmem:[%s13 + $0x10] sm:$0xf]
        %v1401 = vld [vmem:[%s13 + $0x14] sm:$0xf]
        %v1402 = vld [vmem:[%s13 + $0x18] sm:$0xf]
        %v1403 = vld [vmem:[%s13 + $0x1c] sm:$0xf]
        %v1404 = vld [vmem:[%s13 + $0x20] sm:$0xf]
        %v1405 = vld [vmem:[%s13 + $0x24] sm:$0xf]
        %v1406 = vld [vmem:[%s13 + $0x28] sm:$0xf]
        %v1407 = vld [vmem:[%s13 + $0x2c] sm:$0xf]
        %v1408 = vld [vmem:[%s13 + $0x30] sm:$0xf]
        %v1409 = vld [vmem:[%s13 + $0x34] sm:$0xf]
        %v1410 = vld [vmem:[%s13 + $0x38] sm:$0xf]
        %v1411 = vld [vmem:[%s13 + $0x3c] sm:$0xf]
        %v1412 = vpack.c.bf16 %v1395, %v1395
        %v1413 = vld [vmem:[%s14] sm:$0x1]
        %v1415 = vlaneseq
        %v1416 = vshrl.u32 %v1415, 7
        %v1417 = vsub.s32 0, %v1416
        %v1418 = vrot.slane %v1413, %v1417
        %v1436 = vunpack.c.l.b16 %v1396
        %v1437 = vunpack.c.l.b16 %v1397
        %v1438 = vunpack.c.l.b16 %v1398
        %v1439 = vunpack.c.l.b16 %v1399
        %v1440 = vunpack.c.l.b16 %v1400
        %v1441 = vunpack.c.l.b16 %v1401
        %v1442 = vunpack.c.l.b16 %v1402
        %v1443 = vunpack.c.l.b16 %v1403
        %v1444 = vunpack.c.l.b16 %v1404
        %v1445 = vunpack.c.l.b16 %v1405
        %v1446 = vunpack.c.l.b16 %v1406
        %v1447 = vunpack.c.l.b16 %v1407
        %v1448 = vunpack.c.l.b16 %v1408
        %v1449 = vunpack.c.l.b16 %v1409
        %v1450 = vunpack.c.l.b16 %v1410
        %v1451 = vunpack.c.l.b16 %v1411
        %v1452 = vpack.c.b16 %v1437, %v1436
        %v1453 = vpack.c.b16 %v1439, %v1438
        %v1454 = vpack.c.b16 %v1441, %v1440
        %v1455 = vpack.c.b16 %v1443, %v1442
        %v1456 = vpack.c.b16 %v1445, %v1444
        %v1457 = vpack.c.b16 %v1447, %v1446
        %v1458 = vpack.c.b16 %v1449, %v1448
        %v1459 = vpack.c.b16 %v1451, %v1450
        %1468 = vmatprep.subr.bf16.mxu0 0
        %1469 = vmatpush1.bf16.msra.mxu0 %v1459
        %1470 = vmatprep.subr.bf16.mxu0 0
        %1471 = vmatpush1.bf16.msra.mxu0 %v1458
        %1472 = vmatprep.subr.bf16.mxu0 0
        %1473 = vmatpush1.bf16.msra.mxu0 %v1457
        %1474 = vmatprep.subr.bf16.mxu0 0
        %1475 = vmatpush1.bf16.msra.mxu0 %v1456
        %1476 = vmatprep.subr.bf16.mxu0 0
        %1477 = vmatpush1.bf16.msra.mxu0 %v1455
        %1478 = vmatprep.subr.bf16.mxu0 0
        %1479 = vmatpush1.bf16.msra.mxu0 %v1454
        %1480 = vmatprep.subr.bf16.mxu0 0
        %1481 = vmatpush1.bf16.msra.mxu0 %v1453
        %1482 = vmatprep.subr.bf16.mxu0 0
        %1483 = vmatpush1.bf16.msra.mxu0 %v1452
        %1484 = vmatprep.subr.bf16.mxu0 0
        %1485 = vmatpush2.bf16.msra.mxu0 0
        %1486 = vmatprep.subr.bf16.mxu0 0
        %1487 = vmatpush2.bf16.msra.mxu0 0
        %1488 = vmatprep.subr.bf16.mxu0 0
        %1489 = vmatpush2.bf16.msra.mxu0 0
        %1490 = vmatprep.subr.bf16.mxu0 0
        %1491 = vmatpush2.bf16.msra.mxu0 0
        %1492 = vmatprep.subr.bf16.mxu0 0
        %1493 = vmatpush2.bf16.msra.mxu0 0
        %1494 = vmatprep.subr.bf16.mxu0 0
        %1495 = vmatpush2.bf16.msra.mxu0 0
        %1496 = vmatprep.subr.bf16.mxu0 0
        %1497 = vmatpush2.bf16.msra.mxu0 0
        %1498 = vmatprep.subr.bf16.mxu0 0
        %1499 = vmatpush2.bf16.msra.mxu0 0
        %1500 = vmatprep.mubr.bf16.mxu0 0
        %1501 = vmatmul.mubr.bf16.gmra.mxu0 %v1412
        %v1502 = vpop.f32.mrf.mxu0
        %v1503 = vadd.f32 %v1418, %v1502
        %v1504 = vpop.f32.mrf.mxu0
        %v1505 = vpop.f32.mrf.mxu0
        %v1506 = vpop.f32.mrf.mxu0
        %1507 = vdwg.mxu0
        %v1508 = vmul.f32 %v1503, %v1503
        %v1509 = vmul.f32 %v1503, %v1508
        %v1510 = vmul.f32 %v1509, 0.044715
        %v1511 = vadd.f32 %v1503, %v1510
        %v1512 = vmul.f32 %v1511, 0.7978846
        %v1513 = vtanh.pop %v1512
        %v1514 = vadd.f32 %v1513, 1.0
        %v1515 = vmul.f32 %v1514, 0.5
        %v1516 = vmul.f32 %v1503, %v1515
        %v1517 = vld [vmem:[%s15] sm:$0xf]
        %v1518 = vld [vmem:[%s15 + $0x4] sm:$0xf]
        %v1519 = vld [vmem:[%s15 + $0x8] sm:$0xf]
        %v1520 = vld [vmem:[%s15 + $0xc] sm:$0xf]
        %v1521 = vld [vmem:[%s15 + $0x10] sm:$0xf]
        %v1522 = vld [vmem:[%s15 + $0x14] sm:$0xf]
        %v1523 = vld [vmem:[%s15 + $0x18] sm:$0xf]
        %v1524 = vld [vmem:[%s15 + $0x1c] sm:$0xf]
        %v1525 = vld [vmem:[%s15 + $0x20] sm:$0xf]
        %v1526 = vld [vmem:[%s15 + $0x24] sm:$0xf]
        %v1527 = vld [vmem:[%s15 + $0x28] sm:$0xf]
        %v1528 = vld [vmem:[%s15 + $0x2c] sm:$0xf]
        %v1529 = vld [vmem:[%s15 + $0x30] sm:$0xf]
        %v1530 = vld [vmem:[%s15 + $0x34] sm:$0xf]
        %v1531 = vld [vmem:[%s15 + $0x38] sm:$0xf]
        %v1532 = vld [vmem:[%s15 + $0x3c] sm:$0xf]
        %v1533 = vpack.c.bf16 %v1516, %v1516
        %v1534 = vld [vmem:[%s16] sm:$0x1]
        %v1536 = vlaneseq
        %v1537 = vshrl.u32 %v1536, 7
        %v1538 = vsub.s32 0, %v1537
        %v1539 = vrot.slane %v1534, %v1538
        %v1557 = vunpack.c.l.b16 %v1517
        %v1558 = vunpack.c.l.b16 %v1518
        %v1559 = vunpack.c.l.b16 %v1519
        %v1560 = vunpack.c.l.b16 %v1520
        %v1561 = vunpack.c.l.b16 %v1521
        %v1562 = vunpack.c.l.b16 %v1522
        %v1563 = vunpack.c.l.b16 %v1523
        %v1564 = vunpack.c.l.b16 %v1524
        %v1565 = vunpack.c.l.b16 %v1525
        %v1566 = vunpack.c.l.b16 %v1526
        %v1567 = vunpack.c.l.b16 %v1527
        %v1568 = vunpack.c.l.b16 %v1528
        %v1569 = vunpack.c.l.b16 %v1529
        %v1570 = vunpack.c.l.b16 %v1530
        %v1571 = vunpack.c.l.b16 %v1531
        %v1572 = vunpack.c.l.b16 %v1532
        %v1573 = vpack.c.b16 %v1558, %v1557
        %v1574 = vpack.c.b16 %v1560, %v1559
        %v1575 = vpack.c.b16 %v1562, %v1561
        %v1576 = vpack.c.b16 %v1564, %v1563
        %v1577 = vpack.c.b16 %v1566, %v1565
        %v1578 = vpack.c.b16 %v1568, %v1567
        %v1579 = vpack.c.b16 %v1570, %v1569
        %v1580 = vpack.c.b16 %v1572, %v1571
        %1589 = vmatprep.subr.bf16.mxu0 0
        %1590 = vmatpush1.bf16.msra.mxu0 %v1580
        %1591 = vmatprep.subr.bf16.mxu0 0
        %1592 = vmatpush1.bf16.msra.mxu0 %v1579
        %1593 = vmatprep.subr.bf16.mxu0 0
        %1594 = vmatpush1.bf16.msra.mxu0 %v1578
        %1595 = vmatprep.subr.bf16.mxu0 0
        %1596 = vmatpush1.bf16.msra.mxu0 %v1577
        %1597 = vmatprep.subr.bf16.mxu0 0
        %1598 = vmatpush1.bf16.msra.mxu0 %v1576
        %1599 = vmatprep.subr.bf16.mxu0 0
        %1600 = vmatpush1.bf16.msra.mxu0 %v1575
        %1601 = vmatprep.subr.bf16.mxu0 0
        %1602 = vmatpush1.bf16.msra.mxu0 %v1574
        %1603 = vmatprep.subr.bf16.mxu0 0
        %1604 = vmatpush1.bf16.msra.mxu0 %v1573
        %1605 = vmatprep.subr.bf16.mxu0 0
        %1606 = vmatpush2.bf16.msra.mxu0 0
        %1607 = vmatprep.subr.bf16.mxu0 0
        %1608 = vmatpush2.bf16.msra.mxu0 0
        %1609 = vmatprep.subr.bf16.mxu0 0
        %1610 = vmatpush2.bf16.msra.mxu0 0
        %1611 = vmatprep.subr.bf16.mxu0 0
        %1612 = vmatpush2.bf16.msra.mxu0 0
        %1613 = vmatprep.subr.bf16.mxu0 0
        %1614 = vmatpush2.bf16.msra.mxu0 0
        %1615 = vmatprep.subr.bf16.mxu0 0
        %1616 = vmatpush2.bf16.msra.mxu0 0
        %1617 = vmatprep.subr.bf16.mxu0 0
        %1618 = vmatpush2.bf16.msra.mxu0 0
        %1619 = vmatprep.subr.bf16.mxu0 0
        %1620 = vmatpush2.bf16.msra.mxu0 0
        %1621 = vmatprep.mubr.bf16.mxu0 0
        %1622 = vmatmul.mubr.bf16.gmra.mxu0 %v1533
        %v1623 = vpop.f32.mrf.mxu0
        %v1624 = vadd.f32 %v1539, %v1623
        %v1625 = vpop.f32.mrf.mxu0
        %v1626 = vpop.f32.mrf.mxu0
        %v1627 = vpop.f32.mrf.mxu0
        %1628 = vdwg.mxu0
        %v1629 = vadd.f32 %v1395, %v1624
        %v1630 = vld [vmem:[%s17] sm:$0x1]
        %v1631 = vld [vmem:[%s18] sm:$0x1]
        %v1632 = vmul.f32 %v1629, %v676
        %1633 = vadd.xlane.f32.xlu0 %v1632
        %v1634 = vpop.xlane.xlu0 %1633
        %v1635 = vmul.f32 %v1634, 0.03125
        %v1636 = vsub.f32 %v1629, %v1635
        %v1637 = vmul.f32 %v1636, %v676
        %v1638 = vmul.f32 %v1637, %v1637
        %1639 = vadd.xlane.f32.xlu0 %v1638
        %v1640 = vpop.xlane.xlu0 %1639
        %v1641 = vmul.f32 %v1640, 0.03125
        %v1642 = vadd.f32 %v1641, 1e-12
        %v1643 = vrsqrt.pop %v1642
        %v1644 = vmul.f32 %v1637, %v1643
        %v1646 = vlaneseq
        %v1647 = vshrl.u32 %v1646, 7
        %v1648 = vsub.s32 0, %v1647
        %v1649 = vrot.slane %v1630, %v1648
        %v1651 = vmul.f32 %v1644, %v1649
        %v1653 = vlaneseq
        %v1654 = vshrl.u32 %v1653, 7
        %v1655 = vsub.s32 0, %v1654
        %v1656 = vrot.slane %v1631, %v1655
        %v1658 = vadd.f32 %v1651, %v1656
        %s1659 = scalar_lea.vmem %s7, 192
        %v1660 = vld [vmem:[%s1659] sm:$0xff]
        %v1661 = vld [vmem:[%s1659 + $0x8] sm:$0xf]
        %v1662 = vld [vmem:[%s1659 + $0xc] sm:$0xff]
        %v1663 = vld [vmem:[%s1659 + $0x14] sm:$0xf]
        %v1664 = vld [vmem:[%s1659 + $0x18] sm:$0xff]
        %v1665 = vld [vmem:[%s1659 + $0x20] sm:$0xf]
        %v1666 = vld [vmem:[%s1659 + $0x24] sm:$0xff]
        %v1667 = vld [vmem:[%s1659 + $0x2c] sm:$0xf]
        %v1668 = vld [vmem:[%s1659 + $0x30] sm:$0xff]
        %v1669 = vld [vmem:[%s1659 + $0x38] sm:$0xf]
        %v1670 = vld [vmem:[%s1659 + $0x3c] sm:$0xff]
        %v1671 = vld [vmem:[%s1659 + $0x44] sm:$0xf]
        %v1672 = vld [vmem:[%s1659 + $0x48] sm:$0xff]
        %v1673 = vld [vmem:[%s1659 + $0x50] sm:$0xf]
        %v1674 = vld [vmem:[%s1659 + $0x54] sm:$0xff]
        %v1675 = vld [vmem:[%s1659 + $0x5c] sm:$0xf]
        %v1676 = vld [vmem:[%s1659 + $0x60] sm:$0xff]
        %v1677 = vld [vmem:[%s1659 + $0x68] sm:$0xf]
        %v1678 = vld [vmem:[%s1659 + $0x6c] sm:$0xff]
        %v1679 = vld [vmem:[%s1659 + $0x74] sm:$0xf]
        %v1680 = vld [vmem:[%s1659 + $0x78] sm:$0xff]
        %v1681 = vld [vmem:[%s1659 + $0x80] sm:$0xf]
        %v1682 = vld [vmem:[%s1659 + $0x84] sm:$0xff]
        %v1683 = vld [vmem:[%s1659 + $0x8c] sm:$0xf]
        %v1684 = vld [vmem:[%s1659 + $0x90] sm:$0xff]
        %v1685 = vld [vmem:[%s1659 + $0x98] sm:$0xf]
        %v1686 = vld [vmem:[%s1659 + $0x9c] sm:$0xff]
        %v1687 = vld [vmem:[%s1659 + $0xa4] sm:$0xf]
        %v1688 = vld [vmem:[%s1659 + $0xa8] sm:$0xff]
        %v1689 = vld [vmem:[%s1659 + $0xb0] sm:$0xf]
        %v1690 = vld [vmem:[%s1659 + $0xb4] sm:$0xff]
        %v1691 = vld [vmem:[%s1659 + $0xbc] sm:$0xf]
        %v1692 = vpack.c.bf16 %v1658, %v1658
        %s1693 = scalar_lea.vmem %s8, 3
        %v1694 = vld [vmem:[%s1693] sm:$0x7]
        %v1696 = vlaneseq
        %v1697 = vshrl.u32 %v1696, 7
        %v1698 = vsub.s32 0, %v1697
        %v1699 = vrot.slane %v1694, %v1698
        %v1700 = vlaneseq
        %v1701 = vshrl.u32 %v1700, 7
        %v1702 = vsub.s32 1, %v1701
        %v1703 = vrot.slane %v1694, %v1702
        %v1704 = vlaneseq
        %v1705 = vshrl.u32 %v1704, 7
        %v1706 = vsub.s32 2, %v1705
        %v1707 = vrot.slane %v1694, %v1706
        %v1743 = vunpack.c.l.b16 %v1660
        %v1744 = vunpack.c.h.b16 %v1660
        %v1745 = vunpack.c.l.b16 %v1661
        %v1746 = vunpack.c.l.b16 %v1662
        %v1747 = vunpack.c.h.b16 %v1662
        %v1748 = vunpack.c.l.b16 %v1663
        %v1749 = vunpack.c.l.b16 %v1664
        %v1750 = vunpack.c.h.b16 %v1664
        %v1751 = vunpack.c.l.b16 %v1665
        %v1752 = vunpack.c.l.b16 %v1666
        %v1753 = vunpack.c.h.b16 %v1666
        %v1754 = vunpack.c.l.b16 %v1667
        %v1755 = vunpack.c.l.b16 %v1668
        %v1756 = vunpack.c.h.b16 %v1668
        %v1757 = vunpack.c.l.b16 %v1669
        %v1758 = vunpack.c.l.b16 %v1670
        %v1759 = vunpack.c.h.b16 %v1670
        %v1760 = vunpack.c.l.b16 %v1671
        %v1761 = vunpack.c.l.b16 %v1672
        %v1762 = vunpack.c.h.b16 %v1672
        %v1763 = vunpack.c.l.b16 %v1673
        %v1764 = vunpack.c.l.b16 %v1674
        %v1765 = vunpack.c.h.b16 %v1674
        %v1766 = vunpack.c.l.b16 %v1675
        %v1767 = vunpack.c.l.b16 %v1676
        %v1768 = vunpack.c.h.b16 %v1676
        %v1769 = vunpack.c.l.b16 %v1677
        %v1770 = vunpack.c.l.b16 %v1678
        %v1771 = vunpack.c.h.b16 %v1678
        %v1772 = vunpack.c.l.b16 %v1679
        %v1773 = vunpack.c.l.b16 %v1680
        %v1774 = vunpack.c.h.b16 %v1680
        %v1775 = vunpack.c.l.b16 %v1681
        %v1776 = vunpack.c.l.b16 %v1682
        %v1777 = vunpack.c.h.b16 %v1682
        %v1778 = vunpack.c.l.b16 %v1683
        %v1779 = vunpack.c.l.b16 %v1684
        %v1780 = vunpack.c.h.b16 %v1684
        %v1781 = vunpack.c.l.b16 %v1685
        %v1782 = vunpack.c.l.b16 %v1686
        %v1783 = vunpack.c.h.b16 %v1686
        %v1784 = vunpack.c.l.b16 %v1687
        %v1785 = vunpack.c.l.b16 %v1688
        %v1786 = vunpack.c.h.b16 %v1688
        %v1787 = vunpack.c.l.b16 %v1689
        %v1788 = vunpack.c.l.b16 %v1690
        %v1789 = vunpack.c.h.b16 %v1690
        %v1790 = vunpack.c.l.b16 %v1691
        %v1791 = vpack.c.b16 %v1746, %v1743
        %v1792 = vpack.c.b16 %v1747, %v1744
        %v1793 = vpack.c.b16 %v1748, %v1745
        %v1794 = vpack.c.b16 %v1752, %v1749
        %v1795 = vpack.c.b16 %v1753, %v1750
        %v1796 = vpack.c.b16 %v1754, %v1751
        %v1797 = vpack.c.b16 %v1758, %v1755
        %v1798 = vpack.c.b16 %v1759, %v1756
        %v1799 = vpack.c.b16 %v1760, %v1757
        %v1800 = vpack.c.b16 %v1764, %v1761
        %v1801 = vpack.c.b16 %v1765, %v1762
        %v1802 = vpack.c.b16 %v1766, %v1763
        %v1803 = vpack.c.b16 %v1770, %v1767
        %v1804 = vpack.c.b16 %v1771, %v1768
        %v1805 = vpack.c.b16 %v1772, %v1769
        %v1806 = vpack.c.b16 %v1776, %v1773
        %v1807 = vpack.c.b16 %v1777, %v1774
        %v1808 = vpack.c.b16 %v1778, %v1775
        %v1809 = vpack.c.b16 %v1782, %v1779
        %v1810 = vpack.c.b16 %v1783, %v1780
        %v1811 = vpack.c.b16 %v1784, %v1781
        %v1812 = vpack.c.b16 %v1788, %v1785
        %v1813 = vpack.c.b16 %v1789, %v1786
        %v1814 = vpack.c.b16 %v1790, %v1787
        %1839 = vmatprep.subr.bf16.mxu0 %v1813
        %1840 = vmatpush1.bf16.msra.mxu0 %v1812
        %1841 = vmatprep.subr.bf16.mxu0 %v1810
        %1842 = vmatpush1.bf16.msra.mxu0 %v1809
        %1843 = vmatprep.subr.bf16.mxu0 %v1807
        %1844 = vmatpush1.bf16.msra.mxu0 %v1806
        %1845 = vmatprep.subr.bf16.mxu0 %v1804
        %1846 = vmatpush1.bf16.msra.mxu0 %v1803
        %1847 = vmatprep.subr.bf16.mxu0 %v1801
        %1848 = vmatpush1.bf16.msra.mxu0 %v1800
        %1849 = vmatprep.subr.bf16.mxu0 %v1798
        %1850 = vmatpush1.bf16.msra.mxu0 %v1797
        %1851 = vmatprep.subr.bf16.mxu0 %v1795
        %1852 = vmatpush1.bf16.msra.mxu0 %v1794
        %1853 = vmatprep.subr.bf16.mxu0 %v1792
        %1854 = vmatpush1.bf16.msra.mxu0 %v1791
        %1855 = vmatprep.subr.bf16.mxu0 0
        %1856 = vmatpush2.bf16.msra.mxu0 0
        %1857 = vmatprep.subr.bf16.mxu0 0
        %1858 = vmatpush2.bf16.msra.mxu0 0
        %1859 = vmatprep.subr.bf16.mxu0 0
        %1860 = vmatpush2.bf16.msra.mxu0 0
        %1861 = vmatprep.subr.bf16.mxu0 0
        %1862 = vmatpush2.bf16.msra.mxu0 0
        %1863 = vmatprep.subr.bf16.mxu0 0
        %1864 = vmatpush2.bf16.msra.mxu0 0
        %1865 = vmatprep.subr.bf16.mxu0 0
        %1866 = vmatpush2.bf16.msra.mxu0 0
        %1867 = vmatprep.subr.bf16.mxu0 0
        %1868 = vmatpush2.bf16.msra.mxu0 0
        %1869 = vmatprep.subr.bf16.mxu0 0
        %1870 = vmatpush2.bf16.msra.mxu0 0
        %1871 = vmatprep.mubr.bf16.mxu0 0
        %1872 = vmatmul.mubr.bf16.gmra.mxu0 %v1692
        %v1873 = vpop.f32.mrf.mxu0
        %v1874 = vadd.f32 %v1699, %v1873
        %v1875 = vpop.f32.mrf.mxu0
        %v1876 = vadd.f32 %v1703, %v1875
        %v1877 = vpop.f32.mrf.mxu0
        %v1878 = vpop.f32.mrf.mxu0
        %1879 = vdwg.mxu0
        %1880 = vmatprep.subr.bf16.mxu0 0
        %1881 = vmatpush1.bf16.msra.mxu0 %v1814
        %1882 = vmatprep.subr.bf16.mxu0 0
        %1883 = vmatpush1.bf16.msra.mxu0 %v1811
        %1884 = vmatprep.subr.bf16.mxu0 0
        %1885 = vmatpush1.bf16.msra.mxu0 %v1808
        %1886 = vmatprep.subr.bf16.mxu0 0
        %1887 = vmatpush1.bf16.msra.mxu0 %v1805
        %1888 = vmatprep.subr.bf16.mxu0 0
        %1889 = vmatpush1.bf16.msra.mxu0 %v1802
        %1890 = vmatprep.subr.bf16.mxu0 0
        %1891 = vmatpush1.bf16.msra.mxu0 %v1799
        %1892 = vmatprep.subr.bf16.mxu0 0
        %1893 = vmatpush1.bf16.msra.mxu0 %v1796
        %1894 = vmatprep.subr.bf16.mxu0 0
        %1895 = vmatpush1.bf16.msra.mxu0 %v1793
        %1896 = vmatprep.subr.bf16.mxu0 0
        %1897 = vmatpush2.bf16.msra.mxu0 0
        %1898 = vmatprep.subr.bf16.mxu0 0
        %1899 = vmatpush2.bf16.msra.mxu0 0
        %1900 = vmatprep.subr.bf16.mxu0 0
        %1901 = vmatpush2.bf16.msra.mxu0 0
        %1902 = vmatprep.subr.bf16.mxu0 0
        %1903 = vmatpush2.bf16.msra.mxu0 0
        %1904 = vmatprep.subr.bf16.mxu0 0
        %1905 = vmatpush2.bf16.msra.mxu0 0
        %1906 = vmatprep.subr.bf16.mxu0 0
        %1907 = vmatpush2.bf16.msra.mxu0 0
        %1908 = vmatprep.subr.bf16.mxu0 0
        %1909 = vmatpush2.bf16.msra.mxu0 0
        %1910 = vmatprep.subr.bf16.mxu0 0
        %1911 = vmatpush2.bf16.msra.mxu0 0
        %1912 = vmatprep.mubr.bf16.mxu0 0
        %1913 = vmatmul.mubr.bf16.gmra.mxu0 %v1692
        %v1914 = vpop.f32.mrf.mxu0
        %v1915 = vadd.f32 %v1707, %v1914
        %v1916 = vpop.f32.mrf.mxu0
        %v1917 = vpop.f32.mrf.mxu0
        %v1918 = vpop.f32.mrf.mxu0
        %1919 = vdwg.mxu0
        %v1920 = vmul.f32 %v1874, %v681
        %v1921 = vmul.f32 %v1874, %v686
        %v1922 = vmul.f32 %v1874, %v691
        %v1923 = vmul.f32 %v1874, %v695
        %v1924 = vpack.c.bf16 %v1921, %v1920
        %v1925 = vpack.c.bf16 %v1923, %v1922
        %v1926 = vpack.c.bf16 %v1876, %v1876
        %1927 = vmatprep.subr.bf16.mxu0 0
        %1928 = vmatpush1.bf16.xpose.msra.mxu0 0
        %1929 = vmatprep.subr.bf16.mxu0 0
        %1930 = vmatpush1.bf16.xpose.msra.mxu0 0
        %1931 = vmatprep.subr.bf16.mxu0 0
        %1932 = vmatpush1.bf16.xpose.msra.mxu0 0
        %1933 = vmatprep.subr.bf16.mxu0 0
        %1934 = vmatpush1.bf16.xpose.msra.mxu0 0
        %1935 = vmatprep.subr.bf16.mxu0 0
        %1936 = vmatpush1.bf16.xpose.msra.mxu0 0
        %1937 = vmatprep.subr.bf16.mxu0 0
        %1938 = vmatpush1.bf16.xpose.msra.mxu0 0
        %1939 = vmatprep.subr.bf16.mxu0 0
        %1940 = vmatpush1.bf16.xpose.msra.mxu0 0
        %1941 = vmatprep.subr.bf16.mxu0 0
        %1942 = vmatpush1.bf16.xpose.msra.mxu0 %v1926
        %1943 = vmatprep.subr.bf16.mxu0 0
        %1944 = vmatpush2.bf16.xpose.msra.mxu0 0
        %1945 = vmatprep.subr.bf16.mxu0 0
        %1946 = vmatpush2.bf16.xpose.msra.mxu0 0
        %1947 = vmatprep.subr.bf16.mxu0 0
        %1948 = vmatpush2.bf16.xpose.msra.mxu0 0
        %1949 = vmatprep.subr.bf16.mxu0 0
        %1950 = vmatpush2.bf16.xpose.msra.mxu0 0
        %1951 = vmatprep.subr.bf16.mxu0 0
        %1952 = vmatpush2.bf16.xpose.msra.mxu0 0
        %1953 = vmatprep.subr.bf16.mxu0 0
        %1954 = vmatpush2.bf16.xpose.msra.mxu0 0
        %1955 = vmatprep.subr.bf16.mxu0 0
        %1956 = vmatpush2.bf16.xpose.msra.mxu0 0
        %1957 = vmatprep.subr.bf16.mxu0 0
        %1958 = vmatpush2.bf16.xpose.msra.mxu0 0
        %1959 = vmatprep.mubr.bf16.mxu0 0
        %1960 = vmatmul.mubr.bf16.gmra.mxu0 %v1924
        %v1961 = vpop.f32.mrf.mxu0
        %v1962 = vadd.f32 %v821, %v1961
        %v1963 = vpop.f32.mrf.mxu0
        %v1964 = vpop.f32.mrf.mxu0
        %v1965 = vadd.f32 %v822, %v1964
        %v1966 = vpop.f32.mrf.mxu0
        %1967 = vmatprep.mubr.bf16.mxu0 0
        %1968 = vmatmul.mubr.bf16.gmra.mxu0 %v1925
        %v1969 = vpop.f32.mrf.mxu0
        %v1970 = vadd.f32 %v823, %v1969
        %v1971 = vpop.f32.mrf.mxu0
        %v1972 = vpop.f32.mrf.mxu0
        %v1973 = vadd.f32 %v824, %v1972
        %v1974 = vpop.f32.mrf.mxu0
        %1975 = vdwg.mxu0
        %v1976 = vsel %vm1140, %v1962, -inf
        %1977 = vmax.xlane.f32.xlu0 %v1976
        %v1978 = vpop.xlane.xlu0 %1977
        %v1979 = vsel %vm1140, %v1965, -inf
        %1980 = vmax.xlane.f32.xlu0 %v1979
        %v1981 = vpop.xlane.xlu0 %1980
        %v1982 = vsel %vm1140, %v1970, -inf
        %1983 = vmax.xlane.f32.xlu0 %v1982
        %v1984 = vpop.xlane.xlu0 %1983
        %v1985 = vsel %vm1140, %v1973, -inf
        %1986 = vmax.xlane.f32.xlu0 %v1985
        %v1987 = vpop.xlane.xlu0 %1986
        %v1988 = vsub.f32 %v1962, %v1978
        %v1989 = vsub.f32 %v1965, %v1981
        %v1990 = vsub.f32 %v1970, %v1984
        %v1991 = vsub.f32 %v1973, %v1987
        %v1992 = vmul.f32 %v1988, 1.442695
        %v1993 = vpow.pop %v1992
        %v1994 = vmul.f32 %v1989, 1.442695
        %v1995 = vpow.pop %v1994
        %v1996 = vmul.f32 %v1990, 1.442695
        %v1997 = vpow.pop %v1996
        %v1998 = vmul.f32 %v1991, 1.442695
        %v1999 = vpow.pop %v1998
        %v2000 = vsel %vm1140, %v1993, 0.0
        %2001 = vadd.xlane.f32.xlu0 %v2000
        %v2002 = vpop.xlane.xlu0 %2001
        %v2003 = vsel %vm1140, %v1995, 0.0
        %2004 = vadd.xlane.f32.xlu0 %v2003
        %v2005 = vpop.xlane.xlu0 %2004
        %v2006 = vsel %vm1140, %v1997, 0.0
        %2007 = vadd.xlane.f32.xlu0 %v2006
        %v2008 = vpop.xlane.xlu0 %2007
        %v2009 = vsel %vm1140, %v1999, 0.0
        %2010 = vadd.xlane.f32.xlu0 %v2009
        %v2011 = vpop.xlane.xlu0 %2010
        %v2012 = vrcp.pop %v2002
        %v2013 = vrcp.pop %v2005
        %v2014 = vrcp.pop %v2008
        %v2015 = vrcp.pop %v2011
        %v2016 = vmul.f32 %v1993, %v2012
        %v2017 = vmul.f32 %v1995, %v2013
        %v2018 = vmul.f32 %v1997, %v2014
        %v2019 = vmul.f32 %v1999, %v2015
        %v2020 = vpack.c.bf16 %v2017, %v2016
        %v2021 = vpack.c.bf16 %v2019, %v2018
        %v2022 = vpack.c.bf16 %v1915, %v1915
        %v2024 = vsel %vm1140, %v2020, 0
        %v2027 = vsel %vm1140, %v2021, 0
        %v2030 = vsel %vm1194, %v2022, 0
        %2032 = vmatprep.subr.bf16.mxu0 0
        %2033 = vmatpush1.bf16.msra.mxu0 0
        %2034 = vmatprep.subr.bf16.mxu0 0
        %2035 = vmatpush1.bf16.msra.mxu0 0
        %2036 = vmatprep.subr.bf16.mxu0 0
        %2037 = vmatpush1.bf16.msra.mxu0 0
        %2038 = vmatprep.subr.bf16.mxu0 0
        %2039 = vmatpush1.bf16.msra.mxu0 0
        %2040 = vmatprep.subr.bf16.mxu0 0
        %2041 = vmatpush1.bf16.msra.mxu0 0
        %2042 = vmatprep.subr.bf16.mxu0 0
        %2043 = vmatpush1.bf16.msra.mxu0 0
        %2044 = vmatprep.subr.bf16.mxu0 0
        %2045 = vmatpush1.bf16.msra.mxu0 0
        %2046 = vmatprep.subr.bf16.mxu0 0
        %2047 = vmatpush1.bf16.msra.mxu0 %v2030
        %2048 = vmatprep.subr.bf16.mxu0 0
        %2049 = vmatpush2.bf16.msra.mxu0 0
        %2050 = vmatprep.subr.bf16.mxu0 0
        %2051 = vmatpush2.bf16.msra.mxu0 0
        %2052 = vmatprep.subr.bf16.mxu0 0
        %2053 = vmatpush2.bf16.msra.mxu0 0
        %2054 = vmatprep.subr.bf16.mxu0 0
        %2055 = vmatpush2.bf16.msra.mxu0 0
        %2056 = vmatprep.subr.bf16.mxu0 0
        %2057 = vmatpush2.bf16.msra.mxu0 0
        %2058 = vmatprep.subr.bf16.mxu0 0
        %2059 = vmatpush2.bf16.msra.mxu0 0
        %2060 = vmatprep.subr.bf16.mxu0 0
        %2061 = vmatpush2.bf16.msra.mxu0 0
        %2062 = vmatprep.subr.bf16.mxu0 0
        %2063 = vmatpush2.bf16.msra.mxu0 0
        %2064 = vmatprep.mubr.bf16.mxu0 0
        %2065 = vmatmul.mubr.bf16.gmra.mxu0 %v2024
        %v2066 = vpop.f32.mrf.mxu0
        %v2067 = vadd.f32 0.0, %v2066
        %v2068 = vpop.f32.mrf.mxu0
        %v2069 = vpop.f32.mrf.mxu0
        %v2070 = vadd.f32 0.0, %v2069
        %v2071 = vpop.f32.mrf.mxu0
        %2072 = vmatprep.mubr.bf16.mxu0 0
        %2073 = vmatmul.mubr.bf16.gmra.mxu0 %v2027
        %v2074 = vpop.f32.mrf.mxu0
        %v2075 = vadd.f32 0.0, %v2074
        %v2076 = vpop.f32.mrf.mxu0
        %v2077 = vpop.f32.mrf.mxu0
        %v2078 = vadd.f32 0.0, %v2077
        %v2079 = vpop.f32.mrf.mxu0
        %2080 = vdwg.mxu0
        %v2081 = vmul.f32 %v2067, %v681
        %v2082 = vmul.f32 %v2070, %v686
        %v2083 = vadd.f32 %v2081, %v2082
        %v2084 = vmul.f32 %v2075, %v691
        %v2085 = vadd.f32 %v2083, %v2084
        %v2086 = vmul.f32 %v2078, %v695
        %v2087 = vadd.f32 %v2085, %v2086
        %s2088 = scalar_lea.vmem %s9, 64
        %v2089 = vld [vmem:[%s2088] sm:$0xf]
        %v2090 = vld [vmem:[%s2088 + $0x4] sm:$0xf]
        %v2091 = vld [vmem:[%s2088 + $0x8] sm:$0xf]
        %v2092 = vld [vmem:[%s2088 + $0xc] sm:$0xf]
        %v2093 = vld [vmem:[%s2088 + $0x10] sm:$0xf]
        %v2094 = vld [vmem:[%s2088 + $0x14] sm:$0xf]
        %v2095 = vld [vmem:[%s2088 + $0x18] sm:$0xf]
        %v2096 = vld [vmem:[%s2088 + $0x1c] sm:$0xf]
        %v2097 = vld [vmem:[%s2088 + $0x20] sm:$0xf]
        %v2098 = vld [vmem:[%s2088 + $0x24] sm:$0xf]
        %v2099 = vld [vmem:[%s2088 + $0x28] sm:$0xf]
        %v2100 = vld [vmem:[%s2088 + $0x2c] sm:$0xf]
        %v2101 = vld [vmem:[%s2088 + $0x30] sm:$0xf]
        %v2102 = vld [vmem:[%s2088 + $0x34] sm:$0xf]
        %v2103 = vld [vmem:[%s2088 + $0x38] sm:$0xf]
        %v2104 = vld [vmem:[%s2088 + $0x3c] sm:$0xf]
        %v2105 = vpack.c.bf16 %v2087, %v2087
        %s2106 = scalar_lea.vmem %s10, 1
        %v2107 = vld [vmem:[%s2106] sm:$0x1]
        %v2109 = vlaneseq
        %v2110 = vshrl.u32 %v2109, 7
        %v2111 = vsub.s32 0, %v2110
        %v2112 = vrot.slane %v2107, %v2111
        %v2130 = vunpack.c.l.b16 %v2089
        %v2131 = vunpack.c.l.b16 %v2090
        %v2132 = vunpack.c.l.b16 %v2091
        %v2133 = vunpack.c.l.b16 %v2092
        %v2134 = vunpack.c.l.b16 %v2093
        %v2135 = vunpack.c.l.b16 %v2094
        %v2136 = vunpack.c.l.b16 %v2095
        %v2137 = vunpack.c.l.b16 %v2096
        %v2138 = vunpack.c.l.b16 %v2097
        %v2139 = vunpack.c.l.b16 %v2098
        %v2140 = vunpack.c.l.b16 %v2099
        %v2141 = vunpack.c.l.b16 %v2100
        %v2142 = vunpack.c.l.b16 %v2101
        %v2143 = vunpack.c.l.b16 %v2102
        %v2144 = vunpack.c.l.b16 %v2103
        %v2145 = vunpack.c.l.b16 %v2104
        %v2146 = vpack.c.b16 %v2131, %v2130
        %v2147 = vpack.c.b16 %v2133, %v2132
        %v2148 = vpack.c.b16 %v2135, %v2134
        %v2149 = vpack.c.b16 %v2137, %v2136
        %v2150 = vpack.c.b16 %v2139, %v2138
        %v2151 = vpack.c.b16 %v2141, %v2140
        %v2152 = vpack.c.b16 %v2143, %v2142
        %v2153 = vpack.c.b16 %v2145, %v2144
        %2162 = vmatprep.subr.bf16.mxu0 0
        %2163 = vmatpush1.bf16.msra.mxu0 %v2153
        %2164 = vmatprep.subr.bf16.mxu0 0
        %2165 = vmatpush1.bf16.msra.mxu0 %v2152
        %2166 = vmatprep.subr.bf16.mxu0 0
        %2167 = vmatpush1.bf16.msra.mxu0 %v2151
        %2168 = vmatprep.subr.bf16.mxu0 0
        %2169 = vmatpush1.bf16.msra.mxu0 %v2150
        %2170 = vmatprep.subr.bf16.mxu0 0
        %2171 = vmatpush1.bf16.msra.mxu0 %v2149
        %2172 = vmatprep.subr.bf16.mxu0 0
        %2173 = vmatpush1.bf16.msra.mxu0 %v2148
        %2174 = vmatprep.subr.bf16.mxu0 0
        %2175 = vmatpush1.bf16.msra.mxu0 %v2147
        %2176 = vmatprep.subr.bf16.mxu0 0
        %2177 = vmatpush1.bf16.msra.mxu0 %v2146
        %2178 = vmatprep.subr.bf16.mxu0 0
        %2179 = vmatpush2.bf16.msra.mxu0 0
        %2180 = vmatprep.subr.bf16.mxu0 0
        %2181 = vmatpush2.bf16.msra.mxu0 0
        %2182 = vmatprep.subr.bf16.mxu0 0
        %2183 = vmatpush2.bf16.msra.mxu0 0
        %2184 = vmatprep.subr.bf16.mxu0 0
        %2185 = vmatpush2.bf16.msra.mxu0 0
        %2186 = vmatprep.subr.bf16.mxu0 0
        %2187 = vmatpush2.bf16.msra.mxu0 0
        %2188 = vmatprep.subr.bf16.mxu0 0
        %2189 = vmatpush2.bf16.msra.mxu0 0
        %2190 = vmatprep.subr.bf16.mxu0 0
        %2191 = vmatpush2.bf16.msra.mxu0 0
        %2192 = vmatprep.subr.bf16.mxu0 0
        %2193 = vmatpush2.bf16.msra.mxu0 0
        %2194 = vmatprep.mubr.bf16.mxu0 0
        %2195 = vmatmul.mubr.bf16.gmra.mxu0 %v2105
        %v2196 = vpop.f32.mrf.mxu0
        %v2197 = vadd.f32 %v2112, %v2196
        %v2198 = vpop.f32.mrf.mxu0
        %v2199 = vpop.f32.mrf.mxu0
        %v2200 = vpop.f32.mrf.mxu0
        %2201 = vdwg.mxu0
        %v2202 = vadd.f32 %v1658, %v2197
        %s2203 = scalar_lea.vmem %s11, 1
        %v2204 = vld [vmem:[%s2203] sm:$0x1]
        %s2205 = scalar_lea.vmem %s12, 1
        %v2206 = vld [vmem:[%s2205] sm:$0x1]
        %v2207 = vmul.f32 %v2202, %v676
        %2208 = vadd.xlane.f32.xlu0 %v2207
        %v2209 = vpop.xlane.xlu0 %2208
        %v2210 = vmul.f32 %v2209, 0.03125
        %v2211 = vsub.f32 %v2202, %v2210
        %v2212 = vmul.f32 %v2211, %v676
        %v2213 = vmul.f32 %v2212, %v2212
        %2214 = vadd.xlane.f32.xlu0 %v2213
        %v2215 = vpop.xlane.xlu0 %2214
        %v2216 = vmul.f32 %v2215, 0.03125
        %v2217 = vadd.f32 %v2216, 1e-12
        %v2218 = vrsqrt.pop %v2217
        %v2219 = vmul.f32 %v2212, %v2218
        %v2221 = vlaneseq
        %v2222 = vshrl.u32 %v2221, 7
        %v2223 = vsub.s32 0, %v2222
        %v2224 = vrot.slane %v2204, %v2223
        %v2226 = vmul.f32 %v2219, %v2224
        %v2228 = vlaneseq
        %v2229 = vshrl.u32 %v2228, 7
        %v2230 = vsub.s32 0, %v2229
        %v2231 = vrot.slane %v2206, %v2230
        %v2233 = vadd.f32 %v2226, %v2231
        %s2234 = scalar_lea.vmem %s13, 64
        %v2235 = vld [vmem:[%s2234] sm:$0xf]
        %v2236 = vld [vmem:[%s2234 + $0x4] sm:$0xf]
        %v2237 = vld [vmem:[%s2234 + $0x8] sm:$0xf]
        %v2238 = vld [vmem:[%s2234 + $0xc] sm:$0xf]
        %v2239 = vld [vmem:[%s2234 + $0x10] sm:$0xf]
        %v2240 = vld [vmem:[%s2234 + $0x14] sm:$0xf]
        %v2241 = vld [vmem:[%s2234 + $0x18] sm:$0xf]
        %v2242 = vld [vmem:[%s2234 + $0x1c] sm:$0xf]
        %v2243 = vld [vmem:[%s2234 + $0x20] sm:$0xf]
        %v2244 = vld [vmem:[%s2234 + $0x24] sm:$0xf]
        %v2245 = vld [vmem:[%s2234 + $0x28] sm:$0xf]
        %v2246 = vld [vmem:[%s2234 + $0x2c] sm:$0xf]
        %v2247 = vld [vmem:[%s2234 + $0x30] sm:$0xf]
        %v2248 = vld [vmem:[%s2234 + $0x34] sm:$0xf]
        %v2249 = vld [vmem:[%s2234 + $0x38] sm:$0xf]
        %v2250 = vld [vmem:[%s2234 + $0x3c] sm:$0xf]
        %v2251 = vpack.c.bf16 %v2233, %v2233
        %s2252 = scalar_lea.vmem %s14, 1
        %v2253 = vld [vmem:[%s2252] sm:$0x1]
        %v2255 = vlaneseq
        %v2256 = vshrl.u32 %v2255, 7
        %v2257 = vsub.s32 0, %v2256
        %v2258 = vrot.slane %v2253, %v2257
        %v2276 = vunpack.c.l.b16 %v2235
        %v2277 = vunpack.c.l.b16 %v2236
        %v2278 = vunpack.c.l.b16 %v2237
        %v2279 = vunpack.c.l.b16 %v2238
        %v2280 = vunpack.c.l.b16 %v2239
        %v2281 = vunpack.c.l.b16 %v2240
        %v2282 = vunpack.c.l.b16 %v2241
        %v2283 = vunpack.c.l.b16 %v2242
        %v2284 = vunpack.c.l.b16 %v2243
        %v2285 = vunpack.c.l.b16 %v2244
        %v2286 = vunpack.c.l.b16 %v2245
        %v2287 = vunpack.c.l.b16 %v2246
        %v2288 = vunpack.c.l.b16 %v2247
        %v2289 = vunpack.c.l.b16 %v2248
        %v2290 = vunpack.c.l.b16 %v2249
        %v2291 = vunpack.c.l.b16 %v2250
        %v2292 = vpack.c.b16 %v2277, %v2276
        %v2293 = vpack.c.b16 %v2279, %v2278
        %v2294 = vpack.c.b16 %v2281, %v2280
        %v2295 = vpack.c.b16 %v2283, %v2282
        %v2296 = vpack.c.b16 %v2285, %v2284
        %v2297 = vpack.c.b16 %v2287, %v2286
        %v2298 = vpack.c.b16 %v2289, %v2288
        %v2299 = vpack.c.b16 %v2291, %v2290
        %2308 = vmatprep.subr.bf16.mxu0 0
        %2309 = vmatpush1.bf16.msra.mxu0 %v2299
        %2310 = vmatprep.subr.bf16.mxu0 0
        %2311 = vmatpush1.bf16.msra.mxu0 %v2298
        %2312 = vmatprep.subr.bf16.mxu0 0
        %2313 = vmatpush1.bf16.msra.mxu0 %v2297
        %2314 = vmatprep.subr.bf16.mxu0 0
        %2315 = vmatpush1.bf16.msra.mxu0 %v2296
        %2316 = vmatprep.subr.bf16.mxu0 0
        %2317 = vmatpush1.bf16.msra.mxu0 %v2295
        %2318 = vmatprep.subr.bf16.mxu0 0
        %2319 = vmatpush1.bf16.msra.mxu0 %v2294
        %2320 = vmatprep.subr.bf16.mxu0 0
        %2321 = vmatpush1.bf16.msra.mxu0 %v2293
        %2322 = vmatprep.subr.bf16.mxu0 0
        %2323 = vmatpush1.bf16.msra.mxu0 %v2292
        %2324 = vmatprep.subr.bf16.mxu0 0
        %2325 = vmatpush2.bf16.msra.mxu0 0
        %2326 = vmatprep.subr.bf16.mxu0 0
        %2327 = vmatpush2.bf16.msra.mxu0 0
        %2328 = vmatprep.subr.bf16.mxu0 0
        %2329 = vmatpush2.bf16.msra.mxu0 0
        %2330 = vmatprep.subr.bf16.mxu0 0
        %2331 = vmatpush2.bf16.msra.mxu0 0
        %2332 = vmatprep.subr.bf16.mxu0 0
        %2333 = vmatpush2.bf16.msra.mxu0 0
        %2334 = vmatprep.subr.bf16.mxu0 0
        %2335 = vmatpush2.bf16.msra.mxu0 0
        %2336 = vmatprep.subr.bf16.mxu0 0
        %2337 = vmatpush2.bf16.msra.mxu0 0
        %2338 = vmatprep.subr.bf16.mxu0 0
        %2339 = vmatpush2.bf16.msra.mxu0 0
        %2340 = vmatprep.mubr.bf16.mxu0 0
        %2341 = vmatmul.mubr.bf16.gmra.mxu0 %v2251
        %v2342 = vpop.f32.mrf.mxu0
        %v2343 = vadd.f32 %v2258, %v2342
        %v2344 = vpop.f32.mrf.mxu0
        %v2345 = vpop.f32.mrf.mxu0
        %v2346 = vpop.f32.mrf.mxu0
        %2347 = vdwg.mxu0
        %v2348 = vmul.f32 %v2343, %v2343
        %v2349 = vmul.f32 %v2343, %v2348
        %v2350 = vmul.f32 %v2349, 0.044715
        %v2351 = vadd.f32 %v2343, %v2350
        %v2352 = vmul.f32 %v2351, 0.7978846
        %v2353 = vtanh.pop %v2352
        %v2354 = vadd.f32 %v2353, 1.0
        %v2355 = vmul.f32 %v2354, 0.5
        %v2356 = vmul.f32 %v2343, %v2355
        %s2357 = scalar_lea.vmem %s15, 64
        %v2358 = vld [vmem:[%s2357] sm:$0xf]
        %v2359 = vld [vmem:[%s2357 + $0x4] sm:$0xf]
        %v2360 = vld [vmem:[%s2357 + $0x8] sm:$0xf]
        %v2361 = vld [vmem:[%s2357 + $0xc] sm:$0xf]
        %v2362 = vld [vmem:[%s2357 + $0x10] sm:$0xf]
        %v2363 = vld [vmem:[%s2357 + $0x14] sm:$0xf]
        %v2364 = vld [vmem:[%s2357 + $0x18] sm:$0xf]
        %v2365 = vld [vmem:[%s2357 + $0x1c] sm:$0xf]
        %v2366 = vld [vmem:[%s2357 + $0x20] sm:$0xf]
        %v2367 = vld [vmem:[%s2357 + $0x24] sm:$0xf]
        %v2368 = vld [vmem:[%s2357 + $0x28] sm:$0xf]
        %v2369 = vld [vmem:[%s2357 + $0x2c] sm:$0xf]
        %v2370 = vld [vmem:[%s2357 + $0x30] sm:$0xf]
        %v2371 = vld [vmem:[%s2357 + $0x34] sm:$0xf]
        %v2372 = vld [vmem:[%s2357 + $0x38] sm:$0xf]
        %v2373 = vld [vmem:[%s2357 + $0x3c] sm:$0xf]
        %v2374 = vpack.c.bf16 %v2356, %v2356
        %s2375 = scalar_lea.vmem %s16, 1
        %v2376 = vld [vmem:[%s2375] sm:$0x1]
        %v2378 = vlaneseq
        %v2379 = vshrl.u32 %v2378, 7
        %v2380 = vsub.s32 0, %v2379
        %v2381 = vrot.slane %v2376, %v2380
        %v2399 = vunpack.c.l.b16 %v2358
        %v2400 = vunpack.c.l.b16 %v2359
        %v2401 = vunpack.c.l.b16 %v2360
        %v2402 = vunpack.c.l.b16 %v2361
        %v2403 = vunpack.c.l.b16 %v2362
        %v2404 = vunpack.c.l.b16 %v2363
        %v2405 = vunpack.c.l.b16 %v2364
        %v2406 = vunpack.c.l.b16 %v2365
        %v2407 = vunpack.c.l.b16 %v2366
        %v2408 = vunpack.c.l.b16 %v2367
        %v2409 = vunpack.c.l.b16 %v2368
        %v2410 = vunpack.c.l.b16 %v2369
        %v2411 = vunpack.c.l.b16 %v2370
        %v2412 = vunpack.c.l.b16 %v2371
        %v2413 = vunpack.c.l.b16 %v2372
        %v2414 = vunpack.c.l.b16 %v2373
        %v2415 = vpack.c.b16 %v2400, %v2399
        %v2416 = vpack.c.b16 %v2402, %v2401
        %v2417 = vpack.c.b16 %v2404, %v2403
        %v2418 = vpack.c.b16 %v2406, %v2405
        %v2419 = vpack.c.b16 %v2408, %v2407
        %v2420 = vpack.c.b16 %v2410, %v2409
        %v2421 = vpack.c.b16 %v2412, %v2411
        %v2422 = vpack.c.b16 %v2414, %v2413
        %2431 = vmatprep.subr.bf16.mxu0 0
        %2432 = vmatpush1.bf16.msra.mxu0 %v2422
        %2433 = vmatprep.subr.bf16.mxu0 0
        %2434 = vmatpush1.bf16.msra.mxu0 %v2421
        %2435 = vmatprep.subr.bf16.mxu0 0
        %2436 = vmatpush1.bf16.msra.mxu0 %v2420
        %2437 = vmatprep.subr.bf16.mxu0 0
        %2438 = vmatpush1.bf16.msra.mxu0 %v2419
        %2439 = vmatprep.subr.bf16.mxu0 0
        %2440 = vmatpush1.bf16.msra.mxu0 %v2418
        %2441 = vmatprep.subr.bf16.mxu0 0
        %2442 = vmatpush1.bf16.msra.mxu0 %v2417
        %2443 = vmatprep.subr.bf16.mxu0 0
        %2444 = vmatpush1.bf16.msra.mxu0 %v2416
        %2445 = vmatprep.subr.bf16.mxu0 0
        %2446 = vmatpush1.bf16.msra.mxu0 %v2415
        %2447 = vmatprep.subr.bf16.mxu0 0
        %2448 = vmatpush2.bf16.msra.mxu0 0
        %2449 = vmatprep.subr.bf16.mxu0 0
        %2450 = vmatpush2.bf16.msra.mxu0 0
        %2451 = vmatprep.subr.bf16.mxu0 0
        %2452 = vmatpush2.bf16.msra.mxu0 0
        %2453 = vmatprep.subr.bf16.mxu0 0
        %2454 = vmatpush2.bf16.msra.mxu0 0
        %2455 = vmatprep.subr.bf16.mxu0 0
        %2456 = vmatpush2.bf16.msra.mxu0 0
        %2457 = vmatprep.subr.bf16.mxu0 0
        %2458 = vmatpush2.bf16.msra.mxu0 0
        %2459 = vmatprep.subr.bf16.mxu0 0
        %2460 = vmatpush2.bf16.msra.mxu0 0
        %2461 = vmatprep.subr.bf16.mxu0 0
        %2462 = vmatpush2.bf16.msra.mxu0 0
        %2463 = vmatprep.mubr.bf16.mxu0 0
        %2464 = vmatmul.mubr.bf16.gmra.mxu0 %v2374
        %v2465 = vpop.f32.mrf.mxu0
        %v2466 = vadd.f32 %v2381, %v2465
        %v2467 = vpop.f32.mrf.mxu0
        %v2468 = vpop.f32.mrf.mxu0
        %v2469 = vpop.f32.mrf.mxu0
        %2470 = vdwg.mxu0
        %v2471 = vadd.f32 %v2233, %v2466
        %s2472 = scalar_lea.vmem %s17, 1
        %v2473 = vld [vmem:[%s2472] sm:$0x1]
        %s2474 = scalar_lea.vmem %s18, 1
        %v2475 = vld [vmem:[%s2474] sm:$0x1]
        %v2476 = vmul.f32 %v2471, %v676
        %2477 = vadd.xlane.f32.xlu0 %v2476
        %v2478 = vpop.xlane.xlu0 %2477
        %v2479 = vmul.f32 %v2478, 0.03125
        %v2480 = vsub.f32 %v2471, %v2479
        %v2481 = vmul.f32 %v2480, %v676
        %v2482 = vmul.f32 %v2481, %v2481
        %2483 = vadd.xlane.f32.xlu0 %v2482
        %v2484 = vpop.xlane.xlu0 %2483
        %v2485 = vmul.f32 %v2484, 0.03125
        %v2486 = vadd.f32 %v2485, 1e-12
        %v2487 = vrsqrt.pop %v2486
        %v2488 = vmul.f32 %v2481, %v2487
        %v2490 = vlaneseq
        %v2491 = vshrl.u32 %v2490, 7
        %v2492 = vsub.s32 0, %v2491
        %v2493 = vrot.slane %v2473, %v2492
        %v2495 = vmul.f32 %v2488, %v2493
        %v2497 = vlaneseq
        %v2498 = vshrl.u32 %v2497, 7
        %v2499 = vsub.s32 0, %v2498
        %v2500 = vrot.slane %v2475, %v2499
        %v2502 = vadd.f32 %v2495, %v2500
        %v2503 = vld [vmem:[%s19] sm:$0xf]
        %v2504 = vld [vmem:[%s19 + $0x4] sm:$0xf]
        %v2505 = vld [vmem:[%s19 + $0x8] sm:$0xf]
        %v2506 = vld [vmem:[%s19 + $0xc] sm:$0xf]
        %v2507 = vld [vmem:[%s19 + $0x10] sm:$0xf]
        %v2508 = vld [vmem:[%s19 + $0x14] sm:$0xf]
        %v2509 = vld [vmem:[%s19 + $0x18] sm:$0xf]
        %v2510 = vld [vmem:[%s19 + $0x1c] sm:$0xf]
        %v2511 = vld [vmem:[%s19 + $0x20] sm:$0xf]
        %v2512 = vld [vmem:[%s19 + $0x24] sm:$0xf]
        %v2513 = vld [vmem:[%s19 + $0x28] sm:$0xf]
        %v2514 = vld [vmem:[%s19 + $0x2c] sm:$0xf]
        %v2515 = vld [vmem:[%s19 + $0x30] sm:$0xf]
        %v2516 = vld [vmem:[%s19 + $0x34] sm:$0xf]
        %v2517 = vld [vmem:[%s19 + $0x38] sm:$0xf]
        %v2518 = vld [vmem:[%s19 + $0x3c] sm:$0xf]
        %v2519 = vpack.c.bf16 %v2502, %v2502
        %v2520 = vld [vmem:[%s20] sm:$0x1]
        %v2537 = vunpack.c.l.b16 %v2503
        %v2538 = vunpack.c.l.b16 %v2504
        %v2539 = vunpack.c.l.b16 %v2505
        %v2540 = vunpack.c.l.b16 %v2506
        %v2541 = vunpack.c.l.b16 %v2507
        %v2542 = vunpack.c.l.b16 %v2508
        %v2543 = vunpack.c.l.b16 %v2509
        %v2544 = vunpack.c.l.b16 %v2510
        %v2545 = vunpack.c.l.b16 %v2511
        %v2546 = vunpack.c.l.b16 %v2512
        %v2547 = vunpack.c.l.b16 %v2513
        %v2548 = vunpack.c.l.b16 %v2514
        %v2549 = vunpack.c.l.b16 %v2515
        %v2550 = vunpack.c.l.b16 %v2516
        %v2551 = vunpack.c.l.b16 %v2517
        %v2552 = vunpack.c.l.b16 %v2518
        %v2553 = vpack.c.b16 %v2538, %v2537
        %v2554 = vpack.c.b16 %v2540, %v2539
        %v2555 = vpack.c.b16 %v2542, %v2541
        %v2556 = vpack.c.b16 %v2544, %v2543
        %v2557 = vpack.c.b16 %v2546, %v2545
        %v2558 = vpack.c.b16 %v2548, %v2547
        %v2559 = vpack.c.b16 %v2550, %v2549
        %v2560 = vpack.c.b16 %v2552, %v2551
        %2569 = vmatprep.subr.bf16.mxu0 0
        %2570 = vmatpush1.bf16.msra.mxu0 %v2560
        %2571 = vmatprep.subr.bf16.mxu0 0
        %2572 = vmatpush1.bf16.msra.mxu0 %v2559
        %2573 = vmatprep.subr.bf16.mxu0 0
        %2574 = vmatpush1.bf16.msra.mxu0 %v2558
        %2575 = vmatprep.subr.bf16.mxu0 0
        %2576 = vmatpush1.bf16.msra.mxu0 %v2557
        %2577 = vmatprep.subr.bf16.mxu0 0
        %2578 = vmatpush1.bf16.msra.mxu0 %v2556
        %2579 = vmatprep.subr.bf16.mxu0 0
        %2580 = vmatpush1.bf16.msra.mxu0 %v2555
        %2581 = vmatprep.subr.bf16.mxu0 0
        %2582 = vmatpush1.bf16.msra.mxu0 %v2554
        %2583 = vmatprep.subr.bf16.mxu0 0
        %2584 = vmatpush1.bf16.msra.mxu0 %v2553
        %2585 = vmatprep.subr.bf16.mxu0 0
        %2586 = vmatpush2.bf16.msra.mxu0 0
        %2587 = vmatprep.subr.bf16.mxu0 0
        %2588 = vmatpush2.bf16.msra.mxu0 0
        %2589 = vmatprep.subr.bf16.mxu0 0
        %2590 = vmatpush2.bf16.msra.mxu0 0
        %2591 = vmatprep.subr.bf16.mxu0 0
        %2592 = vmatpush2.bf16.msra.mxu0 0
        %2593 = vmatprep.subr.bf16.mxu0 0
        %2594 = vmatpush2.bf16.msra.mxu0 0
        %2595 = vmatprep.subr.bf16.mxu0 0
        %2596 = vmatpush2.bf16.msra.mxu0 0
        %2597 = vmatprep.subr.bf16.mxu0 0
        %2598 = vmatpush2.bf16.msra.mxu0 0
        %2599 = vmatprep.subr.bf16.mxu0 0
        %2600 = vmatpush2.bf16.msra.mxu0 0
        %2601 = vmatprep.mubr.bf16.mxu0 0
        %2602 = vmatmul.mubr.bf16.gmra.mxu0 %v2519
        %v2603 = vpop.f32.mrf.mxu0
        %v2604 = vadd.f32 %v2520, %v2603
        %v2605 = vpop.f32.mrf.mxu0
        %v2606 = vpop.f32.mrf.mxu0
        %v2607 = vpop.f32.mrf.mxu0
        %2608 = vdwg.mxu0
        %v2609 = vtanh.pop %v2604
        %2610 = vst [vmem:[%s661] sm:$0x1] %v2609
        %s2611 = sand.u32 %s494, 1
        %s2612 = scalar_lea.sflag [#allocation3], %s2611
        %s2613 = sand.u32 %s494, 1
        %s2614 = scalar_lea.vmem [#allocation2], %s2613
        // Predicated region
        $region105: #{text_encoder_forward.1} parent=103 // pred_check
          %p2615 = pneg %p504
        $region106: #{text_encoder_forward.1} parent=103 // pred_check_branch
          %2617 = sbr.rel (%p2615) target = $region108
        $region107: #{text_encoder_forward.1} parent=103 // pred_region
          %s2619 = ssub.s32 16, 16
          %2620 = vsyncadd %s2612, %s2619
          %s2621 = smul.addr %s35, 16
          %s2622 = scalar_lea.hbm %s21, %s2621
          %s2624 = sshll.u32 %s2614, 4
          %s2625 = int_to_ptr.vmem [resolvable:$true] %s2624
          %2627 = dma.vmem_to_hbm [thread:$0]  %s2625, 16, %s2622, %s2612
        $region108: #{text_encoder_forward.1} parent=103 // pred_fallthru
          _
      $region104: #{text_encoder_forward.1} parent=5 // pred_fallthru
        _
      %p2628 = scmp.le.s32.totalorder 2, %s30
      // Predicated region
      $region109: #{text_encoder_forward.1} parent=5 // pred_check
        %p2629 = pneg %p2628
      $region110: #{text_encoder_forward.1} parent=5 // pred_check_branch
        %2631 = sbr.rel (%p2629) target = $region112
      $region111: #{text_encoder_forward.1} parent=5 // pred_region
        %s2632 = ssub.s32 %s30, 2
        // Predicated region
        $region113: #{text_encoder_forward.1} parent=111 // pred_check
          %p2633 = pneg %p510
        $region114: #{text_encoder_forward.1} parent=111 // pred_check_branch
          %2635 = sbr.rel (%p2633) target = $region116
        $region115: #{text_encoder_forward.1} parent=111 // pred_region
          %s2636 = sand.u32 %s495, 1
          %s2637 = scalar_lea.sflag [#allocation3], %s2636
          %s2638 = sand.u32 %s495, 1
          %s2639 = scalar_lea.vmem [#allocation2], %s2638
          %2640 = dma.done %s2637, 16
        $region116: #{text_encoder_forward.1} parent=111 // pred_fallthru
          _
      $region112: #{text_encoder_forward.1} parent=5 // pred_fallthru
        _
    $region6: #{text_encoder_forward.1} parent=1 // loop_footer
      %s34 = sadd.s32 1, %s30
    $region7: #{text_encoder_forward.1} parent=1 // loop_footer_branch
      %29 = sbr.rel target = $region3
    $region8: #{text_encoder_forward.1} parent=1 // loop_exit
      _
    %2641 = vsyncpa [#allocation3], 1
    %s2642 = scalar_lea.sflag [#allocation3], 1
    %2643 = vsyncpa %s2642, 1

</llo_original>
